<compile_context>
chip_gen: v6e
topology: v6e:2x2x1
jax: 0.10.0
libtpu: 0.0.40
codegen_flags: <defaults>
</compile_context>

<pallas_src>
import jax
import jax.numpy as jnp
from jax.experimental import pallas as pl
from jax.experimental.pallas import tpu as pltpu


def decoder_rnn_kernel(x_ref, z_ref, h0_ref,
                       wg_ref, bg_ref,            # packed GRU weights / biases
                       w1_ref, b1_ref, w2_ref, b2_ref,
                       o_ref, hout_ref,
                       h_carry):                  # VMEM scratch: carried hidden state
    t = pl.program_id(0)
    T = pl.num_programs(0)
    L, B, H = h0_ref.shape
    XS = x_ref.shape[-1]
    H2, H3 = 2 * H, 3 * H

    @pl.when(t == 0)
    def _():
        h_carry[...] = h0_ref[...]

    bg = bg_ref[...]                              # (8, 3H) f32

    # Hoisted hidden-state matmuls: h_prev for every layer is known at step
    # start, so all three Whh matmuls are off the serial gate-math chain.
    whh_base = XS + 2 * H
    gh = [
        jnp.dot(h_carry[l].astype(jnp.bfloat16),
                wg_ref[whh_base + l * H: whh_base + (l + 1) * H, :],
                preferred_element_type=jnp.float32)          # (B, 3H)
        for l in range(L)
    ]

    wih_off = [0, XS, XS + H]
    wih_len = [XS, H, H]

    x = x_ref[0].astype(jnp.float32)              # x.to(torch.float)
    inp = x
    h_new = []
    for l in range(L):
        hprev = h_carry[l]
        # gi carries the pre-summed (b_ir+b_hr | b_iz+b_hz | b_in) bias row.
        gi = jnp.dot(inp.astype(jnp.bfloat16),
                     wg_ref[wih_off[l]: wih_off[l] + wih_len[l], :],
                     preferred_element_type=jnp.float32) + bg[l:l + 1, :]
        rz = jax.nn.sigmoid(gi[:, 0:H2] + gh[l][:, 0:H2])
        r, zg = rz[:, 0:H], rz[:, H:H2]
        n = jnp.tanh(gi[:, H2:H3] + r * (gh[l][:, H2:H3] + bg[3 + l:4 + l, 0:H]))
        h_l = (1.0 - zg) * n + zg * hprev
        h_new.append(h_l)
        inp = h_l

    for l in range(L):
        h_carry[l] = h_new[l]

    @pl.when(t == T - 1)
    def _():
        hout_ref[...] = h_carry[...]

    # o = F.leaky_relu(o)  (default negative_slope = 0.01) on the top-layer output
    o = jnp.where(inp > 0, inp, 0.01 * inp)

    # fc( cat([o, z], -1) ) without an in-kernel concat.
    z = z_ref[0]
    f1 = (jnp.dot(o.astype(jnp.bfloat16), w1_ref[0:H, :],
                  preferred_element_type=jnp.float32)
          + jnp.dot(z.astype(jnp.bfloat16), w1_ref[H:H2, :],
                    preferred_element_type=jnp.float32)
          + b1_ref[...])
    f1 = jnp.where(f1 > 0, f1, 0.1 * f1)          # LeakyReLU(0.1); Dropout = id (eval)

    # Lane-dense logits: out_size padded to 128 columns, pad bias = -1e30 so the
    # padded columns carry zero softmax mass.
    logits = jnp.dot(f1.astype(jnp.bfloat16), w2_ref[...],
                     preferred_element_type=jnp.float32) + b2_ref[...]
    m = jnp.max(logits, axis=-1, keepdims=True)
    e = jnp.exp(logits - m)
    o_ref[0] = e / jnp.sum(e, axis=-1, keepdims=True)     # exact normalization


def pack_params(params):
    """Pack 19 raw (pre-transposed) parameter arrays into 6 DMA-friendly slabs.

    GRU / fc weights go to bf16 (halves HBM->VMEM weight traffic); biases stay
    f32.  The r/z biases are pre-summed (b_i* + b_h*); b_hn is kept separate
    for the n-gate's r * (Whh h + b_hn) term.  w2/b2 are padded to a 128-lane
    multiple with -1e30 pad bias.
    """
    H = params["whh0"].shape[0]
    H2, H3 = 2 * H, 3 * H
    x_size = params["wih0"].shape[0]
    xs_pad = ((x_size + 15) // 16) * 16           # keep bf16 slab slices 16-row aligned
    out_size = params["b2"].shape[-1]
    out_pad = ((out_size + 127) // 128) * 128

    wih0 = jnp.zeros((xs_pad, H3), jnp.float32).at[:x_size].set(params["wih0"])
    wg = jnp.concatenate(
        [wih0, params["wih1"], params["wih2"],
         params["whh0"], params["whh1"], params["whh2"]],
        axis=0).astype(jnp.bfloat16)              # (xs_pad + 5H, 3H)

    rows = []
    for l in range(3):
        bih, bhh = params[f"bih{l}"], params[f"bhh{l}"]
        rows.append(jnp.concatenate([bih[:, :H2] + bhh[:, :H2], bih[:, H2:]], axis=-1))
    for l in range(3):
        bhh = params[f"bhh{l}"]
        rows.append(jnp.concatenate([bhh[:, H2:], jnp.zeros((1, H2), jnp.float32)], axis=-1))
    rows.append(jnp.zeros((2, H3), jnp.float32))
    bg = jnp.concatenate(rows, axis=0)            # (8, 3H)

    w1 = params["w1"].astype(jnp.bfloat16)        # (2H, 512)
    b1 = params["b1"]                             # (1, 512)

    w2 = jnp.zeros((params["w2"].shape[0], out_pad), jnp.bfloat16)
    w2 = w2.at[:, :out_size].set(params["w2"].astype(jnp.bfloat16))
    b2 = jnp.full((1, out_pad), -1e30, jnp.float32)
    b2 = b2.at[:, :out_size].set(params["b2"])

    return {"wg": wg, "bg": bg, "w1": w1, "b1": b1, "w2": w2, "b2": b2,
            "out_size": out_size, "xs_pad": xs_pad}


def decoder_rnn_forward(x_seq, h0, z_seq, packed):
    """x_seq: (T, B, x_size), h0: (L, B, H), z_seq: (T, B, H)
       -> (o (T, B, out_size), h (L, B, H)).   T=1 == module forward."""
    T, B, _ = x_seq.shape
    L, _, H = h0.shape
    out_size = packed["out_size"]
    out_pad = packed["w2"].shape[-1]
    xs_pad = packed["xs_pad"]
    fc_hidden = packed["w1"].shape[-1]

    x_seq = x_seq.astype(jnp.float32)
    if x_seq.shape[-1] < xs_pad:
        x_seq = jnp.pad(x_seq, ((0, 0), (0, 0), (0, xs_pad - x_seq.shape[-1])))

    wg, bg = packed["wg"], packed["bg"]
    w1, b1, w2, b2 = packed["w1"], packed["b1"], packed["w2"], packed["b2"]

    def resident(arr):      # full-array weight slab, VMEM-resident across the grid
        return pl.BlockSpec(arr.shape, lambda t: (0,) * arr.ndim)

    grid_spec = pltpu.PrefetchScalarGridSpec(
        num_scalar_prefetch=0,
        grid=(T,),
        in_specs=[
            pl.BlockSpec((1, B, xs_pad), lambda t: (t, 0, 0)),    # x_t (streamed)
            pl.BlockSpec((1, B, H), lambda t: (t, 0, 0)),         # z_t (streamed)
            pl.BlockSpec((L, B, H), lambda t: (0, 0, 0)),         # h0 (read at t==0)
            resident(wg), resident(bg),
            resident(w1), resident(b1), resident(w2), resident(b2),
        ],
        out_specs=[
            pl.BlockSpec((1, B, out_pad), lambda t: (t, 0, 0)),   # per-step softmax
            pl.BlockSpec((L, B, H), lambda t: (0, 0, 0)),         # final hidden state
        ],
        scratch_shapes=[pltpu.VMEM((L, B, H), jnp.float32)],      # carried hidden state
    )

    flops = 2 * T * B * (3 * H * 3 * H                 # hoisted Whh matmuls
                         + (xs_pad + 2 * H) * 3 * H    # serial Wih matmuls
                         + 2 * H * fc_hidden           # fc1
                         + fc_hidden * out_pad)        # fc2
    bytes_accessed = (wg.nbytes + bg.nbytes + w1.nbytes + b1.nbytes
                      + w2.nbytes + b2.nbytes + x_seq.nbytes + z_seq.nbytes
                      + 2 * h0.nbytes + T * B * out_pad * 4)

    o_seq, h_out = pl.pallas_call(
        decoder_rnn_kernel,
        grid_spec=grid_spec,
        out_shape=(
            jax.ShapeDtypeStruct((T, B, out_pad), jnp.float32),
            jax.ShapeDtypeStruct((L, B, H), jnp.float32),
        ),
        compiler_params=pltpu.CompilerParams(dimension_semantics=("arbitrary",)),
        cost_estimate=pl.CostEstimate(flops=flops,
                                      transcendentals=T * B * (9 * H + out_pad),
                                      bytes_accessed=bytes_accessed),
    )(x_seq, z_seq, h0, wg, bg, w1, b1, w2, b2)
    return o_seq[:, :, :out_size], h_out


def reference_forward(x_seq, h0, z_seq, params):
    """Pure-JAX (f32) reference: the module applied once per decode step."""
    H = h0.shape[-1]

    def gru_cell(inp, hprev, wih, whh, bih, bhh):
        gi = inp @ wih + bih
        gh = hprev @ whh + bhh
        r = jax.nn.sigmoid(gi[:, 0:H] + gh[:, 0:H])
        zg = jax.nn.sigmoid(gi[:, H:2 * H] + gh[:, H:2 * H])
        n = jnp.tanh(gi[:, 2 * H:3 * H] + r * gh[:, 2 * H:3 * H])
        return (1.0 - zg) * n + zg * hprev

    h = [h0[0], h0[1], h0[2]]
    outs = []
    for t in range(x_seq.shape[0]):
        xin = x_seq[t].astype(jnp.float32)
        h[0] = gru_cell(xin, h[0], params["wih0"], params["whh0"], params["bih0"], params["bhh0"])
        h[1] = gru_cell(h[0], h[1], params["wih1"], params["whh1"], params["bih1"], params["bhh1"])
        h[2] = gru_cell(h[1], h[2], params["wih2"], params["whh2"], params["bih2"], params["bhh2"])
        o = jnp.where(h[2] > 0, h[2], 0.01 * h[2])
        cat = jnp.concatenate([o, z_seq[t]], axis=-1)
        f1 = cat @ params["w1"] + params["b1"]
        f1 = jnp.where(f1 > 0, f1, 0.1 * f1)
        logits = f1 @ params["w2"] + params["b2"]
        outs.append(jax.nn.softmax(logits, axis=-1))
    return jnp.stack(outs), jnp.stack(h)


def dequantize_params(params):
    """Same params but with weights rounded through bf16 (what the kernel sees)."""
    p = dict(params)
    for k in ("wih0", "whh0", "wih1", "whh1", "wih2", "whh2", "w1", "w2"):
        p[k] = params[k].astype(jnp.bfloat16).astype(jnp.float32)
    return p


def init_params(key, x_size, h_size, out_size):
    """Deterministic synthetic parameters (PyTorch-like uniform init), weights
    stored pre-transposed as (in_features, out_features)."""
    params = {}
    k = 1.0 / jnp.sqrt(h_size)

    def u(key, shape, scale):
        return jax.random.uniform(key, shape, jnp.float32, -scale, scale)

    keys = jax.random.split(key, 20)
    ki = iter(range(20))
    for layer, in_dim in enumerate([x_size, h_size, h_size]):
        params[f"wih{layer}"] = u(keys[next(ki)], (in_dim, 3 * h_size), k)
        params[f"whh{layer}"] = u(keys[next(ki)], (h_size, 3 * h_size), k)
        params[f"bih{layer}"] = u(keys[next(ki)], (1, 3 * h_size), k)
        params[f"bhh{layer}"] = u(keys[next(ki)], (1, 3 * h_size), k)
    k1 = 1.0 / jnp.sqrt(2 * h_size)
    params["w1"] = u(keys[next(ki)], (2 * h_size, 512), k1)
    params["b1"] = u(keys[next(ki)], (1, 512), k1)
    k2 = 1.0 / jnp.sqrt(512.0)
    params["w2"] = u(keys[next(ki)], (512, out_size), k2)
    params["b2"] = u(keys[next(ki)], (1, out_size), k2)
    return params


if __name__ == "__main__":
    x_size, h_size, out_size = 32, 128, 64
    num_layers, batch, T = 3, 8, 8

    root = jax.random.PRNGKey(0)
    kp, kx, kh, kz = jax.random.split(root, 4)
    params = init_params(kp, x_size, h_size, out_size)
    packed = pack_params(params)

    x = jax.random.normal(kx, (T, batch, x_size), jnp.float32)
    h = jax.random.normal(kh, (num_layers, batch, h_size), jnp.float32)
    z = jax.random.normal(kz, (T, batch, h_size), jnp.float32)

    # Reference with identical bf16-rounded weights in f32 math; remaining deltas
    # are the kernel's bf16 activation casts only.
    deq = dequantize_params(params)

    # Folded T-step decode loop (one pallas_call, weights DMA'd once).
    o, h_out = jax.block_until_ready(decoder_rnn_forward(x, h, z, packed))
    o_ref, h_ref = reference_forward(x, h, z, deq)
    assert o.shape == (T, batch, out_size) and h_out.shape == (num_layers, batch, h_size)
    assert jnp.allclose(o, o_ref, atol=2e-2, rtol=2e-2)
    assert jnp.allclose(h_out, h_ref, atol=3e-2, rtol=3e-2)
    assert jnp.allclose(jnp.sum(o, axis=-1), 1.0, atol=1e-3)

    # T=1 reproduces the module's single-step forward exactly (seq=1).
    o1, h1 = jax.block_until_ready(decoder_rnn_forward(x[:1], h, z[:1], packed))
    o1_ref, h1_ref = reference_forward(x[:1], h, z[:1], deq)
    assert o1.shape == (1, batch, out_size) and h1.shape == (num_layers, batch, h_size)
    assert jnp.allclose(o1, o1_ref, atol=2e-2, rtol=2e-2)
    assert jnp.allclose(h1, h1_ref, atol=2e-2, rtol=2e-2)

    print("KERNEL_OK")
</pallas_src>

<mosaic_0001>
module attributes {stable_mosaic.version = 11 : i64} {
  func.func @decoder_rnn_kernel(%arg0: i32, %arg1: memref<1x8x32xf32, #tpu.memory_space<vmem>>, %arg2: memref<1x8x128xf32, #tpu.memory_space<vmem>>, %arg3: memref<3x8x128xf32, #tpu.memory_space<vmem>>, %arg4: memref<672x384xbf16, #tpu.memory_space<vmem>>, %arg5: memref<8x384xf32, #tpu.memory_space<vmem>>, %arg6: memref<256x512xbf16, #tpu.memory_space<vmem>>, %arg7: memref<1x512xf32, #tpu.memory_space<vmem>>, %arg8: memref<512x128xbf16, #tpu.memory_space<vmem>>, %arg9: memref<1x128xf32, #tpu.memory_space<vmem>>, %arg10: memref<1x8x128xf32, #tpu.memory_space<vmem>>, %arg11: memref<3x8x128xf32, #tpu.memory_space<vmem>>, %arg12: memref<3x8x128xf32, #tpu.memory_space<vmem>>) attributes {dimension_semantics = [#tpu.dimension_semantics<arbitrary>], iteration_bounds = array<i64: 8>, scalar_prefetch = 0 : i64, scratch_operands = 1 : i64, tpu.core_type = #tpu.core_type<tc>, window_params = [{transform_indices = @transform_0, window_bounds = array<i64: 1, 8, 32>}, {transform_indices = @transform_1, window_bounds = array<i64: 1, 8, 128>}, {pipeline_mode = #tpu.pipeline_mode<synchronous>, transform_indices = @transform_2, window_bounds = array<i64: 3, 8, 128>}, {pipeline_mode = #tpu.pipeline_mode<synchronous>, transform_indices = @transform_3, window_bounds = array<i64: 672, 384>}, {pipeline_mode = #tpu.pipeline_mode<synchronous>, transform_indices = @transform_4, window_bounds = array<i64: 8, 384>}, {pipeline_mode = #tpu.pipeline_mode<synchronous>, transform_indices = @transform_5, window_bounds = array<i64: 256, 512>}, {pipeline_mode = #tpu.pipeline_mode<synchronous>, transform_indices = @transform_6, window_bounds = array<i64: 1, 512>}, {pipeline_mode = #tpu.pipeline_mode<synchronous>, transform_indices = @transform_7, window_bounds = array<i64: 512, 128>}, {pipeline_mode = #tpu.pipeline_mode<synchronous>, transform_indices = @transform_8, window_bounds = array<i64: 1, 128>}, {transform_indices = @transform_9, window_bounds = array<i64: 1, 8, 128>}, {pipeline_mode = #tpu.pipeline_mode<synchronous>, transform_indices = @transform_10, window_bounds = array<i64: 3, 8, 128>}]} {
    %c0_i32 = arith.constant 0 : i32
    %0 = arith.cmpi eq, %arg0, %c0_i32 : i32
    %1 = arith.extui %0 : i1 to i32
    %c0_i32_0 = arith.constant 0 : i32
    %2 = arith.cmpi ne, %1, %c0_i32_0 : i32
    scf.if %2 {
      %c0_73 = arith.constant 0 : index
      %c0_74 = arith.constant 0 : index
      %c0_75 = arith.constant 0 : index
      %166 = vector.load %arg3[%c0_73, %c0_74, %c0_75] : memref<3x8x128xf32, #tpu.memory_space<vmem>>, vector<3x8x128xf32>
      %c0_76 = arith.constant 0 : index
      %c0_77 = arith.constant 0 : index
      %c0_78 = arith.constant 0 : index
      %167 = vector.load %arg12[%c0_76, %c0_77, %c0_78] : memref<3x8x128xf32, #tpu.memory_space<vmem>>, vector<3x8x128xf32>
      tpu.vector_store %arg12[%c0_76, %c0_77, %c0_78], %166 {strides = array<i32>} : memref<3x8x128xf32, #tpu.memory_space<vmem>>, vector<3x8x128xf32>,
    } else {
    }
    %c0 = arith.constant 0 : index
    %c0_1 = arith.constant 0 : index
    %3 = vector.load %arg5[%c0, %c0_1] : memref<8x384xf32, #tpu.memory_space<vmem>>, vector<8x384xf32>
    %c0_2 = arith.constant 0 : index
    %c0_3 = arith.constant 0 : index
    %c0_4 = arith.constant 0 : index
    %4 = vector.load %arg12[%c0_2, %c0_3, %c0_4] : memref<3x8x128xf32, #tpu.memory_space<vmem>>, vector<1x8x128xf32>
    %5 = vector.shape_cast %4 : vector<1x8x128xf32> to vector<8x128xf32>
    %6 = arith.truncf %5 : vector<8x128xf32> to vector<8x128xbf16>
    %c288 = arith.constant 288 : index
    %c0_5 = arith.constant 0 : index
    %7 = vector.load %arg4[%c288, %c0_5] : memref<672x384xbf16, #tpu.memory_space<vmem>>, vector<128x384xbf16>
    %cst = arith.constant dense<0.000000e+00> : vector<8x384xf32>
    %8 = tpu.matmul %6, %7, %cst {dimension_numbers = #tpu.dot_dimension_numbers<[1], [0], [0], [1], [0, 0, 1, 1], [], []>} : vector<8x128xbf16>, vector<128x384xbf16>, vector<8x384xf32> -> vector<8x384xf32>
    %c1 = arith.constant 1 : index
    %c0_6 = arith.constant 0 : index
    %c0_7 = arith.constant 0 : index
    %9 = vector.load %arg12[%c1, %c0_6, %c0_7] : memref<3x8x128xf32, #tpu.memory_space<vmem>>, vector<1x8x128xf32>
    %10 = vector.shape_cast %9 : vector<1x8x128xf32> to vector<8x128xf32>
    %11 = arith.truncf %10 : vector<8x128xf32> to vector<8x128xbf16>
    %c416 = arith.constant 416 : index
    %c0_8 = arith.constant 0 : index
    %12 = vector.load %arg4[%c416, %c0_8] : memref<672x384xbf16, #tpu.memory_space<vmem>>, vector<128x384xbf16>
    %cst_9 = arith.constant dense<0.000000e+00> : vector<8x384xf32>
    %13 = tpu.matmul %11, %12, %cst_9 {dimension_numbers = #tpu.dot_dimension_numbers<[1], [0], [0], [1], [0, 0, 1, 1], [], []>} : vector<8x128xbf16>, vector<128x384xbf16>, vector<8x384xf32> -> vector<8x384xf32>
    %c2 = arith.constant 2 : index
    %c0_10 = arith.constant 0 : index
    %c0_11 = arith.constant 0 : index
    %14 = vector.load %arg12[%c2, %c0_10, %c0_11] : memref<3x8x128xf32, #tpu.memory_space<vmem>>, vector<1x8x128xf32>
    %15 = vector.shape_cast %14 : vector<1x8x128xf32> to vector<8x128xf32>
    %16 = arith.truncf %15 : vector<8x128xf32> to vector<8x128xbf16>
    %c544 = arith.constant 544 : index
    %c0_12 = arith.constant 0 : index
    %17 = vector.load %arg4[%c544, %c0_12] : memref<672x384xbf16, #tpu.memory_space<vmem>>, vector<128x384xbf16>
    %cst_13 = arith.constant dense<0.000000e+00> : vector<8x384xf32>
    %18 = tpu.matmul %16, %17, %cst_13 {dimension_numbers = #tpu.dot_dimension_numbers<[1], [0], [0], [1], [0, 0, 1, 1], [], []>} : vector<8x128xbf16>, vector<128x384xbf16>, vector<8x384xf32> -> vector<8x384xf32>
    %c0_14 = arith.constant 0 : index
    %c0_15 = arith.constant 0 : index
    %c0_16 = arith.constant 0 : index
    %19 = vector.load %arg1[%c0_14, %c0_15, %c0_16] : memref<1x8x32xf32, #tpu.memory_space<vmem>>, vector<1x8x32xf32>
    %20 = vector.shape_cast %19 : vector<1x8x32xf32> to vector<8x32xf32>
    %c0_17 = arith.constant 0 : index
    %c0_18 = arith.constant 0 : index
    %c0_19 = arith.constant 0 : index
    %21 = vector.load %arg12[%c0_17, %c0_18, %c0_19] : memref<3x8x128xf32, #tpu.memory_space<vmem>>, vector<1x8x128xf32>
    %22 = vector.shape_cast %21 : vector<1x8x128xf32> to vector<8x128xf32>
    %23 = arith.truncf %20 : vector<8x32xf32> to vector<8x32xbf16>
    %c0_20 = arith.constant 0 : index
    %c0_21 = arith.constant 0 : index
    %24 = vector.load %arg4[%c0_20, %c0_21] : memref<672x384xbf16, #tpu.memory_space<vmem>>, vector<32x384xbf16>
    %cst_22 = arith.constant dense<0.000000e+00> : vector<8x384xf32>
    %25 = tpu.matmul %23, %24, %cst_22 {dimension_numbers = #tpu.dot_dimension_numbers<[1], [0], [0], [1], [0, 0, 1, 1], [], []>} : vector<8x32xbf16>, vector<32x384xbf16>, vector<8x384xf32> -> vector<8x384xf32>
    %26 = vector.extract_strided_slice %3 {offsets = [0, 0], sizes = [1, 384], strides = [1, 1]} : vector<8x384xf32> to vector<1x384xf32>
    %27 = vector.broadcast %26 : vector<1x384xf32> to vector<8x384xf32>
    %28 = arith.addf %25, %27 : vector<8x384xf32>
    %29 = vector.extract_strided_slice %28 {offsets = [0, 0], sizes = [8, 256], strides = [1, 1]} : vector<8x384xf32> to vector<8x256xf32>
    %30 = vector.extract_strided_slice %8 {offsets = [0, 0], sizes = [8, 256], strides = [1, 1]} : vector<8x384xf32> to vector<8x256xf32>
    %31 = arith.addf %29, %30 : vector<8x256xf32>
    %32 = arith.negf %31 : vector<8x256xf32>
    %33 = math.exp %32 : vector<8x256xf32>
    %cst_23 = arith.constant 1.000000e+00 : f32
    %34 = vector.broadcast %cst_23 : f32 to vector<8x256xf32>
    %35 = arith.addf %34, %33 : vector<8x256xf32>
    %36 = arith.divf %34, %35 : vector<8x256xf32>
    %37 = vector.extract_strided_slice %36 {offsets = [0, 0], sizes = [8, 128], strides = [1, 1]} : vector<8x256xf32> to vector<8x128xf32>
    %38 = vector.extract_strided_slice %36 {offsets = [0, 128], sizes = [8, 128], strides = [1, 1]} : vector<8x256xf32> to vector<8x128xf32>
    %39 = vector.extract_strided_slice %28 {offsets = [0, 256], sizes = [8, 128], strides = [1, 1]} : vector<8x384xf32> to vector<8x128xf32>
    %40 = vector.extract_strided_slice %8 {offsets = [0, 256], sizes = [8, 128], strides = [1, 1]} : vector<8x384xf32> to vector<8x128xf32>
    %41 = vector.extract_strided_slice %3 {offsets = [3, 0], sizes = [1, 128], strides = [1, 1]} : vector<8x384xf32> to vector<1x128xf32>
    %42 = vector.broadcast %41 : vector<1x128xf32> to vector<8x128xf32>
    %43 = arith.addf %40, %42 : vector<8x128xf32>
    %44 = arith.mulf %37, %43 : vector<8x128xf32>
    %45 = arith.addf %39, %44 : vector<8x128xf32>
    %46 = math.tanh %45 : vector<8x128xf32>
    %cst_24 = arith.constant 1.000000e+00 : f32
    %47 = vector.broadcast %cst_24 : f32 to vector<8x128xf32>
    %48 = arith.subf %47, %38 : vector<8x128xf32>
    %49 = arith.mulf %48, %46 : vector<8x128xf32>
    %50 = arith.mulf %38, %22 : vector<8x128xf32>
    %51 = arith.addf %49, %50 : vector<8x128xf32>
    %c1_25 = arith.constant 1 : index
    %c0_26 = arith.constant 0 : index
    %c0_27 = arith.constant 0 : index
    %52 = vector.load %arg12[%c1_25, %c0_26, %c0_27] : memref<3x8x128xf32, #tpu.memory_space<vmem>>, vector<1x8x128xf32>
    %53 = vector.shape_cast %52 : vector<1x8x128xf32> to vector<8x128xf32>
    %54 = arith.truncf %51 : vector<8x128xf32> to vector<8x128xbf16>
    %c32 = arith.constant 32 : index
    %c0_28 = arith.constant 0 : index
    %55 = vector.load %arg4[%c32, %c0_28] : memref<672x384xbf16, #tpu.memory_space<vmem>>, vector<128x384xbf16>
    %cst_29 = arith.constant dense<0.000000e+00> : vector<8x384xf32>
    %56 = tpu.matmul %54, %55, %cst_29 {dimension_numbers = #tpu.dot_dimension_numbers<[1], [0], [0], [1], [0, 0, 1, 1], [], []>} : vector<8x128xbf16>, vector<128x384xbf16>, vector<8x384xf32> -> vector<8x384xf32>
    %57 = vector.extract_strided_slice %3 {offsets = [1, 0], sizes = [1, 384], strides = [1, 1]} : vector<8x384xf32> to vector<1x384xf32>
    %58 = vector.broadcast %57 : vector<1x384xf32> to vector<8x384xf32>
    %59 = arith.addf %56, %58 : vector<8x384xf32>
    %60 = vector.extract_strided_slice %59 {offsets = [0, 0], sizes = [8, 256], strides = [1, 1]} : vector<8x384xf32> to vector<8x256xf32>
    %61 = vector.extract_strided_slice %13 {offsets = [0, 0], sizes = [8, 256], strides = [1, 1]} : vector<8x384xf32> to vector<8x256xf32>
    %62 = arith.addf %60, %61 : vector<8x256xf32>
    %63 = arith.negf %62 : vector<8x256xf32>
    %64 = math.exp %63 : vector<8x256xf32>
    %cst_30 = arith.constant 1.000000e+00 : f32
    %65 = vector.broadcast %cst_30 : f32 to vector<8x256xf32>
    %66 = arith.addf %65, %64 : vector<8x256xf32>
    %67 = arith.divf %65, %66 : vector<8x256xf32>
    %68 = vector.extract_strided_slice %67 {offsets = [0, 0], sizes = [8, 128], strides = [1, 1]} : vector<8x256xf32> to vector<8x128xf32>
    %69 = vector.extract_strided_slice %67 {offsets = [0, 128], sizes = [8, 128], strides = [1, 1]} : vector<8x256xf32> to vector<8x128xf32>
    %70 = vector.extract_strided_slice %59 {offsets = [0, 256], sizes = [8, 128], strides = [1, 1]} : vector<8x384xf32> to vector<8x128xf32>
    %71 = vector.extract_strided_slice %13 {offsets = [0, 256], sizes = [8, 128], strides = [1, 1]} : vector<8x384xf32> to vector<8x128xf32>
    %72 = vector.extract_strided_slice %3 {offsets = [4, 0], sizes = [1, 128], strides = [1, 1]} : vector<8x384xf32> to vector<1x128xf32>
    %73 = vector.broadcast %72 : vector<1x128xf32> to vector<8x128xf32>
    %74 = arith.addf %71, %73 : vector<8x128xf32>
    %75 = arith.mulf %68, %74 : vector<8x128xf32>
    %76 = arith.addf %70, %75 : vector<8x128xf32>
    %77 = math.tanh %76 : vector<8x128xf32>
    %cst_31 = arith.constant 1.000000e+00 : f32
    %78 = vector.broadcast %cst_31 : f32 to vector<8x128xf32>
    %79 = arith.subf %78, %69 : vector<8x128xf32>
    %80 = arith.mulf %79, %77 : vector<8x128xf32>
    %81 = arith.mulf %69, %53 : vector<8x128xf32>
    %82 = arith.addf %80, %81 : vector<8x128xf32>
    %c2_32 = arith.constant 2 : index
    %c0_33 = arith.constant 0 : index
    %c0_34 = arith.constant 0 : index
    %83 = vector.load %arg12[%c2_32, %c0_33, %c0_34] : memref<3x8x128xf32, #tpu.memory_space<vmem>>, vector<1x8x128xf32>
    %84 = vector.shape_cast %83 : vector<1x8x128xf32> to vector<8x128xf32>
    %85 = arith.truncf %82 : vector<8x128xf32> to vector<8x128xbf16>
    %c160 = arith.constant 160 : index
    %c0_35 = arith.constant 0 : index
    %86 = vector.load %arg4[%c160, %c0_35] : memref<672x384xbf16, #tpu.memory_space<vmem>>, vector<128x384xbf16>
    %cst_36 = arith.constant dense<0.000000e+00> : vector<8x384xf32>
    %87 = tpu.matmul %85, %86, %cst_36 {dimension_numbers = #tpu.dot_dimension_numbers<[1], [0], [0], [1], [0, 0, 1, 1], [], []>} : vector<8x128xbf16>, vector<128x384xbf16>, vector<8x384xf32> -> vector<8x384xf32>
    %88 = vector.extract_strided_slice %3 {offsets = [2, 0], sizes = [1, 384], strides = [1, 1]} : vector<8x384xf32> to vector<1x384xf32>
    %89 = vector.broadcast %88 : vector<1x384xf32> to vector<8x384xf32>
    %90 = arith.addf %87, %89 : vector<8x384xf32>
    %91 = vector.extract_strided_slice %90 {offsets = [0, 0], sizes = [8, 256], strides = [1, 1]} : vector<8x384xf32> to vector<8x256xf32>
    %92 = vector.extract_strided_slice %18 {offsets = [0, 0], sizes = [8, 256], strides = [1, 1]} : vector<8x384xf32> to vector<8x256xf32>
    %93 = arith.addf %91, %92 : vector<8x256xf32>
    %94 = arith.negf %93 : vector<8x256xf32>
    %95 = math.exp %94 : vector<8x256xf32>
    %cst_37 = arith.constant 1.000000e+00 : f32
    %96 = vector.broadcast %cst_37 : f32 to vector<8x256xf32>
    %97 = arith.addf %96, %95 : vector<8x256xf32>
    %98 = arith.divf %96, %97 : vector<8x256xf32>
    %99 = vector.extract_strided_slice %98 {offsets = [0, 0], sizes = [8, 128], strides = [1, 1]} : vector<8x256xf32> to vector<8x128xf32>
    %100 = vector.extract_strided_slice %98 {offsets = [0, 128], sizes = [8, 128], strides = [1, 1]} : vector<8x256xf32> to vector<8x128xf32>
    %101 = vector.extract_strided_slice %90 {offsets = [0, 256], sizes = [8, 128], strides = [1, 1]} : vector<8x384xf32> to vector<8x128xf32>
    %102 = vector.extract_strided_slice %18 {offsets = [0, 256], sizes = [8, 128], strides = [1, 1]} : vector<8x384xf32> to vector<8x128xf32>
    %103 = vector.extract_strided_slice %3 {offsets = [5, 0], sizes = [1, 128], strides = [1, 1]} : vector<8x384xf32> to vector<1x128xf32>
    %104 = vector.broadcast %103 : vector<1x128xf32> to vector<8x128xf32>
    %105 = arith.addf %102, %104 : vector<8x128xf32>
    %106 = arith.mulf %99, %105 : vector<8x128xf32>
    %107 = arith.addf %101, %106 : vector<8x128xf32>
    %108 = math.tanh %107 : vector<8x128xf32>
    %cst_38 = arith.constant 1.000000e+00 : f32
    %109 = vector.broadcast %cst_38 : f32 to vector<8x128xf32>
    %110 = arith.subf %109, %100 : vector<8x128xf32>
    %111 = arith.mulf %110, %108 : vector<8x128xf32>
    %112 = arith.mulf %100, %84 : vector<8x128xf32>
    %113 = arith.addf %111, %112 : vector<8x128xf32>
    %c0_39 = arith.constant 0 : index
    %c0_40 = arith.constant 0 : index
    %c0_41 = arith.constant 0 : index
    %114 = vector.load %arg12[%c0_39, %c0_40, %c0_41] : memref<3x8x128xf32, #tpu.memory_space<vmem>>, vector<1x8x128xf32>
    %115 = vector.shape_cast %114 : vector<1x8x128xf32> to vector<8x128xf32>
    %116 = vector.shape_cast %51 : vector<8x128xf32> to vector<1x8x128xf32>
    tpu.vector_store %arg12[%c0_39, %c0_40, %c0_41], %116 {strides = array<i32>} : memref<3x8x128xf32, #tpu.memory_space<vmem>>, vector<1x8x128xf32>,
    %c1_42 = arith.constant 1 : index
    %c0_43 = arith.constant 0 : index
    %c0_44 = arith.constant 0 : index
    %117 = vector.load %arg12[%c1_42, %c0_43, %c0_44] : memref<3x8x128xf32, #tpu.memory_space<vmem>>, vector<1x8x128xf32>
    %118 = vector.shape_cast %117 : vector<1x8x128xf32> to vector<8x128xf32>
    %119 = vector.shape_cast %82 : vector<8x128xf32> to vector<1x8x128xf32>
    tpu.vector_store %arg12[%c1_42, %c0_43, %c0_44], %119 {strides = array<i32>} : memref<3x8x128xf32, #tpu.memory_space<vmem>>, vector<1x8x128xf32>,
    %c2_45 = arith.constant 2 : index
    %c0_46 = arith.constant 0 : index
    %c0_47 = arith.constant 0 : index
    %120 = vector.load %arg12[%c2_45, %c0_46, %c0_47] : memref<3x8x128xf32, #tpu.memory_space<vmem>>, vector<1x8x128xf32>
    %121 = vector.shape_cast %120 : vector<1x8x128xf32> to vector<8x128xf32>
    %122 = vector.shape_cast %113 : vector<8x128xf32> to vector<1x8x128xf32>
    tpu.vector_store %arg12[%c2_45, %c0_46, %c0_47], %122 {strides = array<i32>} : memref<3x8x128xf32, #tpu.memory_space<vmem>>, vector<1x8x128xf32>,
    %c7_i32 = arith.constant 7 : i32
    %123 = arith.cmpi eq, %arg0, %c7_i32 : i32
    %124 = arith.extui %123 : i1 to i32
    %c0_i32_48 = arith.constant 0 : i32
    %125 = arith.cmpi ne, %124, %c0_i32_48 : i32
    scf.if %125 {
      %c0_73 = arith.constant 0 : index
      %c0_74 = arith.constant 0 : index
      %c0_75 = arith.constant 0 : index
      %166 = vector.load %arg12[%c0_73, %c0_74, %c0_75] : memref<3x8x128xf32, #tpu.memory_space<vmem>>, vector<3x8x128xf32>
      %c0_76 = arith.constant 0 : index
      %c0_77 = arith.constant 0 : index
      %c0_78 = arith.constant 0 : index
      %167 = vector.load %arg11[%c0_76, %c0_77, %c0_78] : memref<3x8x128xf32, #tpu.memory_space<vmem>>, vector<3x8x128xf32>
      tpu.vector_store %arg11[%c0_76, %c0_77, %c0_78], %166 {strides = array<i32>} : memref<3x8x128xf32, #tpu.memory_space<vmem>>, vector<3x8x128xf32>,
    } else {
    }
    %cst_49 = arith.constant 0.000000e+00 : f32
    %126 = vector.broadcast %cst_49 : f32 to vector<8x128xf32>
    %127 = arith.cmpf ogt, %113, %126 : vector<8x128xf32>
    %cst_50 = arith.constant 0.00999999977 : f32
    %128 = vector.broadcast %cst_50 : f32 to vector<8x128xf32>
    %129 = arith.mulf %128, %113 : vector<8x128xf32>
    %130 = arith.select %127, %113, %129 : vector<8x128xi1>, vector<8x128xf32>
    %c0_51 = arith.constant 0 : index
    %c0_52 = arith.constant 0 : index
    %c0_53 = arith.constant 0 : index
    %131 = vector.load %arg2[%c0_51, %c0_52, %c0_53] : memref<1x8x128xf32, #tpu.memory_space<vmem>>, vector<1x8x128xf32>
    %132 = vector.shape_cast %131 : vector<1x8x128xf32> to vector<8x128xf32>
    %133 = arith.truncf %130 : vector<8x128xf32> to vector<8x128xbf16>
    %c0_54 = arith.constant 0 : index
    %c0_55 = arith.constant 0 : index
    %134 = vector.load %arg6[%c0_54, %c0_55] : memref<256x512xbf16, #tpu.memory_space<vmem>>, vector<128x512xbf16>
    %cst_56 = arith.constant dense<0.000000e+00> : vector<8x512xf32>
    %135 = tpu.matmul %133, %134, %cst_56 {dimension_numbers = #tpu.dot_dimension_numbers<[1], [0], [0], [1], [0, 0, 1, 1], [], []>} : vector<8x128xbf16>, vector<128x512xbf16>, vector<8x512xf32> -> vector<8x512xf32>
    %136 = arith.truncf %132 : vector<8x128xf32> to vector<8x128xbf16>
    %c128 = arith.constant 128 : index
    %c0_57 = arith.constant 0 : index
    %137 = vector.load %arg6[%c128, %c0_57] : memref<256x512xbf16, #tpu.memory_space<vmem>>, vector<128x512xbf16>
    %cst_58 = arith.constant dense<0.000000e+00> : vector<8x512xf32>
    %138 = tpu.matmul %136, %137, %cst_58 {dimension_numbers = #tpu.dot_dimension_numbers<[1], [0], [0], [1], [0, 0, 1, 1], [], []>} : vector<8x128xbf16>, vector<128x512xbf16>, vector<8x512xf32> -> vector<8x512xf32>
    %139 = arith.addf %135, %138 : vector<8x512xf32>
    %c0_59 = arith.constant 0 : index
    %c0_60 = arith.constant 0 : index
    %140 = vector.load %arg7[%c0_59, %c0_60] : memref<1x512xf32, #tpu.memory_space<vmem>>, vector<1x512xf32>
    %141 = vector.broadcast %140 : vector<1x512xf32> to vector<8x512xf32>
    %142 = arith.addf %139, %141 : vector<8x512xf32>
    %cst_61 = arith.constant 0.000000e+00 : f32
    %143 = vector.broadcast %cst_61 : f32 to vector<8x512xf32>
    %144 = arith.cmpf ogt, %142, %143 : vector<8x512xf32>
    %cst_62 = arith.constant 1.000000e-01 : f32
    %145 = vector.broadcast %cst_62 : f32 to vector<8x512xf32>
    %146 = arith.mulf %145, %142 : vector<8x512xf32>
    %147 = arith.select %144, %142, %146 : vector<8x512xi1>, vector<8x512xf32>
    %148 = arith.truncf %147 : vector<8x512xf32> to vector<8x512xbf16>
    %c0_63 = arith.constant 0 : index
    %c0_64 = arith.constant 0 : index
    %149 = vector.load %arg8[%c0_63, %c0_64] : memref<512x128xbf16, #tpu.memory_space<vmem>>, vector<512x128xbf16>
    %cst_65 = arith.constant dense<0.000000e+00> : vector<8x128xf32>
    %150 = tpu.matmul %148, %149, %cst_65 {dimension_numbers = #tpu.dot_dimension_numbers<[1], [0], [0], [1], [0, 0, 1, 1], [], []>} : vector<8x512xbf16>, vector<512x128xbf16>, vector<8x128xf32> -> vector<8x128xf32>
    %c0_66 = arith.constant 0 : index
    %c0_67 = arith.constant 0 : index
    %151 = vector.load %arg9[%c0_66, %c0_67] : memref<1x128xf32, #tpu.memory_space<vmem>>, vector<1x128xf32>
    %152 = vector.broadcast %151 : vector<1x128xf32> to vector<8x128xf32>
    %153 = arith.addf %150, %152 : vector<8x128xf32>
    %cst_68 = arith.constant dense<0xFF800000> : vector<8xf32>
    %154 = vector.multi_reduction <maximumf>, %153, %cst_68 [1] : vector<8x128xf32> to vector<8xf32>
    %155 = vector.shape_cast %154 : vector<8xf32> to vector<8x1xf32>
    %156 = vector.broadcast %155 : vector<8x1xf32> to vector<8x128xf32>
    %157 = arith.subf %153, %156 : vector<8x128xf32>
    %158 = math.exp %157 : vector<8x128xf32>
    %cst_69 = arith.constant dense<0.000000e+00> : vector<8xf32>
    %159 = vector.multi_reduction <add>, %158, %cst_69 [1] : vector<8x128xf32> to vector<8xf32>
    %160 = vector.shape_cast %159 : vector<8xf32> to vector<8x1xf32>
    %161 = vector.broadcast %160 : vector<8x1xf32> to vector<8x128xf32>
    %162 = arith.divf %158, %161 : vector<8x128xf32>
    %c0_70 = arith.constant 0 : index
    %c0_71 = arith.constant 0 : index
    %c0_72 = arith.constant 0 : index
    %163 = vector.load %arg10[%c0_70, %c0_71, %c0_72] : memref<1x8x128xf32, #tpu.memory_space<vmem>>, vector<1x8x128xf32>
    %164 = vector.shape_cast %163 : vector<1x8x128xf32> to vector<8x128xf32>
    %165 = vector.shape_cast %162 : vector<8x128xf32> to vector<1x8x128xf32>
    tpu.vector_store %arg10[%c0_70, %c0_71, %c0_72], %165 {strides = array<i32>} : memref<1x8x128xf32, #tpu.memory_space<vmem>>, vector<1x8x128xf32>,
    return
  }
  func.func @transform_0(%arg0: i32) -> (i32, i32, i32) {
    %c0_i32 = arith.constant 0 : i32
    %c0_i32_0 = arith.constant 0 : i32
    %c0_i32_1 = arith.constant 0 : i32
    return %arg0, %c0_i32, %c0_i32_0 : i32, i32, i32
  }
  func.func @transform_1(%arg0: i32) -> (i32, i32, i32) {
    %c0_i32 = arith.constant 0 : i32
    %c0_i32_0 = arith.constant 0 : i32
    %c0_i32_1 = arith.constant 0 : i32
    return %arg0, %c0_i32, %c0_i32_0 : i32, i32, i32
  }
  func.func @transform_2(%arg0: i32) -> (i32, i32, i32) {
    %c0_i32 = arith.constant 0 : i32
    %c0_i32_0 = arith.constant 0 : i32
    %c0_i32_1 = arith.constant 0 : i32
    %c0_i32_2 = arith.constant 0 : i32
    return %c0_i32, %c0_i32_0, %c0_i32_1 : i32, i32, i32
  }
  func.func @transform_3(%arg0: i32) -> (i32, i32) {
    %c0_i32 = arith.constant 0 : i32
    %c0_i32_0 = arith.constant 0 : i32
    %c0_i32_1 = arith.constant 0 : i32
    return %c0_i32, %c0_i32_0 : i32, i32
  }
  func.func @transform_4(%arg0: i32) -> (i32, i32) {
    %c0_i32 = arith.constant 0 : i32
    %c0_i32_0 = arith.constant 0 : i32
    %c0_i32_1 = arith.constant 0 : i32
    return %c0_i32, %c0_i32_0 : i32, i32
  }
  func.func @transform_5(%arg0: i32) -> (i32, i32) {
    %c0_i32 = arith.constant 0 : i32
    %c0_i32_0 = arith.constant 0 : i32
    %c0_i32_1 = arith.constant 0 : i32
    return %c0_i32, %c0_i32_0 : i32, i32
  }
  func.func @transform_6(%arg0: i32) -> (i32, i32) {
    %c0_i32 = arith.constant 0 : i32
    %c0_i32_0 = arith.constant 0 : i32
    %c0_i32_1 = arith.constant 0 : i32
    return %c0_i32, %c0_i32_0 : i32, i32
  }
  func.func @transform_7(%arg0: i32) -> (i32, i32) {
    %c0_i32 = arith.constant 0 : i32
    %c0_i32_0 = arith.constant 0 : i32
    %c0_i32_1 = arith.constant 0 : i32
    return %c0_i32, %c0_i32_0 : i32, i32
  }
  func.func @transform_8(%arg0: i32) -> (i32, i32) {
    %c0_i32 = arith.constant 0 : i32
    %c0_i32_0 = arith.constant 0 : i32
    %c0_i32_1 = arith.constant 0 : i32
    return %c0_i32, %c0_i32_0 : i32, i32
  }
  func.func @transform_9(%arg0: i32) -> (i32, i32, i32) {
    %c0_i32 = arith.constant 0 : i32
    %c0_i32_0 = arith.constant 0 : i32
    %c0_i32_1 = arith.constant 0 : i32
    return %arg0, %c0_i32, %c0_i32_0 : i32, i32, i32
  }
  func.func @transform_10(%arg0: i32) -> (i32, i32, i32) {
    %c0_i32 = arith.constant 0 : i32
    %c0_i32_0 = arith.constant 0 : i32
    %c0_i32_1 = arith.constant 0 : i32
    %c0_i32_2 = arith.constant 0 : i32
    return %c0_i32, %c0_i32_0, %c0_i32_1 : i32, i32, i32
  }
}

</mosaic_0001>

<llo_original>
// kernel: tpu_custom_call.1
$region0: #{tpu_custom_call.1}
  #allocation0 [shape = 'u32[]', space=smem, size = 0x4, offset = 0x4, fixed_abs, tag = 'smem constant byte address 0x4 - core index']
  #allocation1 [shape = 'u32[144,128]{1,0:T(1,128)}', space=vmem, size = 0x12000, scoped, tag = 'internal scratch']
  #allocation2 [shape = 'f32[3,8,128]{2,1,0:T(8,128)}', space=vmem, size = 0x3000, scoped, tag = 'scratch operand']
  %s0 = inlined_call_operand.hbm [shape: f32[8,8,32], index: 0, kind: input, shape index: {}]
  %s1 = inlined_call_operand.hbm [shape: f32[8,8,128], index: 1, kind: input, shape index: {}]
  %s2 = inlined_call_operand.hbm [shape: f32[3,8,128], index: 2, kind: input, shape index: {}]
  %s3 = inlined_call_operand.hbm [shape: bf16[672,384], index: 3, kind: input, shape index: {}]
  %s4 = inlined_call_operand.hbm [shape: f32[8,384], index: 4, kind: input, shape index: {}]
  %s5 = inlined_call_operand.hbm [shape: bf16[256,512], index: 5, kind: input, shape index: {}]
  %s6 = inlined_call_operand.vmem [shape: f32[1,512], index: 6, kind: input, shape index: {}]
  %s7 = inlined_call_operand.hbm [shape: bf16[512,128], index: 7, kind: input, shape index: {}]
  %s8 = inlined_call_operand.vmem [shape: f32[1,128], index: 8, kind: input, shape index: {}]
  %s9 = inlined_call_operand.hbm [shape: f32[8,8,128], index: 9, kind: output, shape index: {0}]
  %s10 = inlined_call_operand.hbm [shape: f32[3,8,128], index: 10, kind: output, shape index: {1}]
  %11 = xla_tuple %s9, %s10
  %s12 = sld [smem:[#allocation0]]
  $region113: #{tpu_custom_call.1} parent=0
    _
  %s14 = ssub.s32 1, %s12
  %s15 = scalar_select 0, %s14, %s12
  $region1: #{tpu_custom_call.1} parent=0
    #allocation3 [shape = 'u8[8192]{0}', space=vmem, size = 0x2000, scoped, tag = 'input window, operand 0']
    #allocation4 [shape = 's32[2]{0}', space=sflag, size = 0x8, scoped, tag = 'scoped memory for tpu_custom_call.1']
    #allocation5 [shape = 's32[2]{0}', space=sflag, size = 0x8, scoped, tag = 'scoped memory for tpu_custom_call.1']
    #allocation6 [shape = 'u8[8192]{0}', space=vmem, size = 0x2000, scoped, tag = 'input window, operand 1']
    #allocation7 [shape = 's32[2]{0}', space=sflag, size = 0x8, scoped, tag = 'scoped memory for tpu_custom_call.1']
    #allocation8 [shape = 'u8[12288]{0}', space=vmem, size = 0x3000, scoped, tag = 'input window, operand 2, single buffered']
    #allocation9 [shape = 'u8[516096]{0}', space=vmem, size = 0x7e000, scoped, tag = 'input window, operand 3, single buffered']
    #allocation10 [shape = 's32[1]{0}', space=sflag, size = 0x4, scoped, tag = 'scoped memory for tpu_custom_call.1']
    #allocation11 [shape = 'u8[12288]{0}', space=vmem, size = 0x3000, scoped, tag = 'input window, operand 4, single buffered']
    #allocation12 [shape = 'u8[262144]{0}', space=vmem, size = 0x40000, scoped, tag = 'input window, operand 5, single buffered']
    #allocation13 [shape = 's32[1]{0}', space=sflag, size = 0x4, scoped, tag = 'scoped memory for tpu_custom_call.1']
    #allocation14 [shape = 'u8[131072]{0}', space=vmem, size = 0x20000, scoped, tag = 'input window, operand 7, single buffered']
    #allocation15 [shape = 'u8[8192]{0}', space=vmem, size = 0x2000, scoped, tag = 'output window, operand 0']
    #allocation16 [shape = 'u8[12288]{0}', space=vmem, size = 0x3000, scoped, tag = 'output window, operand 1, single buffered']
    #allocation17 [shape = 's32[1]{0}', space=sflag, size = 0x4, scoped, tag = 'scoped memory for tpu_custom_call.1']
    %16 = vsyncpa [#allocation4], 0
    %s17 = scalar_lea.sflag [#allocation4], 1
    %18 = vsyncpa %s17, 0
    %19 = vsyncpa [#allocation7], 0
    %s20 = scalar_lea.sflag [#allocation7], 1
    %21 = vsyncpa %s20, 0
    %22 = vsyncpa [#allocation10], 0
    %23 = vsyncpa [#allocation13], 0
    %24 = vsyncpa [#allocation5], 0
    %s25 = scalar_lea.sflag [#allocation5], 1
    %26 = vsyncpa %s25, 0
    %27 = vsyncpa [#allocation17], 0
    loop: start=0, step=1, limit=10
    $region2: #{tpu_custom_call.1} parent=1 // loop_pre_header
      _
    $region3: #{tpu_custom_call.1} parent=1 // loop_header
      %s29 = sphi 0, %s33
      %p30 = scmp.ge.s32.totalorder %s29, 10
      %s39 = sphi 0, %s41
      %s42 = sphi 0, %s39
      %s43 = sphi 0, %s42
      %s59 = sphi 0, %s43
      %s65 = sphi 0, %s67
      %s68 = sphi 0, %s65
      %s69 = sphi 0, %s68
      %s85 = sphi 0, %s69
      %s89 = sphi 0, %s89
      %s91 = sphi 0, %s89
      %s92 = sphi 0, %s91
      %s106 = sphi 0, %s92
      %s110 = sphi 0, %s110
      %s112 = sphi 0, %s110
      %s113 = sphi 0, %s112
      %s127 = sphi 0, %s113
      %s131 = sphi 0, %s131
      %s133 = sphi 0, %s131
      %s134 = sphi 0, %s133
      %s148 = sphi 0, %s134
      %s152 = sphi 0, %s152
      %s154 = sphi 0, %s152
      %s155 = sphi 0, %s154
      %s169 = sphi 0, %s155
      %s173 = sphi 0, %s173
      %s175 = sphi 0, %s173
      %s176 = sphi 0, %s175
      %s190 = sphi 0, %s176
      %s194 = sphi 0, %s194
      %s196 = sphi 0, %s194
      %s197 = sphi 0, %s196
      %s211 = sphi 0, %s197
      %s215 = sphi 0, %s215
      %s217 = sphi 0, %s215
      %s218 = sphi 0, %s217
      %s232 = sphi 0, %s218
      %s238 = sphi 0, %s240
      %s241 = sphi 0, %s238
      %s242 = sphi 0, %s241
      %s258 = sphi 0, %s242
      %s262 = sphi 0, %s262
      %s264 = sphi 0, %s262
      %s265 = sphi 0, %s264
      %s279 = sphi 0, %s265
    $region4: #{tpu_custom_call.1} parent=1 // loop_header_branch
      %32 = sbr.rel (%p30) target = $region8
    $region5: #{tpu_custom_call.1} parent=1 // loop_body
      %s34 = ssub.s32 %s29, 1
      %s35 = ssub.s32 %s29, 2
      %s36 = sadd.s32 %s29, 1
      %s37 = ssub.s32 %s29, %s36
      %p38 = scmp.eq.s32.totalorder %s37, 0
      %s40 = sadd.s32 %s39, 1
      %s41 = scalar_select %p38, %s39, %s40
      %p44 = pneg %p38
      %p45 = scmp.eq.s32.totalorder %s29, 7
      %p46 = por %p44, %p45
      %p47 = scmp.ne.s32.totalorder %s39, %s42
      %p48 = scmp.eq.s32.totalorder %s29, 0
      %p49 = por %p47, %p48
      %p50 = scmp.ne.s32.totalorder %s39, %s42
      %p51 = scmp.eq.s32.totalorder %s34, 7
      %p52 = por %p50, %p51
      %p53 = scmp.ne.s32.totalorder %s42, %s43
      %p54 = scmp.eq.s32.totalorder %s34, 0
      %p55 = por %p53, %p54
      %p56 = scmp.ne.s32.totalorder %s42, %s43
      %p57 = scmp.eq.s32.totalorder %s35, 7
      %p58 = por %p56, %p57
      %p60 = scmp.ne.s32.totalorder %s43, %s59
      %p61 = scmp.eq.s32.totalorder %s35, 0
      %p62 = por %p60, %p61
      %s63 = ssub.s32 %s29, %s36
      %p64 = scmp.eq.s32.totalorder %s63, 0
      %s66 = sadd.s32 %s65, 1
      %s67 = scalar_select %p64, %s65, %s66
      %p70 = pneg %p64
      %p71 = scmp.eq.s32.totalorder %s29, 7
      %p72 = por %p70, %p71
      %p73 = scmp.ne.s32.totalorder %s65, %s68
      %p74 = scmp.eq.s32.totalorder %s29, 0
      %p75 = por %p73, %p74
      %p76 = scmp.ne.s32.totalorder %s65, %s68
      %p77 = scmp.eq.s32.totalorder %s34, 7
      %p78 = por %p76, %p77
      %p79 = scmp.ne.s32.totalorder %s68, %s69
      %p80 = scmp.eq.s32.totalorder %s34, 0
      %p81 = por %p79, %p80
      %p82 = scmp.ne.s32.totalorder %s68, %s69
      %p83 = scmp.eq.s32.totalorder %s35, 7
      %p84 = por %p82, %p83
      %p86 = scmp.ne.s32.totalorder %s69, %s85
      %p87 = scmp.eq.s32.totalorder %s35, 0
      %p88 = por %p86, %p87
      %s90 = sadd.s32 %s89, 1
      %p93 = scmp.eq.s32.totalorder %s29, 7
      %p94 = scmp.ne.s32.totalorder %s89, %s91
      %p95 = scmp.eq.s32.totalorder %s29, 0
      %p96 = por %p94, %p95
      %p97 = scmp.ne.s32.totalorder %s89, %s91
      %p98 = scmp.eq.s32.totalorder %s34, 7
      %p99 = por %p97, %p98
      %p100 = scmp.ne.s32.totalorder %s91, %s92
      %p101 = scmp.eq.s32.totalorder %s34, 0
      %p102 = por %p100, %p101
      %p103 = scmp.ne.s32.totalorder %s91, %s92
      %p104 = scmp.eq.s32.totalorder %s35, 7
      %p105 = por %p103, %p104
      %p107 = scmp.ne.s32.totalorder %s92, %s106
      %p108 = scmp.eq.s32.totalorder %s35, 0
      %p109 = por %p107, %p108
      %s111 = sadd.s32 %s110, 1
      %p114 = scmp.eq.s32.totalorder %s29, 7
      %p115 = scmp.ne.s32.totalorder %s110, %s112
      %p116 = scmp.eq.s32.totalorder %s29, 0
      %p117 = por %p115, %p116
      %p118 = scmp.ne.s32.totalorder %s110, %s112
      %p119 = scmp.eq.s32.totalorder %s34, 7
      %p120 = por %p118, %p119
      %p121 = scmp.ne.s32.totalorder %s112, %s113
      %p122 = scmp.eq.s32.totalorder %s34, 0
      %p123 = por %p121, %p122
      %p124 = scmp.ne.s32.totalorder %s112, %s113
      %p125 = scmp.eq.s32.totalorder %s35, 7
      %p126 = por %p124, %p125
      %p128 = scmp.ne.s32.totalorder %s113, %s127
      %p129 = scmp.eq.s32.totalorder %s35, 0
      %p130 = por %p128, %p129
      %s132 = sadd.s32 %s131, 1
      %p135 = scmp.eq.s32.totalorder %s29, 7
      %p136 = scmp.ne.s32.totalorder %s131, %s133
      %p137 = scmp.eq.s32.totalorder %s29, 0
      %p138 = por %p136, %p137
      %p139 = scmp.ne.s32.totalorder %s131, %s133
      %p140 = scmp.eq.s32.totalorder %s34, 7
      %p141 = por %p139, %p140
      %p142 = scmp.ne.s32.totalorder %s133, %s134
      %p143 = scmp.eq.s32.totalorder %s34, 0
      %p144 = por %p142, %p143
      %p145 = scmp.ne.s32.totalorder %s133, %s134
      %p146 = scmp.eq.s32.totalorder %s35, 7
      %p147 = por %p145, %p146
      %p149 = scmp.ne.s32.totalorder %s134, %s148
      %p150 = scmp.eq.s32.totalorder %s35, 0
      %p151 = por %p149, %p150
      %s153 = sadd.s32 %s152, 1
      %p156 = scmp.eq.s32.totalorder %s29, 7
      %p157 = scmp.ne.s32.totalorder %s152, %s154
      %p158 = scmp.eq.s32.totalorder %s29, 0
      %p159 = por %p157, %p158
      %p160 = scmp.ne.s32.totalorder %s152, %s154
      %p161 = scmp.eq.s32.totalorder %s34, 7
      %p162 = por %p160, %p161
      %p163 = scmp.ne.s32.totalorder %s154, %s155
      %p164 = scmp.eq.s32.totalorder %s34, 0
      %p165 = por %p163, %p164
      %p166 = scmp.ne.s32.totalorder %s154, %s155
      %p167 = scmp.eq.s32.totalorder %s35, 7
      %p168 = por %p166, %p167
      %p170 = scmp.ne.s32.totalorder %s155, %s169
      %p171 = scmp.eq.s32.totalorder %s35, 0
      %p172 = por %p170, %p171
      %s174 = sadd.s32 %s173, 1
      %p177 = scmp.eq.s32.totalorder %s29, 7
      %p178 = scmp.ne.s32.totalorder %s173, %s175
      %p179 = scmp.eq.s32.totalorder %s29, 0
      %p180 = por %p178, %p179
      %p181 = scmp.ne.s32.totalorder %s173, %s175
      %p182 = scmp.eq.s32.totalorder %s34, 7
      %p183 = por %p181, %p182
      %p184 = scmp.ne.s32.totalorder %s175, %s176
      %p185 = scmp.eq.s32.totalorder %s34, 0
      %p186 = por %p184, %p185
      %p187 = scmp.ne.s32.totalorder %s175, %s176
      %p188 = scmp.eq.s32.totalorder %s35, 7
      %p189 = por %p187, %p188
      %p191 = scmp.ne.s32.totalorder %s176, %s190
      %p192 = scmp.eq.s32.totalorder %s35, 0
      %p193 = por %p191, %p192
      %s195 = sadd.s32 %s194, 1
      %p198 = scmp.eq.s32.totalorder %s29, 7
      %p199 = scmp.ne.s32.totalorder %s194, %s196
      %p200 = scmp.eq.s32.totalorder %s29, 0
      %p201 = por %p199, %p200
      %p202 = scmp.ne.s32.totalorder %s194, %s196
      %p203 = scmp.eq.s32.totalorder %s34, 7
      %p204 = por %p202, %p203
      %p205 = scmp.ne.s32.totalorder %s196, %s197
      %p206 = scmp.eq.s32.totalorder %s34, 0
      %p207 = por %p205, %p206
      %p208 = scmp.ne.s32.totalorder %s196, %s197
      %p209 = scmp.eq.s32.totalorder %s35, 7
      %p210 = por %p208, %p209
      %p212 = scmp.ne.s32.totalorder %s197, %s211
      %p213 = scmp.eq.s32.totalorder %s35, 0
      %p214 = por %p212, %p213
      %s216 = sadd.s32 %s215, 1
      %p219 = scmp.eq.s32.totalorder %s29, 7
      %p220 = scmp.ne.s32.totalorder %s215, %s217
      %p221 = scmp.eq.s32.totalorder %s29, 0
      %p222 = por %p220, %p221
      %p223 = scmp.ne.s32.totalorder %s215, %s217
      %p224 = scmp.eq.s32.totalorder %s34, 7
      %p225 = por %p223, %p224
      %p226 = scmp.ne.s32.totalorder %s217, %s218
      %p227 = scmp.eq.s32.totalorder %s34, 0
      %p228 = por %p226, %p227
      %p229 = scmp.ne.s32.totalorder %s217, %s218
      %p230 = scmp.eq.s32.totalorder %s35, 7
      %p231 = por %p229, %p230
      %p233 = scmp.ne.s32.totalorder %s218, %s232
      %p234 = scmp.eq.s32.totalorder %s35, 0
      %p235 = por %p233, %p234
      %s236 = ssub.s32 %s29, %s36
      %p237 = scmp.eq.s32.totalorder %s236, 0
      %s239 = sadd.s32 %s238, 1
      %s240 = scalar_select %p237, %s238, %s239
      %p243 = pneg %p237
      %p244 = scmp.eq.s32.totalorder %s29, 7
      %p245 = por %p243, %p244
      %p246 = scmp.ne.s32.totalorder %s238, %s241
      %p247 = scmp.eq.s32.totalorder %s29, 0
      %p248 = por %p246, %p247
      %p249 = scmp.ne.s32.totalorder %s238, %s241
      %p250 = scmp.eq.s32.totalorder %s34, 7
      %p251 = por %p249, %p250
      %p252 = scmp.ne.s32.totalorder %s241, %s242
      %p253 = scmp.eq.s32.totalorder %s34, 0
      %p254 = por %p252, %p253
      %p255 = scmp.ne.s32.totalorder %s241, %s242
      %p256 = scmp.eq.s32.totalorder %s35, 7
      %p257 = por %p255, %p256
      %p259 = scmp.ne.s32.totalorder %s242, %s258
      %p260 = scmp.eq.s32.totalorder %s35, 0
      %p261 = por %p259, %p260
      %s263 = sadd.s32 %s262, 1
      %p266 = scmp.eq.s32.totalorder %s29, 7
      %p267 = scmp.ne.s32.totalorder %s262, %s264
      %p268 = scmp.eq.s32.totalorder %s29, 0
      %p269 = por %p267, %p268
      %p270 = scmp.ne.s32.totalorder %s262, %s264
      %p271 = scmp.eq.s32.totalorder %s34, 7
      %p272 = por %p270, %p271
      %p273 = scmp.ne.s32.totalorder %s264, %s265
      %p274 = scmp.eq.s32.totalorder %s34, 0
      %p275 = por %p273, %p274
      %p276 = scmp.ne.s32.totalorder %s264, %s265
      %p277 = scmp.eq.s32.totalorder %s35, 7
      %p278 = por %p276, %p277
      %p280 = scmp.ne.s32.totalorder %s265, %s279
      %p281 = scmp.eq.s32.totalorder %s35, 0
      %p282 = por %p280, %p281
      %p283 = scmp.le.s32.totalorder 1, %s29
      %p284 = scmp.lt.s32.totalorder %s29, 9
      %p285 = pnand %p283, %p284
      %p286 = pneg %p285
      // Predicated region
      $region9: #{tpu_custom_call.1} parent=5 // pred_check
        _
      $region10: #{tpu_custom_call.1} parent=5 // pred_check_branch
        %288 = sbr.rel (%p285) target = $region12
      $region11: #{tpu_custom_call.1} parent=5 // pred_region
        %s289 = ssub.s32 %s29, 1
        // Predicated region
        $region13: #{tpu_custom_call.1} parent=11 // pred_check
          %p290 = pneg %p102
        $region14: #{tpu_custom_call.1} parent=11 // pred_check_branch
          %292 = sbr.rel (%p290) target = $region16
        $region15: #{tpu_custom_call.1} parent=11 // pred_region
          %s294 = ssub.s32 384, 384
          %295 = vsyncadd [#allocation7], %s294
          %s296 = sshll.u32 [#allocation8], 4
          %s297 = int_to_ptr.vmem [resolvable:$true] %s296
          %302 = dma.hbm_to_vmem [thread:$0]  %s2, 384, %s297, [#allocation7], 128, 128, 8
        $region16: #{tpu_custom_call.1} parent=11 // pred_fallthru
          _
        // Predicated region
        $region17: #{tpu_custom_call.1} parent=11 // pred_check
          %p303 = pneg %p123
        $region18: #{tpu_custom_call.1} parent=11 // pred_check_branch
          %305 = sbr.rel (%p303) target = $region20
        $region19: #{tpu_custom_call.1} parent=11 // pred_region
          %s307 = ssub.s32 16128, 16128
          %308 = vsyncadd [#allocation10], %s307
          %s309 = sshll.u32 [#allocation9], 4
          %s310 = int_to_ptr.vmem [resolvable:$true] %s309
          %315 = dma.hbm_to_vmem [thread:$0]  %s3, 16128, %s310, [#allocation10], 192, 192, 12
        $region20: #{tpu_custom_call.1} parent=11 // pred_fallthru
          _
        // Predicated region
        $region21: #{tpu_custom_call.1} parent=11 // pred_check
          %p316 = pneg %p144
        $region22: #{tpu_custom_call.1} parent=11 // pred_check_branch
          %318 = sbr.rel (%p316) target = $region24
        $region23: #{tpu_custom_call.1} parent=11 // pred_region
          %s320 = ssub.s32 384, 384
          %321 = vsyncadd [#allocation10], %s320
          %s323 = sshll.u32 [#allocation11], 4
          %s324 = int_to_ptr.vmem [resolvable:$true] %s323
          %326 = dma.hbm_to_vmem [thread:$0]  %s4, 384, %s324, [#allocation10]
        $region24: #{tpu_custom_call.1} parent=11 // pred_fallthru
          _
        // Predicated region
        $region25: #{tpu_custom_call.1} parent=11 // pred_check
          %p327 = pneg %p165
        $region26: #{tpu_custom_call.1} parent=11 // pred_check_branch
          %329 = sbr.rel (%p327) target = $region28
        $region27: #{tpu_custom_call.1} parent=11 // pred_region
          %s331 = ssub.s32 8192, 8192
          %332 = vsyncadd [#allocation13], %s331
          %s333 = sshll.u32 [#allocation12], 4
          %s334 = int_to_ptr.vmem [resolvable:$true] %s333
          %339 = dma.hbm_to_vmem [thread:$0]  %s5, 8192, %s334, [#allocation13], 256, 256, 16
        $region28: #{tpu_custom_call.1} parent=11 // pred_fallthru
          _
        // Predicated region
        $region29: #{tpu_custom_call.1} parent=11 // pred_check
          %p340 = pneg %p186
        $region30: #{tpu_custom_call.1} parent=11 // pred_check_branch
          %342 = sbr.rel (%p340) target = $region32
        $region31: #{tpu_custom_call.1} parent=11 // pred_region
          _
        $region32: #{tpu_custom_call.1} parent=11 // pred_fallthru
          _
        // Predicated region
        $region33: #{tpu_custom_call.1} parent=11 // pred_check
          %p343 = pneg %p207
        $region34: #{tpu_custom_call.1} parent=11 // pred_check_branch
          %345 = sbr.rel (%p343) target = $region36
        $region35: #{tpu_custom_call.1} parent=11 // pred_region
          %s347 = ssub.s32 4096, 4096
          %348 = vsyncadd [#allocation13], %s347
          %s349 = sshll.u32 [#allocation14], 4
          %s350 = int_to_ptr.vmem [resolvable:$true] %s349
          %355 = dma.hbm_to_vmem [thread:$0]  %s7, 4096, %s350, [#allocation13], 64, 64, 4
        $region36: #{tpu_custom_call.1} parent=11 // pred_fallthru
          _
        // Predicated region
        $region37: #{tpu_custom_call.1} parent=11 // pred_check
          %p356 = pneg %p228
        $region38: #{tpu_custom_call.1} parent=11 // pred_check_branch
          %358 = sbr.rel (%p356) target = $region40
        $region39: #{tpu_custom_call.1} parent=11 // pred_region
          _
        $region40: #{tpu_custom_call.1} parent=11 // pred_fallthru
          _
      $region12: #{tpu_custom_call.1} parent=5 // pred_fallthru
        _
      %p359 = scmp.lt.s32.totalorder %s29, 8
      // Predicated region
      $region41: #{tpu_custom_call.1} parent=5 // pred_check
        %p360 = pneg %p359
      $region42: #{tpu_custom_call.1} parent=5 // pred_check_branch
        %362 = sbr.rel (%p360) target = $region44
      $region43: #{tpu_custom_call.1} parent=5 // pred_region
        // Predicated region
        $region45: #{tpu_custom_call.1} parent=43 // pred_check
          %p363 = pneg %p49
        $region46: #{tpu_custom_call.1} parent=43 // pred_check_branch
          %365 = sbr.rel (%p363) target = $region48
        $region47: #{tpu_custom_call.1} parent=43 // pred_region
          %s366 = sand.u32 %s39, 1
          %s367 = scalar_lea.sflag [#allocation4], %s366
          %s368 = sand.u32 %s39, 1
          %s369 = smul.addr %s368, 8
          %s370 = scalar_lea.vmem [#allocation3], %s369
          %s372 = ssub.s32 128, 128
          %373 = vsyncadd %s367, %s372
          %s374 = smul.addr %s29, 128
          %s375 = scalar_lea.hbm %s0, %s374
          %s377 = sshll.u32 %s370, 4
          %s378 = int_to_ptr.vmem [resolvable:$true] %s377
          %380 = dma.hbm_to_vmem [thread:$0]  %s375, 128, %s378, %s367
        $region48: #{tpu_custom_call.1} parent=43 // pred_fallthru
          _
        // Predicated region
        $region49: #{tpu_custom_call.1} parent=43 // pred_check
          %p381 = pneg %p75
        $region50: #{tpu_custom_call.1} parent=43 // pred_check_branch
          %383 = sbr.rel (%p381) target = $region52
        $region51: #{tpu_custom_call.1} parent=43 // pred_region
          %s384 = sand.u32 %s29, 1
          %s385 = scalar_lea.sflag [#allocation7], %s384
          %s386 = sand.u32 %s65, 1
          %s387 = smul.addr %s386, 8
          %s388 = scalar_lea.vmem [#allocation6], %s387
          %s390 = ssub.s32 128, 128
          %391 = vsyncadd %s385, %s390
          %s392 = smul.addr %s29, 128
          %s393 = scalar_lea.hbm %s1, %s392
          %s395 = sshll.u32 %s388, 4
          %s396 = int_to_ptr.vmem [resolvable:$true] %s395
          %398 = dma.hbm_to_vmem [thread:$0]  %s393, 128, %s396, %s385
        $region52: #{tpu_custom_call.1} parent=43 // pred_fallthru
          _
      $region44: #{tpu_custom_call.1} parent=5 // pred_fallthru
        _
      %p399 = scmp.le.s32.totalorder 1, %s29
      %p400 = scmp.lt.s32.totalorder %s29, 9
      %p401 = pnand %p399, %p400
      %p402 = pneg %p401
      // Predicated region
      $region53: #{tpu_custom_call.1} parent=5 // pred_check
        _
      $region54: #{tpu_custom_call.1} parent=5 // pred_check_branch
        %404 = sbr.rel (%p401) target = $region56
      $region55: #{tpu_custom_call.1} parent=5 // pred_region
        %s405 = ssub.s32 %s29, 1
        %s406 = sand.u32 %s42, 1
        %s407 = scalar_lea.sflag [#allocation4], %s406
        %s408 = sand.u32 %s42, 1
        %s409 = smul.addr %s408, 8
        %s410 = scalar_lea.vmem [#allocation3], %s409
        // Predicated region
        $region57: #{tpu_custom_call.1} parent=55 // pred_check
          %p411 = pneg %p55
        $region58: #{tpu_custom_call.1} parent=55 // pred_check_branch
          %413 = sbr.rel (%p411) target = $region60
        $region59: #{tpu_custom_call.1} parent=55 // pred_region
          %414 = dma.done %s407, 128
        $region60: #{tpu_custom_call.1} parent=55 // pred_fallthru
          _
        %s415 = sand.u32 %s34, 1
        %s416 = scalar_lea.sflag [#allocation7], %s415
        %s417 = sand.u32 %s68, 1
        %s418 = smul.addr %s417, 8
        %s419 = scalar_lea.vmem [#allocation6], %s418
        // Predicated region
        $region61: #{tpu_custom_call.1} parent=55 // pred_check
          %p420 = pneg %p81
        $region62: #{tpu_custom_call.1} parent=55 // pred_check_branch
          %422 = sbr.rel (%p420) target = $region64
        $region63: #{tpu_custom_call.1} parent=55 // pred_region
          %423 = dma.done %s416, 128
        $region64: #{tpu_custom_call.1} parent=55 // pred_fallthru
          _
        // Predicated region
        $region65: #{tpu_custom_call.1} parent=55 // pred_check
          %p424 = pneg %p102
        $region66: #{tpu_custom_call.1} parent=55 // pred_check_branch
          %426 = sbr.rel (%p424) target = $region68
        $region67: #{tpu_custom_call.1} parent=55 // pred_region
          %427 = dma.done [#allocation7], 384
        $region68: #{tpu_custom_call.1} parent=55 // pred_fallthru
          _
        // Predicated region
        $region69: #{tpu_custom_call.1} parent=55 // pred_check
          %p428 = pneg %p123
        $region70: #{tpu_custom_call.1} parent=55 // pred_check_branch
          %430 = sbr.rel (%p428) target = $region72
        $region71: #{tpu_custom_call.1} parent=55 // pred_region
          %431 = dma.done [#allocation10], 16128
        $region72: #{tpu_custom_call.1} parent=55 // pred_fallthru
          _
        // Predicated region
        $region73: #{tpu_custom_call.1} parent=55 // pred_check
          %p432 = pneg %p144
        $region74: #{tpu_custom_call.1} parent=55 // pred_check_branch
          %434 = sbr.rel (%p432) target = $region76
        $region75: #{tpu_custom_call.1} parent=55 // pred_region
          %435 = dma.done [#allocation10], 384
        $region76: #{tpu_custom_call.1} parent=55 // pred_fallthru
          _
        // Predicated region
        $region77: #{tpu_custom_call.1} parent=55 // pred_check
          %p436 = pneg %p165
        $region78: #{tpu_custom_call.1} parent=55 // pred_check_branch
          %438 = sbr.rel (%p436) target = $region80
        $region79: #{tpu_custom_call.1} parent=55 // pred_region
          %439 = dma.done [#allocation13], 8192
        $region80: #{tpu_custom_call.1} parent=55 // pred_fallthru
          _
        // Predicated region
        $region81: #{tpu_custom_call.1} parent=55 // pred_check
          %p440 = pneg %p207
        $region82: #{tpu_custom_call.1} parent=55 // pred_check_branch
          %442 = sbr.rel (%p440) target = $region84
        $region83: #{tpu_custom_call.1} parent=55 // pred_region
          %443 = dma.done [#allocation13], 4096
        $region84: #{tpu_custom_call.1} parent=55 // pred_fallthru
          _
        %s444 = sand.u32 %s42, 1
        %s445 = scalar_lea.sflag [#allocation4], %s444
        %s446 = sand.u32 %s42, 1
        %s447 = smul.addr %s446, 8
        %s448 = scalar_lea.vmem [#allocation3], %s447
        %p449 = pneg %p55
        %p450 = pneg %p52
        %s451 = sand.u32 %s34, 1
        %s452 = scalar_lea.sflag [#allocation7], %s451
        %s453 = sand.u32 %s68, 1
        %s454 = smul.addr %s453, 8
        %s455 = scalar_lea.vmem [#allocation6], %s454
        %p456 = pneg %p81
        %p457 = pneg %p78
        %p458 = pneg %p102
        %p459 = pneg %p99
        %p460 = pneg %p123
        %p461 = pneg %p120
        %p462 = pneg %p144
        %p463 = pneg %p141
        %p464 = pneg %p165
        %p465 = pneg %p162
        %p466 = pneg %p186
        %p467 = pneg %p183
        %p468 = pneg %p207
        %p469 = pneg %p204
        %p470 = pneg %p228
        %p471 = pneg %p225
        %p472 = pneg %p254
        %p473 = pneg %p251
        %s474 = sand.u32 %s241, 1
        %s475 = scalar_lea.sflag [#allocation5], %s474
        %s476 = sand.u32 %s241, 1
        %s477 = smul.addr %s476, 8
        %s478 = scalar_lea.vmem [#allocation15], %s477
        %p479 = pneg %p275
        %p480 = pneg %p272
        %p482 = scmp.eq.s32.totalorder %s34, 0
        // Predicated region
        $region85: #{tpu_custom_call.1} parent=55 // pred_check
          %p483 = pneg %p482
        $region86: #{tpu_custom_call.1} parent=55 // pred_check_branch
          %485 = sbr.rel (%p483) target = $region88
        $region87: #{tpu_custom_call.1} parent=55 // pred_region
          %v486 = vld [vmem:[#allocation8] sm:$0xff]
          %v487 = vld [vmem:[#allocation8 + $0x8] sm:$0xff]
          %v488 = vld [vmem:[#allocation8 + $0x10] sm:$0xff]
          %489 = vst [vmem:[#allocation2] sm:$0xff] %v486
          %490 = vst [vmem:[#allocation2 + $0x8] sm:$0xff] %v487
          %491 = vst [vmem:[#allocation2 + $0x10] sm:$0xff] %v488
        $region88: #{tpu_custom_call.1} parent=55 // pred_fallthru
          _
        %v492 = vld [vmem:[#allocation11] sm:$0xff]
        %v493 = vld [vmem:[#allocation11 + $0x8] sm:$0xff]
        %v494 = vld [vmem:[#allocation11 + $0x10] sm:$0xff]
        %v495 = vld [vmem:[#allocation2] sm:$0xff]
        %v496 = vpack.c.bf16 %v495, %v495
        %v497 = vld [vmem:[#allocation9 + $0x1b0] sm:$0xff]
        %v498 = vld [vmem:[#allocation9 + $0x1b8] sm:$0xf]
        %v499 = vld [vmem:[#allocation9 + $0x1bc] sm:$0xff]
        %v500 = vld [vmem:[#allocation9 + $0x1c4] sm:$0xf]
        %v501 = vld [vmem:[#allocation9 + $0x1c8] sm:$0xff]
        %v502 = vld [vmem:[#allocation9 + $0x1d0] sm:$0xf]
        %v503 = vld [vmem:[#allocation9 + $0x1d4] sm:$0xff]
        %v504 = vld [vmem:[#allocation9 + $0x1dc] sm:$0xf]
        %v505 = vld [vmem:[#allocation9 + $0x1e0] sm:$0xff]
        %v506 = vld [vmem:[#allocation9 + $0x1e8] sm:$0xf]
        %v507 = vld [vmem:[#allocation9 + $0x1ec] sm:$0xff]
        %v508 = vld [vmem:[#allocation9 + $0x1f4] sm:$0xf]
        %v509 = vld [vmem:[#allocation9 + $0x1f8] sm:$0xff]
        %v510 = vld [vmem:[#allocation9 + $0x200] sm:$0xf]
        %v511 = vld [vmem:[#allocation9 + $0x204] sm:$0xff]
        %v512 = vld [vmem:[#allocation9 + $0x20c] sm:$0xf]
        %v513 = vld [vmem:[#allocation9 + $0x210] sm:$0xff]
        %v514 = vld [vmem:[#allocation9 + $0x218] sm:$0xf]
        %v515 = vld [vmem:[#allocation9 + $0x21c] sm:$0xff]
        %v516 = vld [vmem:[#allocation9 + $0x224] sm:$0xf]
        %v517 = vld [vmem:[#allocation9 + $0x228] sm:$0xff]
        %v518 = vld [vmem:[#allocation9 + $0x230] sm:$0xf]
        %v519 = vld [vmem:[#allocation9 + $0x234] sm:$0xff]
        %v520 = vld [vmem:[#allocation9 + $0x23c] sm:$0xf]
        %v521 = vld [vmem:[#allocation9 + $0x240] sm:$0xff]
        %v522 = vld [vmem:[#allocation9 + $0x248] sm:$0xf]
        %v523 = vld [vmem:[#allocation9 + $0x24c] sm:$0xff]
        %v524 = vld [vmem:[#allocation9 + $0x254] sm:$0xf]
        %v525 = vld [vmem:[#allocation9 + $0x258] sm:$0xff]
        %v526 = vld [vmem:[#allocation9 + $0x260] sm:$0xf]
        %v527 = vld [vmem:[#allocation9 + $0x264] sm:$0xff]
        %v528 = vld [vmem:[#allocation9 + $0x26c] sm:$0xf]
        %v561 = vunpack.c.l.b16 %v497
        %v562 = vunpack.c.h.b16 %v497
        %v563 = vunpack.c.l.b16 %v498
        %v564 = vunpack.c.l.b16 %v499
        %v565 = vunpack.c.h.b16 %v499
        %v566 = vunpack.c.l.b16 %v500
        %v567 = vunpack.c.l.b16 %v501
        %v568 = vunpack.c.h.b16 %v501
        %v569 = vunpack.c.l.b16 %v502
        %v570 = vunpack.c.l.b16 %v503
        %v571 = vunpack.c.h.b16 %v503
        %v572 = vunpack.c.l.b16 %v504
        %v573 = vunpack.c.l.b16 %v505
        %v574 = vunpack.c.h.b16 %v505
        %v575 = vunpack.c.l.b16 %v506
        %v576 = vunpack.c.l.b16 %v507
        %v577 = vunpack.c.h.b16 %v507
        %v578 = vunpack.c.l.b16 %v508
        %v579 = vunpack.c.l.b16 %v509
        %v580 = vunpack.c.h.b16 %v509
        %v581 = vunpack.c.l.b16 %v510
        %v582 = vunpack.c.l.b16 %v511
        %v583 = vunpack.c.h.b16 %v511
        %v584 = vunpack.c.l.b16 %v512
        %v585 = vunpack.c.l.b16 %v513
        %v586 = vunpack.c.h.b16 %v513
        %v587 = vunpack.c.l.b16 %v514
        %v588 = vunpack.c.l.b16 %v515
        %v589 = vunpack.c.h.b16 %v515
        %v590 = vunpack.c.l.b16 %v516
        %v591 = vunpack.c.l.b16 %v517
        %v592 = vunpack.c.h.b16 %v517
        %v593 = vunpack.c.l.b16 %v518
        %v594 = vunpack.c.l.b16 %v519
        %v595 = vunpack.c.h.b16 %v519
        %v596 = vunpack.c.l.b16 %v520
        %v597 = vunpack.c.l.b16 %v521
        %v598 = vunpack.c.h.b16 %v521
        %v599 = vunpack.c.l.b16 %v522
        %v600 = vunpack.c.l.b16 %v523
        %v601 = vunpack.c.h.b16 %v523
        %v602 = vunpack.c.l.b16 %v524
        %v603 = vunpack.c.l.b16 %v525
        %v604 = vunpack.c.h.b16 %v525
        %v605 = vunpack.c.l.b16 %v526
        %v606 = vunpack.c.l.b16 %v527
        %v607 = vunpack.c.h.b16 %v527
        %v608 = vunpack.c.l.b16 %v528
        %v609 = vpack.c.b16 %v564, %v561
        %v610 = vpack.c.b16 %v565, %v562
        %v611 = vpack.c.b16 %v566, %v563
        %v612 = vpack.c.b16 %v570, %v567
        %v613 = vpack.c.b16 %v571, %v568
        %v614 = vpack.c.b16 %v572, %v569
        %v615 = vpack.c.b16 %v576, %v573
        %v616 = vpack.c.b16 %v577, %v574
        %v617 = vpack.c.b16 %v578, %v575
        %v618 = vpack.c.b16 %v582, %v579
        %v619 = vpack.c.b16 %v583, %v580
        %v620 = vpack.c.b16 %v584, %v581
        %v621 = vpack.c.b16 %v588, %v585
        %v622 = vpack.c.b16 %v589, %v586
        %v623 = vpack.c.b16 %v590, %v587
        %v624 = vpack.c.b16 %v594, %v591
        %v625 = vpack.c.b16 %v595, %v592
        %v626 = vpack.c.b16 %v596, %v593
        %v627 = vpack.c.b16 %v600, %v597
        %v628 = vpack.c.b16 %v601, %v598
        %v629 = vpack.c.b16 %v602, %v599
        %v630 = vpack.c.b16 %v606, %v603
        %v631 = vpack.c.b16 %v607, %v604
        %v632 = vpack.c.b16 %v608, %v605
        %657 = vmatprep.subr.bf16.mxu0 %v631
        %658 = vmatpush1.bf16.msra.mxu0 %v630
        %659 = vmatprep.subr.bf16.mxu0 %v628
        %660 = vmatpush1.bf16.msra.mxu0 %v627
        %661 = vmatprep.subr.bf16.mxu0 %v625
        %662 = vmatpush1.bf16.msra.mxu0 %v624
        %663 = vmatprep.subr.bf16.mxu0 %v622
        %664 = vmatpush1.bf16.msra.mxu0 %v621
        %665 = vmatprep.subr.bf16.mxu0 %v619
        %666 = vmatpush1.bf16.msra.mxu0 %v618
        %667 = vmatprep.subr.bf16.mxu0 %v616
        %668 = vmatpush1.bf16.msra.mxu0 %v615
        %669 = vmatprep.subr.bf16.mxu0 %v613
        %670 = vmatpush1.bf16.msra.mxu0 %v612
        %671 = vmatprep.subr.bf16.mxu0 %v610
        %672 = vmatpush1.bf16.msra.mxu0 %v609
        %673 = vmatprep.subr.bf16.mxu0 0
        %674 = vmatpush2.bf16.msra.mxu0 0
        %675 = vmatprep.subr.bf16.mxu0 0
        %676 = vmatpush2.bf16.msra.mxu0 0
        %677 = vmatprep.subr.bf16.mxu0 0
        %678 = vmatpush2.bf16.msra.mxu0 0
        %679 = vmatprep.subr.bf16.mxu0 0
        %680 = vmatpush2.bf16.msra.mxu0 0
        %681 = vmatprep.subr.bf16.mxu0 0
        %682 = vmatpush2.bf16.msra.mxu0 0
        %683 = vmatprep.subr.bf16.mxu0 0
        %684 = vmatpush2.bf16.msra.mxu0 0
        %685 = vmatprep.subr.bf16.mxu0 0
        %686 = vmatpush2.bf16.msra.mxu0 0
        %687 = vmatprep.subr.bf16.mxu0 0
        %688 = vmatpush2.bf16.msra.mxu0 0
        %689 = vmatprep.mubr.bf16.mxu0 0
        %690 = vmatmul.mubr.bf16.gmra.mxu0 %v496
        %v691 = vpop.f32.mrf.mxu0
        %v692 = vadd.f32 0.0, %v691
        %v693 = vpop.f32.mrf.mxu0
        %v694 = vadd.f32 0.0, %v693
        %v695 = vpop.f32.mrf.mxu0
        %v696 = vpop.f32.mrf.mxu0
        %697 = vdwg.mxu0
        %698 = vmatprep.subr.bf16.mxu0 0
        %699 = vmatpush1.bf16.msra.mxu0 %v632
        %700 = vmatprep.subr.bf16.mxu0 0
        %701 = vmatpush1.bf16.msra.mxu0 %v629
        %702 = vmatprep.subr.bf16.mxu0 0
        %703 = vmatpush1.bf16.msra.mxu0 %v626
        %704 = vmatprep.subr.bf16.mxu0 0
        %705 = vmatpush1.bf16.msra.mxu0 %v623
        %706 = vmatprep.subr.bf16.mxu0 0
        %707 = vmatpush1.bf16.msra.mxu0 %v620
        %708 = vmatprep.subr.bf16.mxu0 0
        %709 = vmatpush1.bf16.msra.mxu0 %v617
        %710 = vmatprep.subr.bf16.mxu0 0
        %711 = vmatpush1.bf16.msra.mxu0 %v614
        %712 = vmatprep.subr.bf16.mxu0 0
        %713 = vmatpush1.bf16.msra.mxu0 %v611
        %714 = vmatprep.subr.bf16.mxu0 0
        %715 = vmatpush2.bf16.msra.mxu0 0
        %716 = vmatprep.subr.bf16.mxu0 0
        %717 = vmatpush2.bf16.msra.mxu0 0
        %718 = vmatprep.subr.bf16.mxu0 0
        %719 = vmatpush2.bf16.msra.mxu0 0
        %720 = vmatprep.subr.bf16.mxu0 0
        %721 = vmatpush2.bf16.msra.mxu0 0
        %722 = vmatprep.subr.bf16.mxu0 0
        %723 = vmatpush2.bf16.msra.mxu0 0
        %724 = vmatprep.subr.bf16.mxu0 0
        %725 = vmatpush2.bf16.msra.mxu0 0
        %726 = vmatprep.subr.bf16.mxu0 0
        %727 = vmatpush2.bf16.msra.mxu0 0
        %728 = vmatprep.subr.bf16.mxu0 0
        %729 = vmatpush2.bf16.msra.mxu0 0
        %730 = vmatprep.mubr.bf16.mxu0 0
        %731 = vmatmul.mubr.bf16.gmra.mxu0 %v496
        %v732 = vpop.f32.mrf.mxu0
        %v733 = vadd.f32 0.0, %v732
        %v734 = vpop.f32.mrf.mxu0
        %v735 = vpop.f32.mrf.mxu0
        %v736 = vpop.f32.mrf.mxu0
        %737 = vdwg.mxu0
        %s738 = scalar_lea.vmem [#allocation2], 8
        %v739 = vld [vmem:[%s738] sm:$0xff]
        %v740 = vpack.c.bf16 %v739, %v739
        %v741 = vld [vmem:[#allocation9 + $0x270] sm:$0xff]
        %v742 = vld [vmem:[#allocation9 + $0x278] sm:$0xf]
        %v743 = vld [vmem:[#allocation9 + $0x27c] sm:$0xff]
        %v744 = vld [vmem:[#allocation9 + $0x284] sm:$0xf]
        %v745 = vld [vmem:[#allocation9 + $0x288] sm:$0xff]
        %v746 = vld [vmem:[#allocation9 + $0x290] sm:$0xf]
        %v747 = vld [vmem:[#allocation9 + $0x294] sm:$0xff]
        %v748 = vld [vmem:[#allocation9 + $0x29c] sm:$0xf]
        %v749 = vld [vmem:[#allocation9 + $0x2a0] sm:$0xff]
        %v750 = vld [vmem:[#allocation9 + $0x2a8] sm:$0xf]
        %v751 = vld [vmem:[#allocation9 + $0x2ac] sm:$0xff]
        %v752 = vld [vmem:[#allocation9 + $0x2b4] sm:$0xf]
        %v753 = vld [vmem:[#allocation9 + $0x2b8] sm:$0xff]
        %v754 = vld [vmem:[#allocation9 + $0x2c0] sm:$0xf]
        %v755 = vld [vmem:[#allocation9 + $0x2c4] sm:$0xff]
        %v756 = vld [vmem:[#allocation9 + $0x2cc] sm:$0xf]
        %v757 = vld [vmem:[#allocation9 + $0x2d0] sm:$0xff]
        %v758 = vld [vmem:[#allocation9 + $0x2d8] sm:$0xf]
        %v759 = vld [vmem:[#allocation9 + $0x2dc] sm:$0xff]
        %v760 = vld [vmem:[#allocation9 + $0x2e4] sm:$0xf]
        %v761 = vld [vmem:[#allocation9 + $0x2e8] sm:$0xff]
        %v762 = vld [vmem:[#allocation9 + $0x2f0] sm:$0xf]
        %v763 = vld [vmem:[#allocation9 + $0x2f4] sm:$0xff]
        %v764 = vld [vmem:[#allocation9 + $0x2fc] sm:$0xf]
        %v765 = vld [vmem:[#allocation9 + $0x300] sm:$0xff]
        %v766 = vld [vmem:[#allocation9 + $0x308] sm:$0xf]
        %v767 = vld [vmem:[#allocation9 + $0x30c] sm:$0xff]
        %v768 = vld [vmem:[#allocation9 + $0x314] sm:$0xf]
        %v769 = vld [vmem:[#allocation9 + $0x318] sm:$0xff]
        %v770 = vld [vmem:[#allocation9 + $0x320] sm:$0xf]
        %v771 = vld [vmem:[#allocation9 + $0x324] sm:$0xff]
        %v772 = vld [vmem:[#allocation9 + $0x32c] sm:$0xf]
        %v805 = vunpack.c.l.b16 %v741
        %v806 = vunpack.c.h.b16 %v741
        %v807 = vunpack.c.l.b16 %v742
        %v808 = vunpack.c.l.b16 %v743
        %v809 = vunpack.c.h.b16 %v743
        %v810 = vunpack.c.l.b16 %v744
        %v811 = vunpack.c.l.b16 %v745
        %v812 = vunpack.c.h.b16 %v745
        %v813 = vunpack.c.l.b16 %v746
        %v814 = vunpack.c.l.b16 %v747
        %v815 = vunpack.c.h.b16 %v747
        %v816 = vunpack.c.l.b16 %v748
        %v817 = vunpack.c.l.b16 %v749
        %v818 = vunpack.c.h.b16 %v749
        %v819 = vunpack.c.l.b16 %v750
        %v820 = vunpack.c.l.b16 %v751
        %v821 = vunpack.c.h.b16 %v751
        %v822 = vunpack.c.l.b16 %v752
        %v823 = vunpack.c.l.b16 %v753
        %v824 = vunpack.c.h.b16 %v753
        %v825 = vunpack.c.l.b16 %v754
        %v826 = vunpack.c.l.b16 %v755
        %v827 = vunpack.c.h.b16 %v755
        %v828 = vunpack.c.l.b16 %v756
        %v829 = vunpack.c.l.b16 %v757
        %v830 = vunpack.c.h.b16 %v757
        %v831 = vunpack.c.l.b16 %v758
        %v832 = vunpack.c.l.b16 %v759
        %v833 = vunpack.c.h.b16 %v759
        %v834 = vunpack.c.l.b16 %v760
        %v835 = vunpack.c.l.b16 %v761
        %v836 = vunpack.c.h.b16 %v761
        %v837 = vunpack.c.l.b16 %v762
        %v838 = vunpack.c.l.b16 %v763
        %v839 = vunpack.c.h.b16 %v763
        %v840 = vunpack.c.l.b16 %v764
        %v841 = vunpack.c.l.b16 %v765
        %v842 = vunpack.c.h.b16 %v765
        %v843 = vunpack.c.l.b16 %v766
        %v844 = vunpack.c.l.b16 %v767
        %v845 = vunpack.c.h.b16 %v767
        %v846 = vunpack.c.l.b16 %v768
        %v847 = vunpack.c.l.b16 %v769
        %v848 = vunpack.c.h.b16 %v769
        %v849 = vunpack.c.l.b16 %v770
        %v850 = vunpack.c.l.b16 %v771
        %v851 = vunpack.c.h.b16 %v771
        %v852 = vunpack.c.l.b16 %v772
        %v853 = vpack.c.b16 %v808, %v805
        %v854 = vpack.c.b16 %v809, %v806
        %v855 = vpack.c.b16 %v810, %v807
        %v856 = vpack.c.b16 %v814, %v811
        %v857 = vpack.c.b16 %v815, %v812
        %v858 = vpack.c.b16 %v816, %v813
        %v859 = vpack.c.b16 %v820, %v817
        %v860 = vpack.c.b16 %v821, %v818
        %v861 = vpack.c.b16 %v822, %v819
        %v862 = vpack.c.b16 %v826, %v823
        %v863 = vpack.c.b16 %v827, %v824
        %v864 = vpack.c.b16 %v828, %v825
        %v865 = vpack.c.b16 %v832, %v829
        %v866 = vpack.c.b16 %v833, %v830
        %v867 = vpack.c.b16 %v834, %v831
        %v868 = vpack.c.b16 %v838, %v835
        %v869 = vpack.c.b16 %v839, %v836
        %v870 = vpack.c.b16 %v840, %v837
        %v871 = vpack.c.b16 %v844, %v841
        %v872 = vpack.c.b16 %v845, %v842
        %v873 = vpack.c.b16 %v846, %v843
        %v874 = vpack.c.b16 %v850, %v847
        %v875 = vpack.c.b16 %v851, %v848
        %v876 = vpack.c.b16 %v852, %v849
        %901 = vmatprep.subr.bf16.mxu0 %v875
        %902 = vmatpush1.bf16.msra.mxu0 %v874
        %903 = vmatprep.subr.bf16.mxu0 %v872
        %904 = vmatpush1.bf16.msra.mxu0 %v871
        %905 = vmatprep.subr.bf16.mxu0 %v869
        %906 = vmatpush1.bf16.msra.mxu0 %v868
        %907 = vmatprep.subr.bf16.mxu0 %v866
        %908 = vmatpush1.bf16.msra.mxu0 %v865
        %909 = vmatprep.subr.bf16.mxu0 %v863
        %910 = vmatpush1.bf16.msra.mxu0 %v862
        %911 = vmatprep.subr.bf16.mxu0 %v860
        %912 = vmatpush1.bf16.msra.mxu0 %v859
        %913 = vmatprep.subr.bf16.mxu0 %v857
        %914 = vmatpush1.bf16.msra.mxu0 %v856
        %915 = vmatprep.subr.bf16.mxu0 %v854
        %916 = vmatpush1.bf16.msra.mxu0 %v853
        %917 = vmatprep.subr.bf16.mxu0 0
        %918 = vmatpush2.bf16.msra.mxu0 0
        %919 = vmatprep.subr.bf16.mxu0 0
        %920 = vmatpush2.bf16.msra.mxu0 0
        %921 = vmatprep.subr.bf16.mxu0 0
        %922 = vmatpush2.bf16.msra.mxu0 0
        %923 = vmatprep.subr.bf16.mxu0 0
        %924 = vmatpush2.bf16.msra.mxu0 0
        %925 = vmatprep.subr.bf16.mxu0 0
        %926 = vmatpush2.bf16.msra.mxu0 0
        %927 = vmatprep.subr.bf16.mxu0 0
        %928 = vmatpush2.bf16.msra.mxu0 0
        %929 = vmatprep.subr.bf16.mxu0 0
        %930 = vmatpush2.bf16.msra.mxu0 0
        %931 = vmatprep.subr.bf16.mxu0 0
        %932 = vmatpush2.bf16.msra.mxu0 0
        %933 = vmatprep.mubr.bf16.mxu0 0
        %934 = vmatmul.mubr.bf16.gmra.mxu0 %v740
        %v935 = vpop.f32.mrf.mxu0
        %v936 = vadd.f32 0.0, %v935
        %v937 = vpop.f32.mrf.mxu0
        %v938 = vadd.f32 0.0, %v937
        %v939 = vpop.f32.mrf.mxu0
        %v940 = vpop.f32.mrf.mxu0
        %941 = vdwg.mxu0
        %942 = vmatprep.subr.bf16.mxu0 0
        %943 = vmatpush1.bf16.msra.mxu0 %v876
        %944 = vmatprep.subr.bf16.mxu0 0
        %945 = vmatpush1.bf16.msra.mxu0 %v873
        %946 = vmatprep.subr.bf16.mxu0 0
        %947 = vmatpush1.bf16.msra.mxu0 %v870
        %948 = vmatprep.subr.bf16.mxu0 0
        %949 = vmatpush1.bf16.msra.mxu0 %v867
        %950 = vmatprep.subr.bf16.mxu0 0
        %951 = vmatpush1.bf16.msra.mxu0 %v864
        %952 = vmatprep.subr.bf16.mxu0 0
        %953 = vmatpush1.bf16.msra.mxu0 %v861
        %954 = vmatprep.subr.bf16.mxu0 0
        %955 = vmatpush1.bf16.msra.mxu0 %v858
        %956 = vmatprep.subr.bf16.mxu0 0
        %957 = vmatpush1.bf16.msra.mxu0 %v855
        %958 = vmatprep.subr.bf16.mxu0 0
        %959 = vmatpush2.bf16.msra.mxu0 0
        %960 = vmatprep.subr.bf16.mxu0 0
        %961 = vmatpush2.bf16.msra.mxu0 0
        %962 = vmatprep.subr.bf16.mxu0 0
        %963 = vmatpush2.bf16.msra.mxu0 0
        %964 = vmatprep.subr.bf16.mxu0 0
        %965 = vmatpush2.bf16.msra.mxu0 0
        %966 = vmatprep.subr.bf16.mxu0 0
        %967 = vmatpush2.bf16.msra.mxu0 0
        %968 = vmatprep.subr.bf16.mxu0 0
        %969 = vmatpush2.bf16.msra.mxu0 0
        %970 = vmatprep.subr.bf16.mxu0 0
        %971 = vmatpush2.bf16.msra.mxu0 0
        %972 = vmatprep.subr.bf16.mxu0 0
        %973 = vmatpush2.bf16.msra.mxu0 0
        %974 = vmatprep.mubr.bf16.mxu0 0
        %975 = vmatmul.mubr.bf16.gmra.mxu0 %v740
        %v976 = vpop.f32.mrf.mxu0
        %v977 = vadd.f32 0.0, %v976
        %v978 = vpop.f32.mrf.mxu0
        %v979 = vpop.f32.mrf.mxu0
        %v980 = vpop.f32.mrf.mxu0
        %981 = vdwg.mxu0
        %s982 = scalar_lea.vmem [#allocation2], 16
        %v983 = vld [vmem:[%s982] sm:$0xff]
        %v984 = vpack.c.bf16 %v983, %v983
        %v985 = vld [vmem:[#allocation9 + $0x330] sm:$0xff]
        %v986 = vld [vmem:[#allocation9 + $0x338] sm:$0xf]
        %v987 = vld [vmem:[#allocation9 + $0x33c] sm:$0xff]
        %v988 = vld [vmem:[#allocation9 + $0x344] sm:$0xf]
        %v989 = vld [vmem:[#allocation9 + $0x348] sm:$0xff]
        %v990 = vld [vmem:[#allocation9 + $0x350] sm:$0xf]
        %v991 = vld [vmem:[#allocation9 + $0x354] sm:$0xff]
        %v992 = vld [vmem:[#allocation9 + $0x35c] sm:$0xf]
        %v993 = vld [vmem:[#allocation9 + $0x360] sm:$0xff]
        %v994 = vld [vmem:[#allocation9 + $0x368] sm:$0xf]
        %v995 = vld [vmem:[#allocation9 + $0x36c] sm:$0xff]
        %v996 = vld [vmem:[#allocation9 + $0x374] sm:$0xf]
        %v997 = vld [vmem:[#allocation9 + $0x378] sm:$0xff]
        %v998 = vld [vmem:[#allocation9 + $0x380] sm:$0xf]
        %v999 = vld [vmem:[#allocation9 + $0x384] sm:$0xff]
        %v1000 = vld [vmem:[#allocation9 + $0x38c] sm:$0xf]
        %v1001 = vld [vmem:[#allocation9 + $0x390] sm:$0xff]
        %v1002 = vld [vmem:[#allocation9 + $0x398] sm:$0xf]
        %v1003 = vld [vmem:[#allocation9 + $0x39c] sm:$0xff]
        %v1004 = vld [vmem:[#allocation9 + $0x3a4] sm:$0xf]
        %v1005 = vld [vmem:[#allocation9 + $0x3a8] sm:$0xff]
        %v1006 = vld [vmem:[#allocation9 + $0x3b0] sm:$0xf]
        %v1007 = vld [vmem:[#allocation9 + $0x3b4] sm:$0xff]
        %v1008 = vld [vmem:[#allocation9 + $0x3bc] sm:$0xf]
        %v1009 = vld [vmem:[#allocation9 + $0x3c0] sm:$0xff]
        %v1010 = vld [vmem:[#allocation9 + $0x3c8] sm:$0xf]
        %v1011 = vld [vmem:[#allocation9 + $0x3cc] sm:$0xff]
        %v1012 = vld [vmem:[#allocation9 + $0x3d4] sm:$0xf]
        %v1013 = vld [vmem:[#allocation9 + $0x3d8] sm:$0xff]
        %v1014 = vld [vmem:[#allocation9 + $0x3e0] sm:$0xf]
        %v1015 = vld [vmem:[#allocation9 + $0x3e4] sm:$0xff]
        %v1016 = vld [vmem:[#allocation9 + $0x3ec] sm:$0xf]
        %v1049 = vunpack.c.l.b16 %v985
        %v1050 = vunpack.c.h.b16 %v985
        %v1051 = vunpack.c.l.b16 %v986
        %v1052 = vunpack.c.l.b16 %v987
        %v1053 = vunpack.c.h.b16 %v987
        %v1054 = vunpack.c.l.b16 %v988
        %v1055 = vunpack.c.l.b16 %v989
        %v1056 = vunpack.c.h.b16 %v989
        %v1057 = vunpack.c.l.b16 %v990
        %v1058 = vunpack.c.l.b16 %v991
        %v1059 = vunpack.c.h.b16 %v991
        %v1060 = vunpack.c.l.b16 %v992
        %v1061 = vunpack.c.l.b16 %v993
        %v1062 = vunpack.c.h.b16 %v993
        %v1063 = vunpack.c.l.b16 %v994
        %v1064 = vunpack.c.l.b16 %v995
        %v1065 = vunpack.c.h.b16 %v995
        %v1066 = vunpack.c.l.b16 %v996
        %v1067 = vunpack.c.l.b16 %v997
        %v1068 = vunpack.c.h.b16 %v997
        %v1069 = vunpack.c.l.b16 %v998
        %v1070 = vunpack.c.l.b16 %v999
        %v1071 = vunpack.c.h.b16 %v999
        %v1072 = vunpack.c.l.b16 %v1000
        %v1073 = vunpack.c.l.b16 %v1001
        %v1074 = vunpack.c.h.b16 %v1001
        %v1075 = vunpack.c.l.b16 %v1002
        %v1076 = vunpack.c.l.b16 %v1003
        %v1077 = vunpack.c.h.b16 %v1003
        %v1078 = vunpack.c.l.b16 %v1004
        %v1079 = vunpack.c.l.b16 %v1005
        %v1080 = vunpack.c.h.b16 %v1005
        %v1081 = vunpack.c.l.b16 %v1006
        %v1082 = vunpack.c.l.b16 %v1007
        %v1083 = vunpack.c.h.b16 %v1007
        %v1084 = vunpack.c.l.b16 %v1008
        %v1085 = vunpack.c.l.b16 %v1009
        %v1086 = vunpack.c.h.b16 %v1009
        %v1087 = vunpack.c.l.b16 %v1010
        %v1088 = vunpack.c.l.b16 %v1011
        %v1089 = vunpack.c.h.b16 %v1011
        %v1090 = vunpack.c.l.b16 %v1012
        %v1091 = vunpack.c.l.b16 %v1013
        %v1092 = vunpack.c.h.b16 %v1013
        %v1093 = vunpack.c.l.b16 %v1014
        %v1094 = vunpack.c.l.b16 %v1015
        %v1095 = vunpack.c.h.b16 %v1015
        %v1096 = vunpack.c.l.b16 %v1016
        %v1097 = vpack.c.b16 %v1052, %v1049
        %v1098 = vpack.c.b16 %v1053, %v1050
        %v1099 = vpack.c.b16 %v1054, %v1051
        %v1100 = vpack.c.b16 %v1058, %v1055
        %v1101 = vpack.c.b16 %v1059, %v1056
        %v1102 = vpack.c.b16 %v1060, %v1057
        %v1103 = vpack.c.b16 %v1064, %v1061
        %v1104 = vpack.c.b16 %v1065, %v1062
        %v1105 = vpack.c.b16 %v1066, %v1063
        %v1106 = vpack.c.b16 %v1070, %v1067
        %v1107 = vpack.c.b16 %v1071, %v1068
        %v1108 = vpack.c.b16 %v1072, %v1069
        %v1109 = vpack.c.b16 %v1076, %v1073
        %v1110 = vpack.c.b16 %v1077, %v1074
        %v1111 = vpack.c.b16 %v1078, %v1075
        %v1112 = vpack.c.b16 %v1082, %v1079
        %v1113 = vpack.c.b16 %v1083, %v1080
        %v1114 = vpack.c.b16 %v1084, %v1081
        %v1115 = vpack.c.b16 %v1088, %v1085
        %v1116 = vpack.c.b16 %v1089, %v1086
        %v1117 = vpack.c.b16 %v1090, %v1087
        %v1118 = vpack.c.b16 %v1094, %v1091
        %v1119 = vpack.c.b16 %v1095, %v1092
        %v1120 = vpack.c.b16 %v1096, %v1093
        %1145 = vmatprep.subr.bf16.mxu0 %v1119
        %1146 = vmatpush1.bf16.msra.mxu0 %v1118
        %1147 = vmatprep.subr.bf16.mxu0 %v1116
        %1148 = vmatpush1.bf16.msra.mxu0 %v1115
        %1149 = vmatprep.subr.bf16.mxu0 %v1113
        %1150 = vmatpush1.bf16.msra.mxu0 %v1112
        %1151 = vmatprep.subr.bf16.mxu0 %v1110
        %1152 = vmatpush1.bf16.msra.mxu0 %v1109
        %1153 = vmatprep.subr.bf16.mxu0 %v1107
        %1154 = vmatpush1.bf16.msra.mxu0 %v1106
        %1155 = vmatprep.subr.bf16.mxu0 %v1104
        %1156 = vmatpush1.bf16.msra.mxu0 %v1103
        %1157 = vmatprep.subr.bf16.mxu0 %v1101
        %1158 = vmatpush1.bf16.msra.mxu0 %v1100
        %1159 = vmatprep.subr.bf16.mxu0 %v1098
        %1160 = vmatpush1.bf16.msra.mxu0 %v1097
        %1161 = vmatprep.subr.bf16.mxu0 0
        %1162 = vmatpush2.bf16.msra.mxu0 0
        %1163 = vmatprep.subr.bf16.mxu0 0
        %1164 = vmatpush2.bf16.msra.mxu0 0
        %1165 = vmatprep.subr.bf16.mxu0 0
        %1166 = vmatpush2.bf16.msra.mxu0 0
        %1167 = vmatprep.subr.bf16.mxu0 0
        %1168 = vmatpush2.bf16.msra.mxu0 0
        %1169 = vmatprep.subr.bf16.mxu0 0
        %1170 = vmatpush2.bf16.msra.mxu0 0
        %1171 = vmatprep.subr.bf16.mxu0 0
        %1172 = vmatpush2.bf16.msra.mxu0 0
        %1173 = vmatprep.subr.bf16.mxu0 0
        %1174 = vmatpush2.bf16.msra.mxu0 0
        %1175 = vmatprep.subr.bf16.mxu0 0
        %1176 = vmatpush2.bf16.msra.mxu0 0
        %1177 = vmatprep.mubr.bf16.mxu0 0
        %1178 = vmatmul.mubr.bf16.gmra.mxu0 %v984
        %v1179 = vpop.f32.mrf.mxu0
        %v1180 = vadd.f32 0.0, %v1179
        %v1181 = vpop.f32.mrf.mxu0
        %v1182 = vadd.f32 0.0, %v1181
        %v1183 = vpop.f32.mrf.mxu0
        %v1184 = vpop.f32.mrf.mxu0
        %1185 = vdwg.mxu0
        %1186 = vmatprep.subr.bf16.mxu0 0
        %1187 = vmatpush1.bf16.msra.mxu0 %v1120
        %1188 = vmatprep.subr.bf16.mxu0 0
        %1189 = vmatpush1.bf16.msra.mxu0 %v1117
        %1190 = vmatprep.subr.bf16.mxu0 0
        %1191 = vmatpush1.bf16.msra.mxu0 %v1114
        %1192 = vmatprep.subr.bf16.mxu0 0
        %1193 = vmatpush1.bf16.msra.mxu0 %v1111
        %1194 = vmatprep.subr.bf16.mxu0 0
        %1195 = vmatpush1.bf16.msra.mxu0 %v1108
        %1196 = vmatprep.subr.bf16.mxu0 0
        %1197 = vmatpush1.bf16.msra.mxu0 %v1105
        %1198 = vmatprep.subr.bf16.mxu0 0
        %1199 = vmatpush1.bf16.msra.mxu0 %v1102
        %1200 = vmatprep.subr.bf16.mxu0 0
        %1201 = vmatpush1.bf16.msra.mxu0 %v1099
        %1202 = vmatprep.subr.bf16.mxu0 0
        %1203 = vmatpush2.bf16.msra.mxu0 0
        %1204 = vmatprep.subr.bf16.mxu0 0
        %1205 = vmatpush2.bf16.msra.mxu0 0
        %1206 = vmatprep.subr.bf16.mxu0 0
        %1207 = vmatpush2.bf16.msra.mxu0 0
        %1208 = vmatprep.subr.bf16.mxu0 0
        %1209 = vmatpush2.bf16.msra.mxu0 0
        %1210 = vmatprep.subr.bf16.mxu0 0
        %1211 = vmatpush2.bf16.msra.mxu0 0
        %1212 = vmatprep.subr.bf16.mxu0 0
        %1213 = vmatpush2.bf16.msra.mxu0 0
        %1214 = vmatprep.subr.bf16.mxu0 0
        %1215 = vmatpush2.bf16.msra.mxu0 0
        %1216 = vmatprep.subr.bf16.mxu0 0
        %1217 = vmatpush2.bf16.msra.mxu0 0
        %1218 = vmatprep.mubr.bf16.mxu0 0
        %1219 = vmatmul.mubr.bf16.gmra.mxu0 %v984
        %v1220 = vpop.f32.mrf.mxu0
        %v1221 = vadd.f32 0.0, %v1220
        %v1222 = vpop.f32.mrf.mxu0
        %v1223 = vpop.f32.mrf.mxu0
        %v1224 = vpop.f32.mrf.mxu0
        %1225 = vdwg.mxu0
        %v1226 = vld [vmem:[%s410] sm:$0xff]
        %v1227 = vpack.c.bf16 %v1226, %v1226
        %v1228 = vld [vmem:[#allocation9] sm:$0xff]
        %v1229 = vld [vmem:[#allocation9 + $0x8] sm:$0xf]
        %v1230 = vld [vmem:[#allocation9 + $0xc] sm:$0xff]
        %v1231 = vld [vmem:[#allocation9 + $0x14] sm:$0xf]
        %v1232 = vld [vmem:[#allocation9 + $0x18] sm:$0xff]
        %v1233 = vld [vmem:[#allocation9 + $0x20] sm:$0xf]
        %v1234 = vld [vmem:[#allocation9 + $0x24] sm:$0xff]
        %v1235 = vld [vmem:[#allocation9 + $0x2c] sm:$0xf]
        %v1236 = vlaneseq
        %v1237 = vshrl.u32 %v1236, 7
        %v1238 = vsub.s32 0, %v1237
        %v1239 = vrot.slane %v492, %v1238
        %v1240 = vlaneseq
        %v1241 = vshrl.u32 %v1240, 7
        %v1242 = vsub.s32 0, %v1241
        %v1243 = vrot.slane %v493, %v1242
        %v1244 = vlaneseq
        %v1245 = vshrl.u32 %v1244, 7
        %v1246 = vsub.s32 0, %v1245
        %v1247 = vrot.slane %v494, %v1246
        %v1256 = vunpack.c.l.b16 %v1228
        %v1257 = vunpack.c.h.b16 %v1228
        %v1258 = vunpack.c.l.b16 %v1229
        %v1259 = vunpack.c.l.b16 %v1230
        %v1260 = vunpack.c.h.b16 %v1230
        %v1261 = vunpack.c.l.b16 %v1231
        %v1262 = vunpack.c.l.b16 %v1232
        %v1263 = vunpack.c.h.b16 %v1232
        %v1264 = vunpack.c.l.b16 %v1233
        %v1265 = vunpack.c.l.b16 %v1234
        %v1266 = vunpack.c.h.b16 %v1234
        %v1267 = vunpack.c.l.b16 %v1235
        %v1268 = vpack.c.b16 %v1259, %v1256
        %v1269 = vpack.c.b16 %v1260, %v1257
        %v1270 = vpack.c.b16 %v1261, %v1258
        %v1271 = vpack.c.b16 %v1265, %v1262
        %v1272 = vpack.c.b16 %v1266, %v1263
        %v1273 = vpack.c.b16 %v1267, %v1264
        %vm1280 = vcmask 261120
        %v1282 = vsel %vm1280, %v1227, 0
        %1284 = vmatprep.subr.bf16.mxu0 0
        %1285 = vmatpush1.bf16.msra.mxu0 0
        %1286 = vmatprep.subr.bf16.mxu0 0
        %1287 = vmatpush1.bf16.msra.mxu0 0
        %1288 = vmatprep.subr.bf16.mxu0 0
        %1289 = vmatpush1.bf16.msra.mxu0 0
        %1290 = vmatprep.subr.bf16.mxu0 0
        %1291 = vmatpush1.bf16.msra.mxu0 0
        %1292 = vmatprep.subr.bf16.mxu0 0
        %1293 = vmatpush1.bf16.msra.mxu0 0
        %1294 = vmatprep.subr.bf16.mxu0 0
        %1295 = vmatpush1.bf16.msra.mxu0 0
        %1296 = vmatprep.subr.bf16.mxu0 %v1272
        %1297 = vmatpush1.bf16.msra.mxu0 %v1271
        %1298 = vmatprep.subr.bf16.mxu0 %v1269
        %1299 = vmatpush1.bf16.msra.mxu0 %v1268
        %1300 = vmatprep.subr.bf16.mxu0 0
        %1301 = vmatpush2.bf16.msra.mxu0 0
        %1302 = vmatprep.subr.bf16.mxu0 0
        %1303 = vmatpush2.bf16.msra.mxu0 0
        %1304 = vmatprep.subr.bf16.mxu0 0
        %1305 = vmatpush2.bf16.msra.mxu0 0
        %1306 = vmatprep.subr.bf16.mxu0 0
        %1307 = vmatpush2.bf16.msra.mxu0 0
        %1308 = vmatprep.subr.bf16.mxu0 0
        %1309 = vmatpush2.bf16.msra.mxu0 0
        %1310 = vmatprep.subr.bf16.mxu0 0
        %1311 = vmatpush2.bf16.msra.mxu0 0
        %1312 = vmatprep.subr.bf16.mxu0 0
        %1313 = vmatpush2.bf16.msra.mxu0 0
        %1314 = vmatprep.subr.bf16.mxu0 0
        %1315 = vmatpush2.bf16.msra.mxu0 0
        %1316 = vmatprep.mubr.bf16.mxu0 0
        %1317 = vmatmul.mubr.bf16.gmra.mxu0 %v1282
        %v1318 = vpop.f32.mrf.mxu0
        %v1319 = vadd.f32 %v1239, %v1318
        %v1320 = vpop.f32.mrf.mxu0
        %v1321 = vadd.f32 %v1243, %v1320
        %v1322 = vpop.f32.mrf.mxu0
        %v1323 = vpop.f32.mrf.mxu0
        %1324 = vdwg.mxu0
        %1325 = vmatprep.subr.bf16.mxu0 0
        %1326 = vmatpush1.bf16.msra.mxu0 0
        %1327 = vmatprep.subr.bf16.mxu0 0
        %1328 = vmatpush1.bf16.msra.mxu0 0
        %1329 = vmatprep.subr.bf16.mxu0 0
        %1330 = vmatpush1.bf16.msra.mxu0 0
        %1331 = vmatprep.subr.bf16.mxu0 0
        %1332 = vmatpush1.bf16.msra.mxu0 0
        %1333 = vmatprep.subr.bf16.mxu0 0
        %1334 = vmatpush1.bf16.msra.mxu0 0
        %1335 = vmatprep.subr.bf16.mxu0 0
        %1336 = vmatpush1.bf16.msra.mxu0 0
        %1337 = vmatprep.subr.bf16.mxu0 0
        %1338 = vmatpush1.bf16.msra.mxu0 %v1273
        %1339 = vmatprep.subr.bf16.mxu0 0
        %1340 = vmatpush1.bf16.msra.mxu0 %v1270
        %1341 = vmatprep.subr.bf16.mxu0 0
        %1342 = vmatpush2.bf16.msra.mxu0 0
        %1343 = vmatprep.subr.bf16.mxu0 0
        %1344 = vmatpush2.bf16.msra.mxu0 0
        %1345 = vmatprep.subr.bf16.mxu0 0
        %1346 = vmatpush2.bf16.msra.mxu0 0
        %1347 = vmatprep.subr.bf16.mxu0 0
        %1348 = vmatpush2.bf16.msra.mxu0 0
        %1349 = vmatprep.subr.bf16.mxu0 0
        %1350 = vmatpush2.bf16.msra.mxu0 0
        %1351 = vmatprep.subr.bf16.mxu0 0
        %1352 = vmatpush2.bf16.msra.mxu0 0
        %1353 = vmatprep.subr.bf16.mxu0 0
        %1354 = vmatpush2.bf16.msra.mxu0 0
        %1355 = vmatprep.subr.bf16.mxu0 0
        %1356 = vmatpush2.bf16.msra.mxu0 0
        %1357 = vmatprep.mubr.bf16.mxu0 0
        %1358 = vmatmul.mubr.bf16.gmra.mxu0 %v1282
        %v1359 = vpop.f32.mrf.mxu0
        %v1360 = vadd.f32 %v1247, %v1359
        %v1361 = vpop.f32.mrf.mxu0
        %v1362 = vpop.f32.mrf.mxu0
        %v1363 = vpop.f32.mrf.mxu0
        %1364 = vdwg.mxu0
        %v1365 = vadd.f32 %v1319, %v692
        %v1366 = vadd.f32 %v1321, %v694
        %v1367 = vxor.u32 %v1365, 2147483648
        %v1368 = vxor.u32 %v1366, 2147483648
        %v1369 = vmul.f32 %v1367, 1.442695
        %v1370 = vpow.pop %v1369
        %v1371 = vmul.f32 %v1368, 1.442695
        %v1372 = vpow.pop %v1371
        %v1373 = vadd.f32 %v1370, 1.0
        %v1374 = vadd.f32 %v1372, 1.0
        %v1375 = vrcp.pop %v1373
        %v1376 = vmul.f32 1.0, %v1375
        %v1377 = vrcp.pop %v1374
        %v1378 = vmul.f32 1.0, %v1377
        %v1379 = vlaneseq
        %v1380 = vshrl.u32 %v1379, 7
        %v1381 = vsub.s32 3, %v1380
        %v1382 = vrot.slane %v492, %v1381
        %v1383 = vadd.f32 %v733, %v1382
        %v1384 = vmul.f32 %v1376, %v1383
        %v1385 = vadd.f32 %v1360, %v1384
        %v1386 = vtanh.pop %v1385
        %v1387 = vsub.f32 1.0, %v1378
        %v1388 = vmul.f32 %v1387, %v1386
        %v1389 = vmul.f32 %v1378, %v495
        %v1390 = vadd.f32 %v1388, %v1389
        %v1391 = vpack.c.bf16 %v1390, %v1390
        %v1392 = vld [vmem:[#allocation9 + $0x30] sm:$0xff]
        %v1393 = vld [vmem:[#allocation9 + $0x38] sm:$0xf]
        %v1394 = vld [vmem:[#allocation9 + $0x3c] sm:$0xff]
        %v1395 = vld [vmem:[#allocation9 + $0x44] sm:$0xf]
        %v1396 = vld [vmem:[#allocation9 + $0x48] sm:$0xff]
        %v1397 = vld [vmem:[#allocation9 + $0x50] sm:$0xf]
        %v1398 = vld [vmem:[#allocation9 + $0x54] sm:$0xff]
        %v1399 = vld [vmem:[#allocation9 + $0x5c] sm:$0xf]
        %v1400 = vld [vmem:[#allocation9 + $0x60] sm:$0xff]
        %v1401 = vld [vmem:[#allocation9 + $0x68] sm:$0xf]
        %v1402 = vld [vmem:[#allocation9 + $0x6c] sm:$0xff]
        %v1403 = vld [vmem:[#allocation9 + $0x74] sm:$0xf]
        %v1404 = vld [vmem:[#allocation9 + $0x78] sm:$0xff]
        %v1405 = vld [vmem:[#allocation9 + $0x80] sm:$0xf]
        %v1406 = vld [vmem:[#allocation9 + $0x84] sm:$0xff]
        %v1407 = vld [vmem:[#allocation9 + $0x8c] sm:$0xf]
        %v1408 = vld [vmem:[#allocation9 + $0x90] sm:$0xff]
        %v1409 = vld [vmem:[#allocation9 + $0x98] sm:$0xf]
        %v1410 = vld [vmem:[#allocation9 + $0x9c] sm:$0xff]
        %v1411 = vld [vmem:[#allocation9 + $0xa4] sm:$0xf]
        %v1412 = vld [vmem:[#allocation9 + $0xa8] sm:$0xff]
        %v1413 = vld [vmem:[#allocation9 + $0xb0] sm:$0xf]
        %v1414 = vld [vmem:[#allocation9 + $0xb4] sm:$0xff]
        %v1415 = vld [vmem:[#allocation9 + $0xbc] sm:$0xf]
        %v1416 = vld [vmem:[#allocation9 + $0xc0] sm:$0xff]
        %v1417 = vld [vmem:[#allocation9 + $0xc8] sm:$0xf]
        %v1418 = vld [vmem:[#allocation9 + $0xcc] sm:$0xff]
        %v1419 = vld [vmem:[#allocation9 + $0xd4] sm:$0xf]
        %v1420 = vld [vmem:[#allocation9 + $0xd8] sm:$0xff]
        %v1421 = vld [vmem:[#allocation9 + $0xe0] sm:$0xf]
        %v1422 = vld [vmem:[#allocation9 + $0xe4] sm:$0xff]
        %v1423 = vld [vmem:[#allocation9 + $0xec] sm:$0xf]
        %v1424 = vlaneseq
        %v1425 = vshrl.u32 %v1424, 7
        %v1426 = vsub.s32 1, %v1425
        %v1427 = vrot.slane %v492, %v1426
        %v1428 = vlaneseq
        %v1429 = vshrl.u32 %v1428, 7
        %v1430 = vsub.s32 1, %v1429
        %v1431 = vrot.slane %v493, %v1430
        %v1432 = vlaneseq
        %v1433 = vshrl.u32 %v1432, 7
        %v1434 = vsub.s32 1, %v1433
        %v1435 = vrot.slane %v494, %v1434
        %v1468 = vunpack.c.l.b16 %v1392
        %v1469 = vunpack.c.h.b16 %v1392
        %v1470 = vunpack.c.l.b16 %v1393
        %v1471 = vunpack.c.l.b16 %v1394
        %v1472 = vunpack.c.h.b16 %v1394
        %v1473 = vunpack.c.l.b16 %v1395
        %v1474 = vunpack.c.l.b16 %v1396
        %v1475 = vunpack.c.h.b16 %v1396
        %v1476 = vunpack.c.l.b16 %v1397
        %v1477 = vunpack.c.l.b16 %v1398
        %v1478 = vunpack.c.h.b16 %v1398
        %v1479 = vunpack.c.l.b16 %v1399
        %v1480 = vunpack.c.l.b16 %v1400
        %v1481 = vunpack.c.h.b16 %v1400
        %v1482 = vunpack.c.l.b16 %v1401
        %v1483 = vunpack.c.l.b16 %v1402
        %v1484 = vunpack.c.h.b16 %v1402
        %v1485 = vunpack.c.l.b16 %v1403
        %v1486 = vunpack.c.l.b16 %v1404
        %v1487 = vunpack.c.h.b16 %v1404
        %v1488 = vunpack.c.l.b16 %v1405
        %v1489 = vunpack.c.l.b16 %v1406
        %v1490 = vunpack.c.h.b16 %v1406
        %v1491 = vunpack.c.l.b16 %v1407
        %v1492 = vunpack.c.l.b16 %v1408
        %v1493 = vunpack.c.h.b16 %v1408
        %v1494 = vunpack.c.l.b16 %v1409
        %v1495 = vunpack.c.l.b16 %v1410
        %v1496 = vunpack.c.h.b16 %v1410
        %v1497 = vunpack.c.l.b16 %v1411
        %v1498 = vunpack.c.l.b16 %v1412
        %v1499 = vunpack.c.h.b16 %v1412
        %v1500 = vunpack.c.l.b16 %v1413
        %v1501 = vunpack.c.l.b16 %v1414
        %v1502 = vunpack.c.h.b16 %v1414
        %v1503 = vunpack.c.l.b16 %v1415
        %v1504 = vunpack.c.l.b16 %v1416
        %v1505 = vunpack.c.h.b16 %v1416
        %v1506 = vunpack.c.l.b16 %v1417
        %v1507 = vunpack.c.l.b16 %v1418
        %v1508 = vunpack.c.h.b16 %v1418
        %v1509 = vunpack.c.l.b16 %v1419
        %v1510 = vunpack.c.l.b16 %v1420
        %v1511 = vunpack.c.h.b16 %v1420
        %v1512 = vunpack.c.l.b16 %v1421
        %v1513 = vunpack.c.l.b16 %v1422
        %v1514 = vunpack.c.h.b16 %v1422
        %v1515 = vunpack.c.l.b16 %v1423
        %v1516 = vpack.c.b16 %v1471, %v1468
        %v1517 = vpack.c.b16 %v1472, %v1469
        %v1518 = vpack.c.b16 %v1473, %v1470
        %v1519 = vpack.c.b16 %v1477, %v1474
        %v1520 = vpack.c.b16 %v1478, %v1475
        %v1521 = vpack.c.b16 %v1479, %v1476
        %v1522 = vpack.c.b16 %v1483, %v1480
        %v1523 = vpack.c.b16 %v1484, %v1481
        %v1524 = vpack.c.b16 %v1485, %v1482
        %v1525 = vpack.c.b16 %v1489, %v1486
        %v1526 = vpack.c.b16 %v1490, %v1487
        %v1527 = vpack.c.b16 %v1491, %v1488
        %v1528 = vpack.c.b16 %v1495, %v1492
        %v1529 = vpack.c.b16 %v1496, %v1493
        %v1530 = vpack.c.b16 %v1497, %v1494
        %v1531 = vpack.c.b16 %v1501, %v1498
        %v1532 = vpack.c.b16 %v1502, %v1499
        %v1533 = vpack.c.b16 %v1503, %v1500
        %v1534 = vpack.c.b16 %v1507, %v1504
        %v1535 = vpack.c.b16 %v1508, %v1505
        %v1536 = vpack.c.b16 %v1509, %v1506
        %v1537 = vpack.c.b16 %v1513, %v1510
        %v1538 = vpack.c.b16 %v1514, %v1511
        %v1539 = vpack.c.b16 %v1515, %v1512
        %1564 = vmatprep.subr.bf16.mxu0 %v1538
        %1565 = vmatpush1.bf16.msra.mxu0 %v1537
        %1566 = vmatprep.subr.bf16.mxu0 %v1535
        %1567 = vmatpush1.bf16.msra.mxu0 %v1534
        %1568 = vmatprep.subr.bf16.mxu0 %v1532
        %1569 = vmatpush1.bf16.msra.mxu0 %v1531
        %1570 = vmatprep.subr.bf16.mxu0 %v1529
        %1571 = vmatpush1.bf16.msra.mxu0 %v1528
        %1572 = vmatprep.subr.bf16.mxu0 %v1526
        %1573 = vmatpush1.bf16.msra.mxu0 %v1525
        %1574 = vmatprep.subr.bf16.mxu0 %v1523
        %1575 = vmatpush1.bf16.msra.mxu0 %v1522
        %1576 = vmatprep.subr.bf16.mxu0 %v1520
        %1577 = vmatpush1.bf16.msra.mxu0 %v1519
        %1578 = vmatprep.subr.bf16.mxu0 %v1517
        %1579 = vmatpush1.bf16.msra.mxu0 %v1516
        %1580 = vmatprep.subr.bf16.mxu0 0
        %1581 = vmatpush2.bf16.msra.mxu0 0
        %1582 = vmatprep.subr.bf16.mxu0 0
        %1583 = vmatpush2.bf16.msra.mxu0 0
        %1584 = vmatprep.subr.bf16.mxu0 0
        %1585 = vmatpush2.bf16.msra.mxu0 0
        %1586 = vmatprep.subr.bf16.mxu0 0
        %1587 = vmatpush2.bf16.msra.mxu0 0
        %1588 = vmatprep.subr.bf16.mxu0 0
        %1589 = vmatpush2.bf16.msra.mxu0 0
        %1590 = vmatprep.subr.bf16.mxu0 0
        %1591 = vmatpush2.bf16.msra.mxu0 0
        %1592 = vmatprep.subr.bf16.mxu0 0
        %1593 = vmatpush2.bf16.msra.mxu0 0
        %1594 = vmatprep.subr.bf16.mxu0 0
        %1595 = vmatpush2.bf16.msra.mxu0 0
        %1596 = vmatprep.mubr.bf16.mxu0 0
        %1597 = vmatmul.mubr.bf16.gmra.mxu0 %v1391
        %v1598 = vpop.f32.mrf.mxu0
        %v1599 = vadd.f32 %v1427, %v1598
        %v1600 = vpop.f32.mrf.mxu0
        %v1601 = vadd.f32 %v1431, %v1600
        %v1602 = vpop.f32.mrf.mxu0
        %v1603 = vpop.f32.mrf.mxu0
        %1604 = vdwg.mxu0
        %1605 = vmatprep.subr.bf16.mxu0 0
        %1606 = vmatpush1.bf16.msra.mxu0 %v1539
        %1607 = vmatprep.subr.bf16.mxu0 0
        %1608 = vmatpush1.bf16.msra.mxu0 %v1536
        %1609 = vmatprep.subr.bf16.mxu0 0
        %1610 = vmatpush1.bf16.msra.mxu0 %v1533
        %1611 = vmatprep.subr.bf16.mxu0 0
        %1612 = vmatpush1.bf16.msra.mxu0 %v1530
        %1613 = vmatprep.subr.bf16.mxu0 0
        %1614 = vmatpush1.bf16.msra.mxu0 %v1527
        %1615 = vmatprep.subr.bf16.mxu0 0
        %1616 = vmatpush1.bf16.msra.mxu0 %v1524
        %1617 = vmatprep.subr.bf16.mxu0 0
        %1618 = vmatpush1.bf16.msra.mxu0 %v1521
        %1619 = vmatprep.subr.bf16.mxu0 0
        %1620 = vmatpush1.bf16.msra.mxu0 %v1518
        %1621 = vmatprep.subr.bf16.mxu0 0
        %1622 = vmatpush2.bf16.msra.mxu0 0
        %1623 = vmatprep.subr.bf16.mxu0 0
        %1624 = vmatpush2.bf16.msra.mxu0 0
        %1625 = vmatprep.subr.bf16.mxu0 0
        %1626 = vmatpush2.bf16.msra.mxu0 0
        %1627 = vmatprep.subr.bf16.mxu0 0
        %1628 = vmatpush2.bf16.msra.mxu0 0
        %1629 = vmatprep.subr.bf16.mxu0 0
        %1630 = vmatpush2.bf16.msra.mxu0 0
        %1631 = vmatprep.subr.bf16.mxu0 0
        %1632 = vmatpush2.bf16.msra.mxu0 0
        %1633 = vmatprep.subr.bf16.mxu0 0
        %1634 = vmatpush2.bf16.msra.mxu0 0
        %1635 = vmatprep.subr.bf16.mxu0 0
        %1636 = vmatpush2.bf16.msra.mxu0 0
        %1637 = vmatprep.mubr.bf16.mxu0 0
        %1638 = vmatmul.mubr.bf16.gmra.mxu0 %v1391
        %v1639 = vpop.f32.mrf.mxu0
        %v1640 = vadd.f32 %v1435, %v1639
        %v1641 = vpop.f32.mrf.mxu0
        %v1642 = vpop.f32.mrf.mxu0
        %v1643 = vpop.f32.mrf.mxu0
        %1644 = vdwg.mxu0
        %v1645 = vadd.f32 %v1599, %v936
        %v1646 = vadd.f32 %v1601, %v938
        %v1647 = vxor.u32 %v1645, 2147483648
        %v1648 = vxor.u32 %v1646, 2147483648
        %v1649 = vmul.f32 %v1647, 1.442695
        %v1650 = vpow.pop %v1649
        %v1651 = vmul.f32 %v1648, 1.442695
        %v1652 = vpow.pop %v1651
        %v1653 = vadd.f32 %v1650, 1.0
        %v1654 = vadd.f32 %v1652, 1.0
        %v1655 = vrcp.pop %v1653
        %v1656 = vmul.f32 1.0, %v1655
        %v1657 = vrcp.pop %v1654
        %v1658 = vmul.f32 1.0, %v1657
        %v1659 = vlaneseq
        %v1660 = vshrl.u32 %v1659, 7
        %v1661 = vsub.s32 4, %v1660
        %v1662 = vrot.slane %v492, %v1661
        %v1663 = vadd.f32 %v977, %v1662
        %v1664 = vmul.f32 %v1656, %v1663
        %v1665 = vadd.f32 %v1640, %v1664
        %v1666 = vtanh.pop %v1665
        %v1667 = vsub.f32 1.0, %v1658
        %v1668 = vmul.f32 %v1667, %v1666
        %v1669 = vmul.f32 %v1658, %v739
        %v1670 = vadd.f32 %v1668, %v1669
        %v1671 = vpack.c.bf16 %v1670, %v1670
        %v1672 = vld [vmem:[#allocation9 + $0xf0] sm:$0xff]
        %v1673 = vld [vmem:[#allocation9 + $0xf8] sm:$0xf]
        %v1674 = vld [vmem:[#allocation9 + $0xfc] sm:$0xff]
        %v1675 = vld [vmem:[#allocation9 + $0x104] sm:$0xf]
        %v1676 = vld [vmem:[#allocation9 + $0x108] sm:$0xff]
        %v1677 = vld [vmem:[#allocation9 + $0x110] sm:$0xf]
        %v1678 = vld [vmem:[#allocation9 + $0x114] sm:$0xff]
        %v1679 = vld [vmem:[#allocation9 + $0x11c] sm:$0xf]
        %v1680 = vld [vmem:[#allocation9 + $0x120] sm:$0xff]
        %v1681 = vld [vmem:[#allocation9 + $0x128] sm:$0xf]
        %v1682 = vld [vmem:[#allocation9 + $0x12c] sm:$0xff]
        %v1683 = vld [vmem:[#allocation9 + $0x134] sm:$0xf]
        %v1684 = vld [vmem:[#allocation9 + $0x138] sm:$0xff]
        %v1685 = vld [vmem:[#allocation9 + $0x140] sm:$0xf]
        %v1686 = vld [vmem:[#allocation9 + $0x144] sm:$0xff]
        %v1687 = vld [vmem:[#allocation9 + $0x14c] sm:$0xf]
        %v1688 = vld [vmem:[#allocation9 + $0x150] sm:$0xff]
        %v1689 = vld [vmem:[#allocation9 + $0x158] sm:$0xf]
        %v1690 = vld [vmem:[#allocation9 + $0x15c] sm:$0xff]
        %v1691 = vld [vmem:[#allocation9 + $0x164] sm:$0xf]
        %v1692 = vld [vmem:[#allocation9 + $0x168] sm:$0xff]
        %v1693 = vld [vmem:[#allocation9 + $0x170] sm:$0xf]
        %v1694 = vld [vmem:[#allocation9 + $0x174] sm:$0xff]
        %v1695 = vld [vmem:[#allocation9 + $0x17c] sm:$0xf]
        %v1696 = vld [vmem:[#allocation9 + $0x180] sm:$0xff]
        %v1697 = vld [vmem:[#allocation9 + $0x188] sm:$0xf]
        %v1698 = vld [vmem:[#allocation9 + $0x18c] sm:$0xff]
        %v1699 = vld [vmem:[#allocation9 + $0x194] sm:$0xf]
        %v1700 = vld [vmem:[#allocation9 + $0x198] sm:$0xff]
        %v1701 = vld [vmem:[#allocation9 + $0x1a0] sm:$0xf]
        %v1702 = vld [vmem:[#allocation9 + $0x1a4] sm:$0xff]
        %v1703 = vld [vmem:[#allocation9 + $0x1ac] sm:$0xf]
        %v1704 = vlaneseq
        %v1705 = vshrl.u32 %v1704, 7
        %v1706 = vsub.s32 2, %v1705
        %v1707 = vrot.slane %v492, %v1706
        %v1708 = vlaneseq
        %v1709 = vshrl.u32 %v1708, 7
        %v1710 = vsub.s32 2, %v1709
        %v1711 = vrot.slane %v493, %v1710
        %v1712 = vlaneseq
        %v1713 = vshrl.u32 %v1712, 7
        %v1714 = vsub.s32 2, %v1713
        %v1715 = vrot.slane %v494, %v1714
        %v1748 = vunpack.c.l.b16 %v1672
        %v1749 = vunpack.c.h.b16 %v1672
        %v1750 = vunpack.c.l.b16 %v1673
        %v1751 = vunpack.c.l.b16 %v1674
        %v1752 = vunpack.c.h.b16 %v1674
        %v1753 = vunpack.c.l.b16 %v1675
        %v1754 = vunpack.c.l.b16 %v1676
        %v1755 = vunpack.c.h.b16 %v1676
        %v1756 = vunpack.c.l.b16 %v1677
        %v1757 = vunpack.c.l.b16 %v1678
        %v1758 = vunpack.c.h.b16 %v1678
        %v1759 = vunpack.c.l.b16 %v1679
        %v1760 = vunpack.c.l.b16 %v1680
        %v1761 = vunpack.c.h.b16 %v1680
        %v1762 = vunpack.c.l.b16 %v1681
        %v1763 = vunpack.c.l.b16 %v1682
        %v1764 = vunpack.c.h.b16 %v1682
        %v1765 = vunpack.c.l.b16 %v1683
        %v1766 = vunpack.c.l.b16 %v1684
        %v1767 = vunpack.c.h.b16 %v1684
        %v1768 = vunpack.c.l.b16 %v1685
        %v1769 = vunpack.c.l.b16 %v1686
        %v1770 = vunpack.c.h.b16 %v1686
        %v1771 = vunpack.c.l.b16 %v1687
        %v1772 = vunpack.c.l.b16 %v1688
        %v1773 = vunpack.c.h.b16 %v1688
        %v1774 = vunpack.c.l.b16 %v1689
        %v1775 = vunpack.c.l.b16 %v1690
        %v1776 = vunpack.c.h.b16 %v1690
        %v1777 = vunpack.c.l.b16 %v1691
        %v1778 = vunpack.c.l.b16 %v1692
        %v1779 = vunpack.c.h.b16 %v1692
        %v1780 = vunpack.c.l.b16 %v1693
        %v1781 = vunpack.c.l.b16 %v1694
        %v1782 = vunpack.c.h.b16 %v1694
        %v1783 = vunpack.c.l.b16 %v1695
        %v1784 = vunpack.c.l.b16 %v1696
        %v1785 = vunpack.c.h.b16 %v1696
        %v1786 = vunpack.c.l.b16 %v1697
        %v1787 = vunpack.c.l.b16 %v1698
        %v1788 = vunpack.c.h.b16 %v1698
        %v1789 = vunpack.c.l.b16 %v1699
        %v1790 = vunpack.c.l.b16 %v1700
        %v1791 = vunpack.c.h.b16 %v1700
        %v1792 = vunpack.c.l.b16 %v1701
        %v1793 = vunpack.c.l.b16 %v1702
        %v1794 = vunpack.c.h.b16 %v1702
        %v1795 = vunpack.c.l.b16 %v1703
        %v1796 = vpack.c.b16 %v1751, %v1748
        %v1797 = vpack.c.b16 %v1752, %v1749
        %v1798 = vpack.c.b16 %v1753, %v1750
        %v1799 = vpack.c.b16 %v1757, %v1754
        %v1800 = vpack.c.b16 %v1758, %v1755
        %v1801 = vpack.c.b16 %v1759, %v1756
        %v1802 = vpack.c.b16 %v1763, %v1760
        %v1803 = vpack.c.b16 %v1764, %v1761
        %v1804 = vpack.c.b16 %v1765, %v1762
        %v1805 = vpack.c.b16 %v1769, %v1766
        %v1806 = vpack.c.b16 %v1770, %v1767
        %v1807 = vpack.c.b16 %v1771, %v1768
        %v1808 = vpack.c.b16 %v1775, %v1772
        %v1809 = vpack.c.b16 %v1776, %v1773
        %v1810 = vpack.c.b16 %v1777, %v1774
        %v1811 = vpack.c.b16 %v1781, %v1778
        %v1812 = vpack.c.b16 %v1782, %v1779
        %v1813 = vpack.c.b16 %v1783, %v1780
        %v1814 = vpack.c.b16 %v1787, %v1784
        %v1815 = vpack.c.b16 %v1788, %v1785
        %v1816 = vpack.c.b16 %v1789, %v1786
        %v1817 = vpack.c.b16 %v1793, %v1790
        %v1818 = vpack.c.b16 %v1794, %v1791
        %v1819 = vpack.c.b16 %v1795, %v1792
        %1844 = vmatprep.subr.bf16.mxu0 %v1818
        %1845 = vmatpush1.bf16.msra.mxu0 %v1817
        %1846 = vmatprep.subr.bf16.mxu0 %v1815
        %1847 = vmatpush1.bf16.msra.mxu0 %v1814
        %1848 = vmatprep.subr.bf16.mxu0 %v1812
        %1849 = vmatpush1.bf16.msra.mxu0 %v1811
        %1850 = vmatprep.subr.bf16.mxu0 %v1809
        %1851 = vmatpush1.bf16.msra.mxu0 %v1808
        %1852 = vmatprep.subr.bf16.mxu0 %v1806
        %1853 = vmatpush1.bf16.msra.mxu0 %v1805
        %1854 = vmatprep.subr.bf16.mxu0 %v1803
        %1855 = vmatpush1.bf16.msra.mxu0 %v1802
        %1856 = vmatprep.subr.bf16.mxu0 %v1800
        %1857 = vmatpush1.bf16.msra.mxu0 %v1799
        %1858 = vmatprep.subr.bf16.mxu0 %v1797
        %1859 = vmatpush1.bf16.msra.mxu0 %v1796
        %1860 = vmatprep.subr.bf16.mxu0 0
        %1861 = vmatpush2.bf16.msra.mxu0 0
        %1862 = vmatprep.subr.bf16.mxu0 0
        %1863 = vmatpush2.bf16.msra.mxu0 0
        %1864 = vmatprep.subr.bf16.mxu0 0
        %1865 = vmatpush2.bf16.msra.mxu0 0
        %1866 = vmatprep.subr.bf16.mxu0 0
        %1867 = vmatpush2.bf16.msra.mxu0 0
        %1868 = vmatprep.subr.bf16.mxu0 0
        %1869 = vmatpush2.bf16.msra.mxu0 0
        %1870 = vmatprep.subr.bf16.mxu0 0
        %1871 = vmatpush2.bf16.msra.mxu0 0
        %1872 = vmatprep.subr.bf16.mxu0 0
        %1873 = vmatpush2.bf16.msra.mxu0 0
        %1874 = vmatprep.subr.bf16.mxu0 0
        %1875 = vmatpush2.bf16.msra.mxu0 0
        %1876 = vmatprep.mubr.bf16.mxu0 0
        %1877 = vmatmul.mubr.bf16.gmra.mxu0 %v1671
        %v1878 = vpop.f32.mrf.mxu0
        %v1879 = vadd.f32 %v1707, %v1878
        %v1880 = vpop.f32.mrf.mxu0
        %v1881 = vadd.f32 %v1711, %v1880
        %v1882 = vpop.f32.mrf.mxu0
        %v1883 = vpop.f32.mrf.mxu0
        %1884 = vdwg.mxu0
        %1885 = vmatprep.subr.bf16.mxu0 0
        %1886 = vmatpush1.bf16.msra.mxu0 %v1819
        %1887 = vmatprep.subr.bf16.mxu0 0
        %1888 = vmatpush1.bf16.msra.mxu0 %v1816
        %1889 = vmatprep.subr.bf16.mxu0 0
        %1890 = vmatpush1.bf16.msra.mxu0 %v1813
        %1891 = vmatprep.subr.bf16.mxu0 0
        %1892 = vmatpush1.bf16.msra.mxu0 %v1810
        %1893 = vmatprep.subr.bf16.mxu0 0
        %1894 = vmatpush1.bf16.msra.mxu0 %v1807
        %1895 = vmatprep.subr.bf16.mxu0 0
        %1896 = vmatpush1.bf16.msra.mxu0 %v1804
        %1897 = vmatprep.subr.bf16.mxu0 0
        %1898 = vmatpush1.bf16.msra.mxu0 %v1801
        %1899 = vmatprep.subr.bf16.mxu0 0
        %1900 = vmatpush1.bf16.msra.mxu0 %v1798
        %1901 = vmatprep.subr.bf16.mxu0 0
        %1902 = vmatpush2.bf16.msra.mxu0 0
        %1903 = vmatprep.subr.bf16.mxu0 0
        %1904 = vmatpush2.bf16.msra.mxu0 0
        %1905 = vmatprep.subr.bf16.mxu0 0
        %1906 = vmatpush2.bf16.msra.mxu0 0
        %1907 = vmatprep.subr.bf16.mxu0 0
        %1908 = vmatpush2.bf16.msra.mxu0 0
        %1909 = vmatprep.subr.bf16.mxu0 0
        %1910 = vmatpush2.bf16.msra.mxu0 0
        %1911 = vmatprep.subr.bf16.mxu0 0
        %1912 = vmatpush2.bf16.msra.mxu0 0
        %1913 = vmatprep.subr.bf16.mxu0 0
        %1914 = vmatpush2.bf16.msra.mxu0 0
        %1915 = vmatprep.subr.bf16.mxu0 0
        %1916 = vmatpush2.bf16.msra.mxu0 0
        %1917 = vmatprep.mubr.bf16.mxu0 0
        %1918 = vmatmul.mubr.bf16.gmra.mxu0 %v1671
        %v1919 = vpop.f32.mrf.mxu0
        %v1920 = vadd.f32 %v1715, %v1919
        %v1921 = vpop.f32.mrf.mxu0
        %v1922 = vpop.f32.mrf.mxu0
        %v1923 = vpop.f32.mrf.mxu0
        %1924 = vdwg.mxu0
        %v1925 = vadd.f32 %v1879, %v1180
        %v1926 = vadd.f32 %v1881, %v1182
        %v1927 = vxor.u32 %v1925, 2147483648
        %v1928 = vxor.u32 %v1926, 2147483648
        %v1929 = vmul.f32 %v1927, 1.442695
        %v1930 = vpow.pop %v1929
        %v1931 = vmul.f32 %v1928, 1.442695
        %v1932 = vpow.pop %v1931
        %v1933 = vadd.f32 %v1930, 1.0
        %v1934 = vadd.f32 %v1932, 1.0
        %v1935 = vrcp.pop %v1933
        %v1936 = vmul.f32 1.0, %v1935
        %v1937 = vrcp.pop %v1934
        %v1938 = vmul.f32 1.0, %v1937
        %v1939 = vlaneseq
        %v1940 = vshrl.u32 %v1939, 7
        %v1941 = vsub.s32 5, %v1940
        %v1942 = vrot.slane %v492, %v1941
        %v1943 = vadd.f32 %v1221, %v1942
        %v1944 = vmul.f32 %v1936, %v1943
        %v1945 = vadd.f32 %v1920, %v1944
        %v1946 = vtanh.pop %v1945
        %v1947 = vsub.f32 1.0, %v1938
        %v1948 = vmul.f32 %v1947, %v1946
        %v1949 = vmul.f32 %v1938, %v983
        %v1950 = vadd.f32 %v1948, %v1949
        %1951 = vst [vmem:[#allocation2] sm:$0xff] %v1390
        %1952 = vst [vmem:[%s738] sm:$0xff] %v1670
        %1953 = vst [vmem:[%s982] sm:$0xff] %v1950
        %p1954 = scmp.eq.s32.totalorder %s34, 7
        // Predicated region
        $region89: #{tpu_custom_call.1} parent=55 // pred_check
          %p1955 = pneg %p1954
        $region90: #{tpu_custom_call.1} parent=55 // pred_check_branch
          %1957 = sbr.rel (%p1955) target = $region92
        $region91: #{tpu_custom_call.1} parent=55 // pred_region
          %v1958 = vld [vmem:[#allocation2] sm:$0xff]
          %v1959 = vld [vmem:[#allocation2 + $0x8] sm:$0xff]
          %v1960 = vld [vmem:[#allocation2 + $0x10] sm:$0xff]
          %1961 = vst [vmem:[#allocation16] sm:$0xff] %v1958
          %1962 = vst [vmem:[#allocation16 + $0x8] sm:$0xff] %v1959
          %1963 = vst [vmem:[#allocation16 + $0x10] sm:$0xff] %v1960
        $region92: #{tpu_custom_call.1} parent=55 // pred_fallthru
          _
        %vm1964 = vcmp.gt.f32.partialorder %v1950, 0.0
        %v1965 = vmul.f32 %v1950, 0.01
        %v1966 = vsel %vm1964, %v1950, %v1965
        %v1967 = vld [vmem:[%s419] sm:$0xff]
        %v1968 = vpack.c.bf16 %v1966, %v1966
        %v1969 = vld [vmem:[#allocation12] sm:$0xff]
        %v1970 = vld [vmem:[#allocation12 + $0x8] sm:$0xff]
        %v1971 = vld [vmem:[#allocation12 + $0x10] sm:$0xff]
        %v1972 = vld [vmem:[#allocation12 + $0x18] sm:$0xff]
        %v1973 = vld [vmem:[#allocation12 + $0x20] sm:$0xff]
        %v1974 = vld [vmem:[#allocation12 + $0x28] sm:$0xff]
        %v1975 = vld [vmem:[#allocation12 + $0x30] sm:$0xff]
        %v1976 = vld [vmem:[#allocation12 + $0x38] sm:$0xff]
        %v1977 = vld [vmem:[#allocation12 + $0x40] sm:$0xff]
        %v1978 = vld [vmem:[#allocation12 + $0x48] sm:$0xff]
        %v1979 = vld [vmem:[#allocation12 + $0x50] sm:$0xff]
        %v1980 = vld [vmem:[#allocation12 + $0x58] sm:$0xff]
        %v1981 = vld [vmem:[#allocation12 + $0x60] sm:$0xff]
        %v1982 = vld [vmem:[#allocation12 + $0x68] sm:$0xff]
        %v1983 = vld [vmem:[#allocation12 + $0x70] sm:$0xff]
        %v1984 = vld [vmem:[#allocation12 + $0x78] sm:$0xff]
        %v1985 = vld [vmem:[#allocation12 + $0x80] sm:$0xff]
        %v1986 = vld [vmem:[#allocation12 + $0x88] sm:$0xff]
        %v1987 = vld [vmem:[#allocation12 + $0x90] sm:$0xff]
        %v1988 = vld [vmem:[#allocation12 + $0x98] sm:$0xff]
        %v1989 = vld [vmem:[#allocation12 + $0xa0] sm:$0xff]
        %v1990 = vld [vmem:[#allocation12 + $0xa8] sm:$0xff]
        %v1991 = vld [vmem:[#allocation12 + $0xb0] sm:$0xff]
        %v1992 = vld [vmem:[#allocation12 + $0xb8] sm:$0xff]
        %v1993 = vld [vmem:[#allocation12 + $0xc0] sm:$0xff]
        %v1994 = vld [vmem:[#allocation12 + $0xc8] sm:$0xff]
        %v1995 = vld [vmem:[#allocation12 + $0xd0] sm:$0xff]
        %v1996 = vld [vmem:[#allocation12 + $0xd8] sm:$0xff]
        %v1997 = vld [vmem:[#allocation12 + $0xe0] sm:$0xff]
        %v1998 = vld [vmem:[#allocation12 + $0xe8] sm:$0xff]
        %v1999 = vld [vmem:[#allocation12 + $0xf0] sm:$0xff]
        %v2000 = vld [vmem:[#allocation12 + $0xf8] sm:$0xff]
        %v2001 = vpack.c.bf16 %v1967, %v1967
        %v2002 = vld [vmem:[#allocation12 + $0x100] sm:$0xff]
        %v2003 = vld [vmem:[#allocation12 + $0x108] sm:$0xff]
        %v2004 = vld [vmem:[#allocation12 + $0x110] sm:$0xff]
        %v2005 = vld [vmem:[#allocation12 + $0x118] sm:$0xff]
        %v2006 = vld [vmem:[#allocation12 + $0x120] sm:$0xff]
        %v2007 = vld [vmem:[#allocation12 + $0x128] sm:$0xff]
        %v2008 = vld [vmem:[#allocation12 + $0x130] sm:$0xff]
        %v2009 = vld [vmem:[#allocation12 + $0x138] sm:$0xff]
        %v2010 = vld [vmem:[#allocation12 + $0x140] sm:$0xff]
        %v2011 = vld [vmem:[#allocation12 + $0x148] sm:$0xff]
        %v2012 = vld [vmem:[#allocation12 + $0x150] sm:$0xff]
        %v2013 = vld [vmem:[#allocation12 + $0x158] sm:$0xff]
        %v2014 = vld [vmem:[#allocation12 + $0x160] sm:$0xff]
        %v2015 = vld [vmem:[#allocation12 + $0x168] sm:$0xff]
        %v2016 = vld [vmem:[#allocation12 + $0x170] sm:$0xff]
        %v2017 = vld [vmem:[#allocation12 + $0x178] sm:$0xff]
        %v2018 = vld [vmem:[#allocation12 + $0x180] sm:$0xff]
        %v2019 = vld [vmem:[#allocation12 + $0x188] sm:$0xff]
        %v2020 = vld [vmem:[#allocation12 + $0x190] sm:$0xff]
        %v2021 = vld [vmem:[#allocation12 + $0x198] sm:$0xff]
        %v2022 = vld [vmem:[#allocation12 + $0x1a0] sm:$0xff]
        %v2023 = vld [vmem:[#allocation12 + $0x1a8] sm:$0xff]
        %v2024 = vld [vmem:[#allocation12 + $0x1b0] sm:$0xff]
        %v2025 = vld [vmem:[#allocation12 + $0x1b8] sm:$0xff]
        %v2026 = vld [vmem:[#allocation12 + $0x1c0] sm:$0xff]
        %v2027 = vld [vmem:[#allocation12 + $0x1c8] sm:$0xff]
        %v2028 = vld [vmem:[#allocation12 + $0x1d0] sm:$0xff]
        %v2029 = vld [vmem:[#allocation12 + $0x1d8] sm:$0xff]
        %v2030 = vld [vmem:[#allocation12 + $0x1e0] sm:$0xff]
        %v2031 = vld [vmem:[#allocation12 + $0x1e8] sm:$0xff]
        %v2032 = vld [vmem:[#allocation12 + $0x1f0] sm:$0xff]
        %v2033 = vld [vmem:[#allocation12 + $0x1f8] sm:$0xff]
        %v2066 = vunpack.c.l.b16 %v2002
        %v2067 = vunpack.c.h.b16 %v2002
        %v2068 = vunpack.c.l.b16 %v2003
        %v2069 = vunpack.c.h.b16 %v2003
        %v2070 = vunpack.c.l.b16 %v2004
        %v2071 = vunpack.c.h.b16 %v2004
        %v2072 = vunpack.c.l.b16 %v2005
        %v2073 = vunpack.c.h.b16 %v2005
        %v2074 = vunpack.c.l.b16 %v2006
        %v2075 = vunpack.c.h.b16 %v2006
        %v2076 = vunpack.c.l.b16 %v2007
        %v2077 = vunpack.c.h.b16 %v2007
        %v2078 = vunpack.c.l.b16 %v2008
        %v2079 = vunpack.c.h.b16 %v2008
        %v2080 = vunpack.c.l.b16 %v2009
        %v2081 = vunpack.c.h.b16 %v2009
        %v2082 = vunpack.c.l.b16 %v2010
        %v2083 = vunpack.c.h.b16 %v2010
        %v2084 = vunpack.c.l.b16 %v2011
        %v2085 = vunpack.c.h.b16 %v2011
        %v2086 = vunpack.c.l.b16 %v2012
        %v2087 = vunpack.c.h.b16 %v2012
        %v2088 = vunpack.c.l.b16 %v2013
        %v2089 = vunpack.c.h.b16 %v2013
        %v2090 = vunpack.c.l.b16 %v2014
        %v2091 = vunpack.c.h.b16 %v2014
        %v2092 = vunpack.c.l.b16 %v2015
        %v2093 = vunpack.c.h.b16 %v2015
        %v2094 = vunpack.c.l.b16 %v2016
        %v2095 = vunpack.c.h.b16 %v2016
        %v2096 = vunpack.c.l.b16 %v2017
        %v2097 = vunpack.c.h.b16 %v2017
        %v2098 = vunpack.c.l.b16 %v2018
        %v2099 = vunpack.c.h.b16 %v2018
        %v2100 = vunpack.c.l.b16 %v2019
        %v2101 = vunpack.c.h.b16 %v2019
        %v2102 = vunpack.c.l.b16 %v2020
        %v2103 = vunpack.c.h.b16 %v2020
        %v2104 = vunpack.c.l.b16 %v2021
        %v2105 = vunpack.c.h.b16 %v2021
        %v2106 = vunpack.c.l.b16 %v2022
        %v2107 = vunpack.c.h.b16 %v2022
        %v2108 = vunpack.c.l.b16 %v2023
        %v2109 = vunpack.c.h.b16 %v2023
        %v2110 = vunpack.c.l.b16 %v2024
        %v2111 = vunpack.c.h.b16 %v2024
        %v2112 = vunpack.c.l.b16 %v2025
        %v2113 = vunpack.c.h.b16 %v2025
        %v2114 = vunpack.c.l.b16 %v2026
        %v2115 = vunpack.c.h.b16 %v2026
        %v2116 = vunpack.c.l.b16 %v2027
        %v2117 = vunpack.c.h.b16 %v2027
        %v2118 = vunpack.c.l.b16 %v2028
        %v2119 = vunpack.c.h.b16 %v2028
        %v2120 = vunpack.c.l.b16 %v2029
        %v2121 = vunpack.c.h.b16 %v2029
        %v2122 = vunpack.c.l.b16 %v2030
        %v2123 = vunpack.c.h.b16 %v2030
        %v2124 = vunpack.c.l.b16 %v2031
        %v2125 = vunpack.c.h.b16 %v2031
        %v2126 = vunpack.c.l.b16 %v2032
        %v2127 = vunpack.c.h.b16 %v2032
        %v2128 = vunpack.c.l.b16 %v2033
        %v2129 = vunpack.c.h.b16 %v2033
        %v2130 = vpack.c.b16 %v2070, %v2066
        %v2131 = vpack.c.b16 %v2071, %v2067
        %v2132 = vpack.c.b16 %v2072, %v2068
        %v2133 = vpack.c.b16 %v2073, %v2069
        %v2134 = vpack.c.b16 %v2078, %v2074
        %v2135 = vpack.c.b16 %v2079, %v2075
        %v2136 = vpack.c.b16 %v2080, %v2076
        %v2137 = vpack.c.b16 %v2081, %v2077
        %v2138 = vpack.c.b16 %v2086, %v2082
        %v2139 = vpack.c.b16 %v2087, %v2083
        %v2140 = vpack.c.b16 %v2088, %v2084
        %v2141 = vpack.c.b16 %v2089, %v2085
        %v2142 = vpack.c.b16 %v2094, %v2090
        %v2143 = vpack.c.b16 %v2095, %v2091
        %v2144 = vpack.c.b16 %v2096, %v2092
        %v2145 = vpack.c.b16 %v2097, %v2093
        %v2146 = vpack.c.b16 %v2102, %v2098
        %v2147 = vpack.c.b16 %v2103, %v2099
        %v2148 = vpack.c.b16 %v2104, %v2100
        %v2149 = vpack.c.b16 %v2105, %v2101
        %v2150 = vpack.c.b16 %v2110, %v2106
        %v2151 = vpack.c.b16 %v2111, %v2107
        %v2152 = vpack.c.b16 %v2112, %v2108
        %v2153 = vpack.c.b16 %v2113, %v2109
        %v2154 = vpack.c.b16 %v2118, %v2114
        %v2155 = vpack.c.b16 %v2119, %v2115
        %v2156 = vpack.c.b16 %v2120, %v2116
        %v2157 = vpack.c.b16 %v2121, %v2117
        %v2158 = vpack.c.b16 %v2126, %v2122
        %v2159 = vpack.c.b16 %v2127, %v2123
        %v2160 = vpack.c.b16 %v2128, %v2124
        %v2161 = vpack.c.b16 %v2129, %v2125
        %2194 = vmatprep.subr.bf16.mxu0 %v2159
        %2195 = vmatpush1.bf16.msra.mxu0 %v2158
        %2196 = vmatprep.subr.bf16.mxu0 %v2155
        %2197 = vmatpush1.bf16.msra.mxu0 %v2154
        %2198 = vmatprep.subr.bf16.mxu0 %v2151
        %2199 = vmatpush1.bf16.msra.mxu0 %v2150
        %2200 = vmatprep.subr.bf16.mxu0 %v2147
        %2201 = vmatpush1.bf16.msra.mxu0 %v2146
        %2202 = vmatprep.subr.bf16.mxu0 %v2143
        %2203 = vmatpush1.bf16.msra.mxu0 %v2142
        %2204 = vmatprep.subr.bf16.mxu0 %v2139
        %2205 = vmatpush1.bf16.msra.mxu0 %v2138
        %2206 = vmatprep.subr.bf16.mxu0 %v2135
        %2207 = vmatpush1.bf16.msra.mxu0 %v2134
        %2208 = vmatprep.subr.bf16.mxu0 %v2131
        %2209 = vmatpush1.bf16.msra.mxu0 %v2130
        %2210 = vmatprep.subr.bf16.mxu0 0
        %2211 = vmatpush2.bf16.msra.mxu0 0
        %2212 = vmatprep.subr.bf16.mxu0 0
        %2213 = vmatpush2.bf16.msra.mxu0 0
        %2214 = vmatprep.subr.bf16.mxu0 0
        %2215 = vmatpush2.bf16.msra.mxu0 0
        %2216 = vmatprep.subr.bf16.mxu0 0
        %2217 = vmatpush2.bf16.msra.mxu0 0
        %2218 = vmatprep.subr.bf16.mxu0 0
        %2219 = vmatpush2.bf16.msra.mxu0 0
        %2220 = vmatprep.subr.bf16.mxu0 0
        %2221 = vmatpush2.bf16.msra.mxu0 0
        %2222 = vmatprep.subr.bf16.mxu0 0
        %2223 = vmatpush2.bf16.msra.mxu0 0
        %2224 = vmatprep.subr.bf16.mxu0 0
        %2225 = vmatpush2.bf16.msra.mxu0 0
        %2226 = vmatprep.mubr.bf16.mxu0 0
        %2227 = vmatmul.mubr.bf16.gmra.mxu0 %v2001
        %v2228 = vpop.f32.mrf.mxu0
        %v2229 = vadd.f32 0.0, %v2228
        %v2230 = vpop.f32.mrf.mxu0
        %v2231 = vadd.f32 0.0, %v2230
        %v2232 = vpop.f32.mrf.mxu0
        %v2233 = vpop.f32.mrf.mxu0
        %2234 = vdwg.mxu0
        %2235 = vmatprep.subr.bf16.mxu0 %v2161
        %2236 = vmatpush1.bf16.msra.mxu0 %v2160
        %2237 = vmatprep.subr.bf16.mxu0 %v2157
        %2238 = vmatpush1.bf16.msra.mxu0 %v2156
        %2239 = vmatprep.subr.bf16.mxu0 %v2153
        %2240 = vmatpush1.bf16.msra.mxu0 %v2152
        %2241 = vmatprep.subr.bf16.mxu0 %v2149
        %2242 = vmatpush1.bf16.msra.mxu0 %v2148
        %2243 = vmatprep.subr.bf16.mxu0 %v2145
        %2244 = vmatpush1.bf16.msra.mxu0 %v2144
        %2245 = vmatprep.subr.bf16.mxu0 %v2141
        %2246 = vmatpush1.bf16.msra.mxu0 %v2140
        %2247 = vmatprep.subr.bf16.mxu0 %v2137
        %2248 = vmatpush1.bf16.msra.mxu0 %v2136
        %2249 = vmatprep.subr.bf16.mxu0 %v2133
        %2250 = vmatpush1.bf16.msra.mxu0 %v2132
        %2251 = vmatprep.subr.bf16.mxu0 0
        %2252 = vmatpush2.bf16.msra.mxu0 0
        %2253 = vmatprep.subr.bf16.mxu0 0
        %2254 = vmatpush2.bf16.msra.mxu0 0
        %2255 = vmatprep.subr.bf16.mxu0 0
        %2256 = vmatpush2.bf16.msra.mxu0 0
        %2257 = vmatprep.subr.bf16.mxu0 0
        %2258 = vmatpush2.bf16.msra.mxu0 0
        %2259 = vmatprep.subr.bf16.mxu0 0
        %2260 = vmatpush2.bf16.msra.mxu0 0
        %2261 = vmatprep.subr.bf16.mxu0 0
        %2262 = vmatpush2.bf16.msra.mxu0 0
        %2263 = vmatprep.subr.bf16.mxu0 0
        %2264 = vmatpush2.bf16.msra.mxu0 0
        %2265 = vmatprep.subr.bf16.mxu0 0
        %2266 = vmatpush2.bf16.msra.mxu0 0
        %2267 = vmatprep.mubr.bf16.mxu0 0
        %2268 = vmatmul.mubr.bf16.gmra.mxu0 %v2001
        %v2269 = vpop.f32.mrf.mxu0
        %v2270 = vadd.f32 0.0, %v2269
        %v2271 = vpop.f32.mrf.mxu0
        %v2272 = vadd.f32 0.0, %v2271
        %v2273 = vpop.f32.mrf.mxu0
        %v2274 = vpop.f32.mrf.mxu0
        %2275 = vdwg.mxu0
        %v2308 = vunpack.c.l.b16 %v1969
        %v2309 = vunpack.c.h.b16 %v1969
        %v2310 = vunpack.c.l.b16 %v1970
        %v2311 = vunpack.c.h.b16 %v1970
        %v2312 = vunpack.c.l.b16 %v1971
        %v2313 = vunpack.c.h.b16 %v1971
        %v2314 = vunpack.c.l.b16 %v1972
        %v2315 = vunpack.c.h.b16 %v1972
        %v2316 = vunpack.c.l.b16 %v1973
        %v2317 = vunpack.c.h.b16 %v1973
        %v2318 = vunpack.c.l.b16 %v1974
        %v2319 = vunpack.c.h.b16 %v1974
        %v2320 = vunpack.c.l.b16 %v1975
        %v2321 = vunpack.c.h.b16 %v1975
        %v2322 = vunpack.c.l.b16 %v1976
        %v2323 = vunpack.c.h.b16 %v1976
        %v2324 = vunpack.c.l.b16 %v1977
        %v2325 = vunpack.c.h.b16 %v1977
        %v2326 = vunpack.c.l.b16 %v1978
        %v2327 = vunpack.c.h.b16 %v1978
        %v2328 = vunpack.c.l.b16 %v1979
        %v2329 = vunpack.c.h.b16 %v1979
        %v2330 = vunpack.c.l.b16 %v1980
        %v2331 = vunpack.c.h.b16 %v1980
        %v2332 = vunpack.c.l.b16 %v1981
        %v2333 = vunpack.c.h.b16 %v1981
        %v2334 = vunpack.c.l.b16 %v1982
        %v2335 = vunpack.c.h.b16 %v1982
        %v2336 = vunpack.c.l.b16 %v1983
        %v2337 = vunpack.c.h.b16 %v1983
        %v2338 = vunpack.c.l.b16 %v1984
        %v2339 = vunpack.c.h.b16 %v1984
        %v2340 = vunpack.c.l.b16 %v1985
        %v2341 = vunpack.c.h.b16 %v1985
        %v2342 = vunpack.c.l.b16 %v1986
        %v2343 = vunpack.c.h.b16 %v1986
        %v2344 = vunpack.c.l.b16 %v1987
        %v2345 = vunpack.c.h.b16 %v1987
        %v2346 = vunpack.c.l.b16 %v1988
        %v2347 = vunpack.c.h.b16 %v1988
        %v2348 = vunpack.c.l.b16 %v1989
        %v2349 = vunpack.c.h.b16 %v1989
        %v2350 = vunpack.c.l.b16 %v1990
        %v2351 = vunpack.c.h.b16 %v1990
        %v2352 = vunpack.c.l.b16 %v1991
        %v2353 = vunpack.c.h.b16 %v1991
        %v2354 = vunpack.c.l.b16 %v1992
        %v2355 = vunpack.c.h.b16 %v1992
        %v2356 = vunpack.c.l.b16 %v1993
        %v2357 = vunpack.c.h.b16 %v1993
        %v2358 = vunpack.c.l.b16 %v1994
        %v2359 = vunpack.c.h.b16 %v1994
        %v2360 = vunpack.c.l.b16 %v1995
        %v2361 = vunpack.c.h.b16 %v1995
        %v2362 = vunpack.c.l.b16 %v1996
        %v2363 = vunpack.c.h.b16 %v1996
        %v2364 = vunpack.c.l.b16 %v1997
        %v2365 = vunpack.c.h.b16 %v1997
        %v2366 = vunpack.c.l.b16 %v1998
        %v2367 = vunpack.c.h.b16 %v1998
        %v2368 = vunpack.c.l.b16 %v1999
        %v2369 = vunpack.c.h.b16 %v1999
        %v2370 = vunpack.c.l.b16 %v2000
        %v2371 = vunpack.c.h.b16 %v2000
        %v2372 = vpack.c.b16 %v2312, %v2308
        %v2373 = vpack.c.b16 %v2313, %v2309
        %v2374 = vpack.c.b16 %v2314, %v2310
        %v2375 = vpack.c.b16 %v2315, %v2311
        %v2376 = vpack.c.b16 %v2320, %v2316
        %v2377 = vpack.c.b16 %v2321, %v2317
        %v2378 = vpack.c.b16 %v2322, %v2318
        %v2379 = vpack.c.b16 %v2323, %v2319
        %v2380 = vpack.c.b16 %v2328, %v2324
        %v2381 = vpack.c.b16 %v2329, %v2325
        %v2382 = vpack.c.b16 %v2330, %v2326
        %v2383 = vpack.c.b16 %v2331, %v2327
        %v2384 = vpack.c.b16 %v2336, %v2332
        %v2385 = vpack.c.b16 %v2337, %v2333
        %v2386 = vpack.c.b16 %v2338, %v2334
        %v2387 = vpack.c.b16 %v2339, %v2335
        %v2388 = vpack.c.b16 %v2344, %v2340
        %v2389 = vpack.c.b16 %v2345, %v2341
        %v2390 = vpack.c.b16 %v2346, %v2342
        %v2391 = vpack.c.b16 %v2347, %v2343
        %v2392 = vpack.c.b16 %v2352, %v2348
        %v2393 = vpack.c.b16 %v2353, %v2349
        %v2394 = vpack.c.b16 %v2354, %v2350
        %v2395 = vpack.c.b16 %v2355, %v2351
        %v2396 = vpack.c.b16 %v2360, %v2356
        %v2397 = vpack.c.b16 %v2361, %v2357
        %v2398 = vpack.c.b16 %v2362, %v2358
        %v2399 = vpack.c.b16 %v2363, %v2359
        %v2400 = vpack.c.b16 %v2368, %v2364
        %v2401 = vpack.c.b16 %v2369, %v2365
        %v2402 = vpack.c.b16 %v2370, %v2366
        %v2403 = vpack.c.b16 %v2371, %v2367
        %2436 = vmatprep.subr.bf16.mxu0 %v2401
        %2437 = vmatpush1.bf16.msra.mxu0 %v2400
        %2438 = vmatprep.subr.bf16.mxu0 %v2397
        %2439 = vmatpush1.bf16.msra.mxu0 %v2396
        %2440 = vmatprep.subr.bf16.mxu0 %v2393
        %2441 = vmatpush1.bf16.msra.mxu0 %v2392
        %2442 = vmatprep.subr.bf16.mxu0 %v2389
        %2443 = vmatpush1.bf16.msra.mxu0 %v2388
        %2444 = vmatprep.subr.bf16.mxu0 %v2385
        %2445 = vmatpush1.bf16.msra.mxu0 %v2384
        %2446 = vmatprep.subr.bf16.mxu0 %v2381
        %2447 = vmatpush1.bf16.msra.mxu0 %v2380
        %2448 = vmatprep.subr.bf16.mxu0 %v2377
        %2449 = vmatpush1.bf16.msra.mxu0 %v2376
        %2450 = vmatprep.subr.bf16.mxu0 %v2373
        %2451 = vmatpush1.bf16.msra.mxu0 %v2372
        %2452 = vmatprep.subr.bf16.mxu0 0
        %2453 = vmatpush2.bf16.msra.mxu0 0
        %2454 = vmatprep.subr.bf16.mxu0 0
        %2455 = vmatpush2.bf16.msra.mxu0 0
        %2456 = vmatprep.subr.bf16.mxu0 0
        %2457 = vmatpush2.bf16.msra.mxu0 0
        %2458 = vmatprep.subr.bf16.mxu0 0
        %2459 = vmatpush2.bf16.msra.mxu0 0
        %2460 = vmatprep.subr.bf16.mxu0 0
        %2461 = vmatpush2.bf16.msra.mxu0 0
        %2462 = vmatprep.subr.bf16.mxu0 0
        %2463 = vmatpush2.bf16.msra.mxu0 0
        %2464 = vmatprep.subr.bf16.mxu0 0
        %2465 = vmatpush2.bf16.msra.mxu0 0
        %2466 = vmatprep.subr.bf16.mxu0 0
        %2467 = vmatpush2.bf16.msra.mxu0 0
        %2468 = vmatprep.mubr.bf16.mxu0 0
        %2469 = vmatmul.mubr.bf16.gmra.mxu0 %v1968
        %v2470 = vpop.f32.mrf.mxu0
        %v2471 = vadd.f32 %v2229, %v2470
        %v2472 = vpop.f32.mrf.mxu0
        %v2473 = vadd.f32 %v2231, %v2472
        %v2474 = vpop.f32.mrf.mxu0
        %v2475 = vpop.f32.mrf.mxu0
        %2476 = vdwg.mxu0
        %2477 = vmatprep.subr.bf16.mxu0 %v2403
        %2478 = vmatpush1.bf16.msra.mxu0 %v2402
        %2479 = vmatprep.subr.bf16.mxu0 %v2399
        %2480 = vmatpush1.bf16.msra.mxu0 %v2398
        %2481 = vmatprep.subr.bf16.mxu0 %v2395
        %2482 = vmatpush1.bf16.msra.mxu0 %v2394
        %2483 = vmatprep.subr.bf16.mxu0 %v2391
        %2484 = vmatpush1.bf16.msra.mxu0 %v2390
        %2485 = vmatprep.subr.bf16.mxu0 %v2387
        %2486 = vmatpush1.bf16.msra.mxu0 %v2386
        %2487 = vmatprep.subr.bf16.mxu0 %v2383
        %2488 = vmatpush1.bf16.msra.mxu0 %v2382
        %2489 = vmatprep.subr.bf16.mxu0 %v2379
        %2490 = vmatpush1.bf16.msra.mxu0 %v2378
        %2491 = vmatprep.subr.bf16.mxu0 %v2375
        %2492 = vmatpush1.bf16.msra.mxu0 %v2374
        %2493 = vmatprep.subr.bf16.mxu0 0
        %2494 = vmatpush2.bf16.msra.mxu0 0
        %2495 = vmatprep.subr.bf16.mxu0 0
        %2496 = vmatpush2.bf16.msra.mxu0 0
        %2497 = vmatprep.subr.bf16.mxu0 0
        %2498 = vmatpush2.bf16.msra.mxu0 0
        %2499 = vmatprep.subr.bf16.mxu0 0
        %2500 = vmatpush2.bf16.msra.mxu0 0
        %2501 = vmatprep.subr.bf16.mxu0 0
        %2502 = vmatpush2.bf16.msra.mxu0 0
        %2503 = vmatprep.subr.bf16.mxu0 0
        %2504 = vmatpush2.bf16.msra.mxu0 0
        %2505 = vmatprep.subr.bf16.mxu0 0
        %2506 = vmatpush2.bf16.msra.mxu0 0
        %2507 = vmatprep.subr.bf16.mxu0 0
        %2508 = vmatpush2.bf16.msra.mxu0 0
        %2509 = vmatprep.mubr.bf16.mxu0 0
        %2510 = vmatmul.mubr.bf16.gmra.mxu0 %v1968
        %v2511 = vpop.f32.mrf.mxu0
        %v2512 = vadd.f32 %v2270, %v2511
        %v2513 = vpop.f32.mrf.mxu0
        %v2514 = vadd.f32 %v2272, %v2513
        %v2515 = vpop.f32.mrf.mxu0
        %v2516 = vpop.f32.mrf.mxu0
        %2517 = vdwg.mxu0
        %v2518 = vld [vmem:[%s6] sm:$0xf]
        %v2520 = vlaneseq
        %v2521 = vshrl.u32 %v2520, 7
        %v2522 = vsub.s32 0, %v2521
        %v2523 = vrot.slane %v2518, %v2522
        %v2524 = vlaneseq
        %v2525 = vshrl.u32 %v2524, 7
        %v2526 = vsub.s32 1, %v2525
        %v2527 = vrot.slane %v2518, %v2526
        %v2528 = vlaneseq
        %v2529 = vshrl.u32 %v2528, 7
        %v2530 = vsub.s32 2, %v2529
        %v2531 = vrot.slane %v2518, %v2530
        %v2532 = vlaneseq
        %v2533 = vshrl.u32 %v2532, 7
        %v2534 = vsub.s32 3, %v2533
        %v2535 = vrot.slane %v2518, %v2534
        %v2540 = vadd.f32 %v2471, %v2523
        %v2541 = vadd.f32 %v2473, %v2527
        %v2542 = vadd.f32 %v2512, %v2531
        %v2543 = vadd.f32 %v2514, %v2535
        %vm2544 = vcmp.gt.f32.partialorder %v2540, 0.0
        %vm2545 = vcmp.gt.f32.partialorder %v2541, 0.0
        %vm2546 = vcmp.gt.f32.partialorder %v2542, 0.0
        %vm2547 = vcmp.gt.f32.partialorder %v2543, 0.0
        %v2548 = vmul.f32 %v2540, 0.1
        %v2549 = vmul.f32 %v2541, 0.1
        %v2550 = vmul.f32 %v2542, 0.1
        %v2551 = vmul.f32 %v2543, 0.1
        %v2552 = vsel %vm2544, %v2540, %v2548
        %v2553 = vsel %vm2545, %v2541, %v2549
        %v2554 = vsel %vm2546, %v2542, %v2550
        %v2555 = vsel %vm2547, %v2543, %v2551
        %v2556 = vpack.c.bf16 %v2552, %v2552
        %v2557 = vpack.c.bf16 %v2553, %v2553
        %v2558 = vpack.c.bf16 %v2554, %v2554
        %v2559 = vpack.c.bf16 %v2555, %v2555
        %v2560 = vld [vmem:[#allocation14] sm:$0xf]
        %v2561 = vld [vmem:[#allocation14 + $0x4] sm:$0xf]
        %v2562 = vld [vmem:[#allocation14 + $0x8] sm:$0xf]
        %v2563 = vld [vmem:[#allocation14 + $0xc] sm:$0xf]
        %v2564 = vld [vmem:[#allocation14 + $0x10] sm:$0xf]
        %v2565 = vld [vmem:[#allocation14 + $0x14] sm:$0xf]
        %v2566 = vld [vmem:[#allocation14 + $0x18] sm:$0xf]
        %v2567 = vld [vmem:[#allocation14 + $0x1c] sm:$0xf]
        %v2568 = vld [vmem:[#allocation14 + $0x20] sm:$0xf]
        %v2569 = vld [vmem:[#allocation14 + $0x24] sm:$0xf]
        %v2570 = vld [vmem:[#allocation14 + $0x28] sm:$0xf]
        %v2571 = vld [vmem:[#allocation14 + $0x2c] sm:$0xf]
        %v2572 = vld [vmem:[#allocation14 + $0x30] sm:$0xf]
        %v2573 = vld [vmem:[#allocation14 + $0x34] sm:$0xf]
        %v2574 = vld [vmem:[#allocation14 + $0x38] sm:$0xf]
        %v2575 = vld [vmem:[#allocation14 + $0x3c] sm:$0xf]
        %v2576 = vld [vmem:[#allocation14 + $0x40] sm:$0xf]
        %v2577 = vld [vmem:[#allocation14 + $0x44] sm:$0xf]
        %v2578 = vld [vmem:[#allocation14 + $0x48] sm:$0xf]
        %v2579 = vld [vmem:[#allocation14 + $0x4c] sm:$0xf]
        %v2580 = vld [vmem:[#allocation14 + $0x50] sm:$0xf]
        %v2581 = vld [vmem:[#allocation14 + $0x54] sm:$0xf]
        %v2582 = vld [vmem:[#allocation14 + $0x58] sm:$0xf]
        %v2583 = vld [vmem:[#allocation14 + $0x5c] sm:$0xf]
        %v2584 = vld [vmem:[#allocation14 + $0x60] sm:$0xf]
        %v2585 = vld [vmem:[#allocation14 + $0x64] sm:$0xf]
        %v2586 = vld [vmem:[#allocation14 + $0x68] sm:$0xf]
        %v2587 = vld [vmem:[#allocation14 + $0x6c] sm:$0xf]
        %v2588 = vld [vmem:[#allocation14 + $0x70] sm:$0xf]
        %v2589 = vld [vmem:[#allocation14 + $0x74] sm:$0xf]
        %v2590 = vld [vmem:[#allocation14 + $0x78] sm:$0xf]
        %v2591 = vld [vmem:[#allocation14 + $0x7c] sm:$0xf]
        %v2592 = vld [vmem:[#allocation14 + $0x80] sm:$0xf]
        %v2593 = vld [vmem:[#allocation14 + $0x84] sm:$0xf]
        %v2594 = vld [vmem:[#allocation14 + $0x88] sm:$0xf]
        %v2595 = vld [vmem:[#allocation14 + $0x8c] sm:$0xf]
        %v2596 = vld [vmem:[#allocation14 + $0x90] sm:$0xf]
        %v2597 = vld [vmem:[#allocation14 + $0x94] sm:$0xf]
        %v2598 = vld [vmem:[#allocation14 + $0x98] sm:$0xf]
        %v2599 = vld [vmem:[#allocation14 + $0x9c] sm:$0xf]
        %v2600 = vld [vmem:[#allocation14 + $0xa0] sm:$0xf]
        %v2601 = vld [vmem:[#allocation14 + $0xa4] sm:$0xf]
        %v2602 = vld [vmem:[#allocation14 + $0xa8] sm:$0xf]
        %v2603 = vld [vmem:[#allocation14 + $0xac] sm:$0xf]
        %v2604 = vld [vmem:[#allocation14 + $0xb0] sm:$0xf]
        %v2605 = vld [vmem:[#allocation14 + $0xb4] sm:$0xf]
        %v2606 = vld [vmem:[#allocation14 + $0xb8] sm:$0xf]
        %v2607 = vld [vmem:[#allocation14 + $0xbc] sm:$0xf]
        %v2608 = vld [vmem:[#allocation14 + $0xc0] sm:$0xf]
        %v2609 = vld [vmem:[#allocation14 + $0xc4] sm:$0xf]
        %v2610 = vld [vmem:[#allocation14 + $0xc8] sm:$0xf]
        %v2611 = vld [vmem:[#allocation14 + $0xcc] sm:$0xf]
        %v2612 = vld [vmem:[#allocation14 + $0xd0] sm:$0xf]
        %v2613 = vld [vmem:[#allocation14 + $0xd4] sm:$0xf]
        %v2614 = vld [vmem:[#allocation14 + $0xd8] sm:$0xf]
        %v2615 = vld [vmem:[#allocation14 + $0xdc] sm:$0xf]
        %v2616 = vld [vmem:[#allocation14 + $0xe0] sm:$0xf]
        %v2617 = vld [vmem:[#allocation14 + $0xe4] sm:$0xf]
        %v2618 = vld [vmem:[#allocation14 + $0xe8] sm:$0xf]
        %v2619 = vld [vmem:[#allocation14 + $0xec] sm:$0xf]
        %v2620 = vld [vmem:[#allocation14 + $0xf0] sm:$0xf]
        %v2621 = vld [vmem:[#allocation14 + $0xf4] sm:$0xf]
        %v2622 = vld [vmem:[#allocation14 + $0xf8] sm:$0xf]
        %v2623 = vld [vmem:[#allocation14 + $0xfc] sm:$0xf]
        %v2624 = vld [vmem:[%s8] sm:$0x1]
        %v2626 = vlaneseq
        %v2627 = vshrl.u32 %v2626, 7
        %v2628 = vsub.s32 0, %v2627
        %v2629 = vrot.slane %v2624, %v2628
        %v2695 = vunpack.c.l.b16 %v2560
        %v2696 = vunpack.c.l.b16 %v2561
        %v2697 = vunpack.c.l.b16 %v2562
        %v2698 = vunpack.c.l.b16 %v2563
        %v2699 = vunpack.c.l.b16 %v2564
        %v2700 = vunpack.c.l.b16 %v2565
        %v2701 = vunpack.c.l.b16 %v2566
        %v2702 = vunpack.c.l.b16 %v2567
        %v2703 = vunpack.c.l.b16 %v2568
        %v2704 = vunpack.c.l.b16 %v2569
        %v2705 = vunpack.c.l.b16 %v2570
        %v2706 = vunpack.c.l.b16 %v2571
        %v2707 = vunpack.c.l.b16 %v2572
        %v2708 = vunpack.c.l.b16 %v2573
        %v2709 = vunpack.c.l.b16 %v2574
        %v2710 = vunpack.c.l.b16 %v2575
        %v2711 = vunpack.c.l.b16 %v2576
        %v2712 = vunpack.c.l.b16 %v2577
        %v2713 = vunpack.c.l.b16 %v2578
        %v2714 = vunpack.c.l.b16 %v2579
        %v2715 = vunpack.c.l.b16 %v2580
        %v2716 = vunpack.c.l.b16 %v2581
        %v2717 = vunpack.c.l.b16 %v2582
        %v2718 = vunpack.c.l.b16 %v2583
        %v2719 = vunpack.c.l.b16 %v2584
        %v2720 = vunpack.c.l.b16 %v2585
        %v2721 = vunpack.c.l.b16 %v2586
        %v2722 = vunpack.c.l.b16 %v2587
        %v2723 = vunpack.c.l.b16 %v2588
        %v2724 = vunpack.c.l.b16 %v2589
        %v2725 = vunpack.c.l.b16 %v2590
        %v2726 = vunpack.c.l.b16 %v2591
        %v2727 = vunpack.c.l.b16 %v2592
        %v2728 = vunpack.c.l.b16 %v2593
        %v2729 = vunpack.c.l.b16 %v2594
        %v2730 = vunpack.c.l.b16 %v2595
        %v2731 = vunpack.c.l.b16 %v2596
        %v2732 = vunpack.c.l.b16 %v2597
        %v2733 = vunpack.c.l.b16 %v2598
        %v2734 = vunpack.c.l.b16 %v2599
        %v2735 = vunpack.c.l.b16 %v2600
        %v2736 = vunpack.c.l.b16 %v2601
        %v2737 = vunpack.c.l.b16 %v2602
        %v2738 = vunpack.c.l.b16 %v2603
        %v2739 = vunpack.c.l.b16 %v2604
        %v2740 = vunpack.c.l.b16 %v2605
        %v2741 = vunpack.c.l.b16 %v2606
        %v2742 = vunpack.c.l.b16 %v2607
        %v2743 = vunpack.c.l.b16 %v2608
        %v2744 = vunpack.c.l.b16 %v2609
        %v2745 = vunpack.c.l.b16 %v2610
        %v2746 = vunpack.c.l.b16 %v2611
        %v2747 = vunpack.c.l.b16 %v2612
        %v2748 = vunpack.c.l.b16 %v2613
        %v2749 = vunpack.c.l.b16 %v2614
        %v2750 = vunpack.c.l.b16 %v2615
        %v2751 = vunpack.c.l.b16 %v2616
        %v2752 = vunpack.c.l.b16 %v2617
        %v2753 = vunpack.c.l.b16 %v2618
        %v2754 = vunpack.c.l.b16 %v2619
        %v2755 = vunpack.c.l.b16 %v2620
        %v2756 = vunpack.c.l.b16 %v2621
        %v2757 = vunpack.c.l.b16 %v2622
        %v2758 = vunpack.c.l.b16 %v2623
        %v2759 = vpack.c.b16 %v2696, %v2695
        %v2760 = vpack.c.b16 %v2698, %v2697
        %v2761 = vpack.c.b16 %v2700, %v2699
        %v2762 = vpack.c.b16 %v2702, %v2701
        %v2763 = vpack.c.b16 %v2704, %v2703
        %v2764 = vpack.c.b16 %v2706, %v2705
        %v2765 = vpack.c.b16 %v2708, %v2707
        %v2766 = vpack.c.b16 %v2710, %v2709
        %v2767 = vpack.c.b16 %v2712, %v2711
        %v2768 = vpack.c.b16 %v2714, %v2713
        %v2769 = vpack.c.b16 %v2716, %v2715
        %v2770 = vpack.c.b16 %v2718, %v2717
        %v2771 = vpack.c.b16 %v2720, %v2719
        %v2772 = vpack.c.b16 %v2722, %v2721
        %v2773 = vpack.c.b16 %v2724, %v2723
        %v2774 = vpack.c.b16 %v2726, %v2725
        %v2775 = vpack.c.b16 %v2728, %v2727
        %v2776 = vpack.c.b16 %v2730, %v2729
        %v2777 = vpack.c.b16 %v2732, %v2731
        %v2778 = vpack.c.b16 %v2734, %v2733
        %v2779 = vpack.c.b16 %v2736, %v2735
        %v2780 = vpack.c.b16 %v2738, %v2737
        %v2781 = vpack.c.b16 %v2740, %v2739
        %v2782 = vpack.c.b16 %v2742, %v2741
        %v2783 = vpack.c.b16 %v2744, %v2743
        %v2784 = vpack.c.b16 %v2746, %v2745
        %v2785 = vpack.c.b16 %v2748, %v2747
        %v2786 = vpack.c.b16 %v2750, %v2749
        %v2787 = vpack.c.b16 %v2752, %v2751
        %v2788 = vpack.c.b16 %v2754, %v2753
        %v2789 = vpack.c.b16 %v2756, %v2755
        %v2790 = vpack.c.b16 %v2758, %v2757
        %2823 = vmatprep.subr.bf16.mxu0 0
        %2824 = vmatpush1.bf16.msra.mxu0 %v2766
        %2825 = vmatprep.subr.bf16.mxu0 0
        %2826 = vmatpush1.bf16.msra.mxu0 %v2765
        %2827 = vmatprep.subr.bf16.mxu0 0
        %2828 = vmatpush1.bf16.msra.mxu0 %v2764
        %2829 = vmatprep.subr.bf16.mxu0 0
        %2830 = vmatpush1.bf16.msra.mxu0 %v2763
        %2831 = vmatprep.subr.bf16.mxu0 0
        %2832 = vmatpush1.bf16.msra.mxu0 %v2762
        %2833 = vmatprep.subr.bf16.mxu0 0
        %2834 = vmatpush1.bf16.msra.mxu0 %v2761
        %2835 = vmatprep.subr.bf16.mxu0 0
        %2836 = vmatpush1.bf16.msra.mxu0 %v2760
        %2837 = vmatprep.subr.bf16.mxu0 0
        %2838 = vmatpush1.bf16.msra.mxu0 %v2759
        %2839 = vmatprep.subr.bf16.mxu0 0
        %2840 = vmatpush2.bf16.msra.mxu0 %v2774
        %2841 = vmatprep.subr.bf16.mxu0 0
        %2842 = vmatpush2.bf16.msra.mxu0 %v2773
        %2843 = vmatprep.subr.bf16.mxu0 0
        %2844 = vmatpush2.bf16.msra.mxu0 %v2772
        %2845 = vmatprep.subr.bf16.mxu0 0
        %2846 = vmatpush2.bf16.msra.mxu0 %v2771
        %2847 = vmatprep.subr.bf16.mxu0 0
        %2848 = vmatpush2.bf16.msra.mxu0 %v2770
        %2849 = vmatprep.subr.bf16.mxu0 0
        %2850 = vmatpush2.bf16.msra.mxu0 %v2769
        %2851 = vmatprep.subr.bf16.mxu0 0
        %2852 = vmatpush2.bf16.msra.mxu0 %v2768
        %2853 = vmatprep.subr.bf16.mxu0 0
        %2854 = vmatpush2.bf16.msra.mxu0 %v2767
        %2855 = vmatprep.mubr.bf16.mxu0 %v2557
        %2856 = vmatmul.mubr.bf16.gmra.mxu0 %v2556
        %v2857 = vpop.f32.mrf.mxu0
        %v2858 = vadd.f32 %v2629, %v2857
        %v2859 = vpop.f32.mrf.mxu0
        %v2860 = vpop.f32.mrf.mxu0
        %v2861 = vpop.f32.mrf.mxu0
        %2862 = vdwg.mxu0
        %2863 = vmatprep.subr.bf16.mxu0 0
        %2864 = vmatpush1.bf16.msra.mxu0 %v2782
        %2865 = vmatprep.subr.bf16.mxu0 0
        %2866 = vmatpush1.bf16.msra.mxu0 %v2781
        %2867 = vmatprep.subr.bf16.mxu0 0
        %2868 = vmatpush1.bf16.msra.mxu0 %v2780
        %2869 = vmatprep.subr.bf16.mxu0 0
        %2870 = vmatpush1.bf16.msra.mxu0 %v2779
        %2871 = vmatprep.subr.bf16.mxu0 0
        %2872 = vmatpush1.bf16.msra.mxu0 %v2778
        %2873 = vmatprep.subr.bf16.mxu0 0
        %2874 = vmatpush1.bf16.msra.mxu0 %v2777
        %2875 = vmatprep.subr.bf16.mxu0 0
        %2876 = vmatpush1.bf16.msra.mxu0 %v2776
        %2877 = vmatprep.subr.bf16.mxu0 0
        %2878 = vmatpush1.bf16.msra.mxu0 %v2775
        %2879 = vmatprep.subr.bf16.mxu0 0
        %2880 = vmatpush2.bf16.msra.mxu0 %v2790
        %2881 = vmatprep.subr.bf16.mxu0 0
        %2882 = vmatpush2.bf16.msra.mxu0 %v2789
        %2883 = vmatprep.subr.bf16.mxu0 0
        %2884 = vmatpush2.bf16.msra.mxu0 %v2788
        %2885 = vmatprep.subr.bf16.mxu0 0
        %2886 = vmatpush2.bf16.msra.mxu0 %v2787
        %2887 = vmatprep.subr.bf16.mxu0 0
        %2888 = vmatpush2.bf16.msra.mxu0 %v2786
        %2889 = vmatprep.subr.bf16.mxu0 0
        %2890 = vmatpush2.bf16.msra.mxu0 %v2785
        %2891 = vmatprep.subr.bf16.mxu0 0
        %2892 = vmatpush2.bf16.msra.mxu0 %v2784
        %2893 = vmatprep.subr.bf16.mxu0 0
        %2894 = vmatpush2.bf16.msra.mxu0 %v2783
        %2895 = vmatprep.mubr.bf16.mxu0 %v2559
        %2896 = vmatmul.mubr.bf16.gmra.mxu0 %v2558
        %v2897 = vpop.f32.mrf.mxu0
        %v2898 = vadd.f32 %v2858, %v2897
        %v2899 = vpop.f32.mrf.mxu0
        %v2900 = vpop.f32.mrf.mxu0
        %v2901 = vpop.f32.mrf.mxu0
        %2902 = vdwg.mxu0
        %2903 = vmax.xlane.f32.xlu0 %v2898
        %v2904 = vpop.xlane.xlu0 %2903
        %v2905 = vsub.f32 %v2898, %v2904
        %v2906 = vmul.f32 %v2905, 1.442695
        %v2907 = vpow.pop %v2906
        %2908 = vadd.xlane.f32.xlu0 %v2907
        %v2909 = vpop.xlane.xlu0 %2908
        %v2910 = vrcp.pop %v2909
        %v2911 = vmul.f32 %v2907, %v2910
        %2912 = vst [vmem:[%s478] sm:$0xff] %v2911
        %s2913 = sand.u32 %s241, 1
        %s2914 = scalar_lea.sflag [#allocation5], %s2913
        %s2915 = sand.u32 %s241, 1
        %s2916 = smul.addr %s2915, 8
        %s2917 = scalar_lea.vmem [#allocation15], %s2916
        // Predicated region
        $region93: #{tpu_custom_call.1} parent=55 // pred_check
          %p2918 = pneg %p251
        $region94: #{tpu_custom_call.1} parent=55 // pred_check_branch
          %2920 = sbr.rel (%p2918) target = $region96
        $region95: #{tpu_custom_call.1} parent=55 // pred_region
          %s2922 = ssub.s32 128, 128
          %2923 = vsyncadd %s2914, %s2922
          %s2924 = smul.addr %s34, 128
          %s2925 = scalar_lea.hbm %s9, %s2924
          %s2927 = sshll.u32 %s2917, 4
          %s2928 = int_to_ptr.vmem [resolvable:$true] %s2927
          %2930 = dma.vmem_to_hbm [thread:$0]  %s2928, 128, %s2925, %s2914
        $region96: #{tpu_custom_call.1} parent=55 // pred_fallthru
          _
        // Predicated region
        $region97: #{tpu_custom_call.1} parent=55 // pred_check
          %p2931 = pneg %p272
        $region98: #{tpu_custom_call.1} parent=55 // pred_check_branch
          %2933 = sbr.rel (%p2931) target = $region100
        $region99: #{tpu_custom_call.1} parent=55 // pred_region
          %s2935 = ssub.s32 384, 384
          %2936 = vsyncadd [#allocation17], %s2935
          %s2937 = sshll.u32 [#allocation16], 4
          %s2938 = int_to_ptr.vmem [resolvable:$true] %s2937
          %2943 = dma.vmem_to_hbm [thread:$0]  %s2938, 384, %s10, [#allocation17], 128, 128, 8
        $region100: #{tpu_custom_call.1} parent=55 // pred_fallthru
          _
        // Predicated region
        $region101: #{tpu_custom_call.1} parent=55 // pred_check
          %p2944 = pneg %p272
        $region102: #{tpu_custom_call.1} parent=55 // pred_check_branch
          %2946 = sbr.rel (%p2944) target = $region104
        $region103: #{tpu_custom_call.1} parent=55 // pred_region
          %2947 = dma.done [#allocation17], 384
        $region104: #{tpu_custom_call.1} parent=55 // pred_fallthru
          _
      $region56: #{tpu_custom_call.1} parent=5 // pred_fallthru
        _
      %p2948 = scmp.le.s32.totalorder 2, %s29
      // Predicated region
      $region105: #{tpu_custom_call.1} parent=5 // pred_check
        %p2949 = pneg %p2948
      $region106: #{tpu_custom_call.1} parent=5 // pred_check_branch
        %2951 = sbr.rel (%p2949) target = $region108
      $region107: #{tpu_custom_call.1} parent=5 // pred_region
        %s2952 = ssub.s32 %s29, 2
        // Predicated region
        $region109: #{tpu_custom_call.1} parent=107 // pred_check
          %p2953 = pneg %p257
        $region110: #{tpu_custom_call.1} parent=107 // pred_check_branch
          %2955 = sbr.rel (%p2953) target = $region112
        $region111: #{tpu_custom_call.1} parent=107 // pred_region
          %s2956 = sand.u32 %s242, 1
          %s2957 = scalar_lea.sflag [#allocation5], %s2956
          %s2958 = sand.u32 %s242, 1
          %s2959 = smul.addr %s2958, 8
          %s2960 = scalar_lea.vmem [#allocation15], %s2959
          %2961 = dma.done %s2957, 128
        $region112: #{tpu_custom_call.1} parent=107 // pred_fallthru
          _
      $region108: #{tpu_custom_call.1} parent=5 // pred_fallthru
        _
    $region6: #{tpu_custom_call.1} parent=1 // loop_footer
      %s33 = sadd.s32 1, %s29
    $region7: #{tpu_custom_call.1} parent=1 // loop_footer_branch
      %28 = sbr.rel target = $region3
    $region8: #{tpu_custom_call.1} parent=1 // loop_exit
      _
    %2962 = vsyncpa [#allocation4], 1
    %s2963 = scalar_lea.sflag [#allocation4], 1
    %2964 = vsyncpa %s2963, 1
    %2965 = vsyncpa [#allocation7], 1
    %s2966 = scalar_lea.sflag [#allocation7], 1
    %2967 = vsyncpa %s2966, 1
    %2968 = vsyncpa [#allocation10], 1
    %2969 = vsyncpa [#allocation13], 1
    %2970 = vsyncpa [#allocation5], 1
    %s2971 = scalar_lea.sflag [#allocation5], 1
    %2972 = vsyncpa %s2971, 1
    %2973 = vsyncpa [#allocation17], 1

</llo_original>
